<compile_context>
chip_gen: v7x
topology: tpu7x:2x2x1
jax: 0.10.0
libtpu: 0.0.40
codegen_flags: <defaults>
</compile_context>

<pallas_src>
import math

import jax
import jax.numpy as jnp
from jax.experimental import pallas as pl
from jax.experimental.pallas import tpu as pltpu


def _round_up(a, m):
    return ((a + m - 1) // m) * m


# --------------------------------------------------------------------------------------
# Wrapper + kernel (kernel is a closure so all static dims are plain Python ints)
# --------------------------------------------------------------------------------------
def encoder_forward(word_tensor, seq_lens, params, *, block_b=64):
    # seq_lens is unused, matching the PyTorch forward (kept for signature parity).
    del seq_lens
    (wq, bq, wk, bk, wv, bv,
     wih_f, whh_f, b_f,
     wih_b, whh_b, b_b,
     ws, bs) = params

    B, T, E = word_tensor.shape
    HA = wq.shape[1]                       # attention hidden dim
    OA = wv.shape[1]                       # attention output dim
    H = whh_f.shape[0]                     # per-direction LSTM hidden (= encoder_hidden_dim // 2)
    D = OA + 2 * H                         # concat feature dim
    D_pad = _round_up(D, 128)              # lane-dense output slab width
    NQKV = 2 * HA + OA

    # Adaptive batch block: big enough to feed the MXU / amortize grid overhead, small
    # enough that B > 8 still produces >= 2 grid blocks (v7x has 2 TensorCores).
    BB = max(8, min(block_b, _round_up(max((B + 1) // 2, 1), 8)))
    B_pad = _round_up(B, BB)

    f32 = jnp.float32
    inv_sqrt_ha = 1.0 / math.sqrt(float(HA))

    # ---- wrapper-side weight fusion (done once, outside the kernel) -------------------
    def interleave_gates(a_f, a_b):
        # [.., 4H] x2 -> [.., 8H] with per-gate layout [i_f i_b | f_f f_b | g_f g_b | o_f o_b]
        af = a_f.reshape(a_f.shape[:-1] + (4, H))
        ab = a_b.reshape(a_b.shape[:-1] + (4, H))
        return jnp.concatenate([af, ab], axis=-1).reshape(a_f.shape[:-1] + (8 * H,))

    w_qkv = jnp.concatenate([wq, wk, wv], axis=1)                                 # [E, NQKV]
    b_qkv = jnp.concatenate([bq, bk, bv], axis=1)                                 # [1, NQKV]
    # Gate weight for the direction-paired time-major input x_pair[t] = [x_t | x_{T-1-t}]:
    # top E rows feed forward-direction gate columns, bottom E rows feed backward columns.
    w_gate = jnp.concatenate(
        [interleave_gates(wih_f, jnp.zeros_like(wih_f)),
         interleave_gates(jnp.zeros_like(wih_b), wih_b)], axis=0)                 # [2E, 8H]
    b_gate = interleave_gates(b_f, b_b)                                           # [1, 8H]
    # Fused recurrent weight: rows [h_f | h_b] -> gate-interleaved columns (block structure).
    whh = jnp.concatenate(
        [interleave_gates(whh_f, jnp.zeros_like(whh_f)),
         interleave_gates(jnp.zeros_like(whh_b), whh_b)], axis=0)                 # [2H, 8H]
    # Scorer weight as a lane-dense row; padding lanes are zero so they never contribute.
    ws_row = jnp.zeros((1, D_pad), f32).at[0, :D].set(ws[:, 0])

    x = word_tensor.astype(f32)
    if B_pad != B:
        x = jnp.concatenate([x, jnp.zeros((B_pad - B, T, E), f32)], axis=0)
    # Time-major, direction-paired view of x for the LSTM gate projection (built once here,
    # so the kernel never transposes the wide gate tensor and never selects per timestep).
    x_tm = jnp.transpose(x, (1, 0, 2))                                            # [T, B_pad, E]
    x_pair = jnp.concatenate([x_tm, x_tm[::-1]], axis=-1)                         # [T, B_pad, 2E]

    # ---- kernel -----------------------------------------------------------------------
    def kernel(x_ref, xp_ref, wqkv_ref, bqkv_ref, wg_ref, bg_ref, whh_ref, ws_ref, bs_ref,
               hid_ref, ctx_ref, xg_ref, hlstm_ref):
        # ---- QKV input projection (batch-major x).
        x2 = x_ref[...].reshape(BB * T, E)
        qkv = jnp.dot(x2, wqkv_ref[...], preferred_element_type=f32) + bqkv_ref[...]
        q = qkv[:, 0:HA].reshape(BB, T, HA)
        k = qkv[:, HA:2 * HA].reshape(BB, T, HA)
        v = qkv[:, 2 * HA:NQKV].reshape(BB, T, OA)

        # ---- LSTM gate projection: already time-major AND direction-aligned.
        # slot t gets fwd gates of x_t and bwd gates of x_{T-1-t}.
        xp2 = xp_ref[...].reshape(T * BB, 2 * E)
        xg = jnp.dot(xp2, wg_ref[...], preferred_element_type=f32) + bg_ref[...]
        xg_ref[...] = xg.reshape(T, BB, 8 * H)

        # ---- QKV self-attention.  NOTE: the 1/sqrt(HA) scale is applied AFTER the softmax,
        # exactly reproducing the PyTorch QKVAttention code (intentional, do not "fix").
        s = jnp.einsum('bqh,bkh->bqk', q, k, preferred_element_type=f32)
        s = s - jnp.max(s, axis=-1, keepdims=True)
        e = jnp.exp(s)
        p = e * (inv_sqrt_ha / jnp.sum(e, axis=-1, keepdims=True))     # exact f32 divide
        attn = jnp.einsum('bqk,bkd->bqd', p, v, preferred_element_type=f32)   # (BB, T, OA)

        # ---- bidirectional LSTM: both directions in one unrolled loop, one fused gate matmul,
        # one dynamic load, one full-width hidden store per timestep.
        whh_v = whh_ref[...]                                           # hoisted out of the loop

        def step(t, carry):
            h, c = carry                                               # (BB, 2H), lanes = [fwd|bwd]
            g = xg_ref[t] + jnp.dot(h, whh_v, preferred_element_type=f32)   # (BB, 8H)
            sg = jax.nn.sigmoid(g)                                     # full-width EUP
            tg = jnp.tanh(g)                                           # full-width EUP
            i_g = sg[:, 0:2 * H]
            f_g = sg[:, 2 * H:4 * H]
            g_g = tg[:, 4 * H:6 * H]
            o_g = sg[:, 6 * H:8 * H]
            c_new = f_g * c + i_g * g_g
            h_new = o_g * jnp.tanh(c_new)                              # (BB, 2H) = [h_f | h_b]
            hlstm_ref[pl.ds(t, 1), :, :] = h_new[None]                 # computation order
            return (h_new, c_new)

        zeros_2h = jnp.zeros((BB, 2 * H), f32)
        jax.lax.fori_loop(0, T, step, (zeros_2h, zeros_2h), unroll=True)

        # Re-order the backward half once (step t produced the bwd hidden for time T-1-t).
        h_nat = hlstm_ref[...]                                         # (T, BB, 2H)
        h_rev = jnp.concatenate([hlstm_ref[T - 1 - t][None] for t in range(T)], axis=0)
        lane = jax.lax.broadcasted_iota(jnp.int32, (1, 1, 2 * H), 2)
        h_time = jnp.where(lane < H, h_nat, h_rev)                     # fwd as-is, bwd reversed
        lstm_bt = pltpu.einshape("tbh->bth", h_time)                   # (BB, T, 2H)

        # ---- torch.cat([attention_hiddens, lstm_hiddens], dim=2): built as a value, stored
        # once full-width (unmasked 128-lane store) and reused live for the scorer.
        parts = [attn, lstm_bt]
        if D_pad > D:
            parts.append(jnp.zeros((BB, T, D_pad - D), f32))
        hid = jnp.concatenate(parts, axis=-1)                          # (BB, T, D_pad)
        hid_ref[...] = hid

        # ---- UnflatSelfAttention: scorer -> softmax over T -> weighted sum.
        sc = jnp.sum(hid * ws_ref[...][None], axis=-1, keepdims=True) + bs_ref[...]
        sc = sc - jnp.max(sc, axis=1, keepdims=True)
        es = jnp.exp(sc)
        ps = es / jnp.sum(es, axis=1, keepdims=True)                   # exact f32 divide
        ctx_ref[...] = jnp.sum(ps * hid, axis=1, keepdims=True)        # (BB, 1, D_pad)

    # ---- pallas_call ------------------------------------------------------------------
    def _full(nd):
        return lambda b: (0,) * nd

    hid_full, ctx_full = pl.pallas_call(
        kernel,
        out_shape=(jax.ShapeDtypeStruct((B_pad, T, D_pad), f32),
                   jax.ShapeDtypeStruct((B_pad, 1, D_pad), f32)),
        grid_spec=pltpu.PrefetchScalarGridSpec(
            num_scalar_prefetch=0,
            grid=(B_pad // BB,),
            in_specs=[
                pl.BlockSpec((BB, T, E), lambda b: (b, 0, 0)),         # x (batch-major)
                pl.BlockSpec((T, BB, 2 * E), lambda b: (0, b, 0)),     # x_pair (time-major)
                pl.BlockSpec(w_qkv.shape, _full(2)),
                pl.BlockSpec(b_qkv.shape, _full(2)),
                pl.BlockSpec(w_gate.shape, _full(2)),
                pl.BlockSpec(b_gate.shape, _full(2)),
                pl.BlockSpec(whh.shape, _full(2)),
                pl.BlockSpec(ws_row.shape, _full(2)),
                pl.BlockSpec(bs.shape, _full(2)),
            ],
            out_specs=[
                pl.BlockSpec((BB, T, D_pad), lambda b: (b, 0, 0)),
                pl.BlockSpec((BB, 1, D_pad), lambda b: (b, 0, 0)),
            ],
            scratch_shapes=[
                pltpu.VMEM((T, BB, 8 * H), f32),   # time-major, direction-aligned gate inputs
                pltpu.VMEM((T, BB, 2 * H), f32),   # LSTM hiddens in computation order [h_f | h_b]
            ]),
        compiler_params=pltpu.CompilerParams(
            dimension_semantics=("parallel",)),    # batch axis is embarrassingly parallel
    )(x, x_pair, w_qkv, b_qkv, w_gate, b_gate, whh, ws_row, bs)

    hiddens = hid_full[:B, :, :D]
    ctx = ctx_full[:B, 0, :D]
    return hiddens, ctx


# --------------------------------------------------------------------------------------
# Pure-JAX reference (same math) for correctness checking
# --------------------------------------------------------------------------------------
def encoder_reference(x, params):
    (wq, bq, wk, bk, wv, bv,
     wih_f, whh_f, b_f,
     wih_b, whh_b, b_b,
     ws, bs) = params
    B, T, E = x.shape
    HA = wq.shape[1]
    H = whh_f.shape[0]

    q = x @ wq + bq
    k = x @ wk + bk
    v = x @ wv + bv
    s = jnp.einsum('btd,bsd->bts', q, k)
    p = jax.nn.softmax(s, axis=-1) / math.sqrt(float(HA))
    attn = jnp.einsum('bts,bsd->btd', p, v)

    def run_dir(wih, whh, b, reverse):
        xg = x @ wih + b
        if reverse:
            xg = xg[:, ::-1, :]

        def step(carry, g_t):
            h, c = carry
            g = g_t + h @ whh
            i = jax.nn.sigmoid(g[:, 0:H]); f = jax.nn.sigmoid(g[:, H:2 * H])
            gg = jnp.tanh(g[:, 2 * H:3 * H]); o = jax.nn.sigmoid(g[:, 3 * H:4 * H])
            c = f * c + i * gg
            h = o * jnp.tanh(c)
            return (h, c), h

        h0 = jnp.zeros((B, H), jnp.float32)
        c0 = jnp.zeros((B, H), jnp.float32)
        _, hs = jax.lax.scan(step, (h0, c0), jnp.transpose(xg, (1, 0, 2)))
        hs = jnp.transpose(hs, (1, 0, 2))
        if reverse:
            hs = hs[:, ::-1, :]
        return hs

    hf = run_dir(wih_f, whh_f, b_f, False)
    hb = run_dir(wih_b, whh_b, b_b, True)
    hiddens = jnp.concatenate([attn, jnp.concatenate([hf, hb], axis=-1)], axis=-1)
    scores = (hiddens @ ws + bs)[..., 0]
    p2 = jax.nn.softmax(scores, axis=1)
    c = jnp.sum(p2[..., None] * hiddens, axis=1)
    return hiddens, c


# --------------------------------------------------------------------------------------
if __name__ == "__main__":
    B, T = 2, 8
    E = 32                 # word_embedding_dim
    ENC_H = 32             # encoder_hidden_dim  -> per-direction H = 16
    H = ENC_H // 2
    HA = 32                # attention_hidden_dim
    OA = 32                # attention_output_dim
    D = OA + ENC_H         # 64

    key = jax.random.PRNGKey(0)
    keys = jax.random.split(key, 17)
    scale = 0.2

    def init(k, shape):
        return scale * jax.random.normal(k, shape, dtype=jnp.float32)

    # Attention (Linear stored as [in, out])
    wq = init(keys[0], (E, HA)); bq = init(keys[1], (1, HA))
    wk = init(keys[2], (E, HA)); bk = init(keys[3], (1, HA))
    wv = init(keys[4], (E, OA)); bv = init(keys[5], (1, OA))
    # Bidirectional LSTM (PyTorch has b_ih + b_hh; they always add, so keep the sum)
    wih_f = init(keys[6], (E, 4 * H)); whh_f = init(keys[7], (H, 4 * H))
    b_f = init(keys[8], (1, 4 * H)) + init(keys[9], (1, 4 * H))
    wih_b = init(keys[10], (E, 4 * H)); whh_b = init(keys[11], (H, 4 * H))
    b_b = init(keys[12], (1, 4 * H)) + init(keys[13], (1, 4 * H))
    # UnflatSelfAttention scorer: Linear(D, 1)
    ws = init(keys[14], (D, 1)); bs = init(keys[15], (1, 1))

    params = (wq, bq, wk, bk, wv, bv, wih_f, whh_f, b_f, wih_b, whh_b, b_b, ws, bs)

    word_tensor = jax.random.normal(keys[16], (B, T, E), dtype=jnp.float32)
    seq_lens = jnp.full((B,), T, dtype=jnp.int32)

    hiddens, c = encoder_forward(word_tensor, seq_lens, params)
    jax.block_until_ready((hiddens, c))

    hiddens_ref, c_ref = encoder_reference(word_tensor, params)
    assert hiddens.shape == (B, T, D) and c.shape == (B, D)
    assert jnp.allclose(hiddens, hiddens_ref, atol=1e-3, rtol=1e-3), "hiddens mismatch"
    assert jnp.allclose(c, c_ref, atol=1e-3, rtol=1e-3), "context mismatch"

    print("KERNEL_OK")
</pallas_src>

<mosaic_0001>
module attributes {stable_mosaic.version = 11 : i64} {
  func.func @kernel(%arg0: i32, %arg1: memref<8x8x32xf32, #tpu.memory_space<vmem>>, %arg2: memref<8x8x64xf32, #tpu.memory_space<vmem>>, %arg3: memref<32x96xf32, #tpu.memory_space<vmem>>, %arg4: memref<1x96xf32, #tpu.memory_space<vmem>>, %arg5: memref<64x128xf32, #tpu.memory_space<vmem>>, %arg6: memref<1x128xf32, #tpu.memory_space<vmem>>, %arg7: memref<32x128xf32, #tpu.memory_space<vmem>>, %arg8: memref<1x128xf32, #tpu.memory_space<vmem>>, %arg9: memref<1x1xf32, #tpu.memory_space<vmem>>, %arg10: memref<8x8x128xf32, #tpu.memory_space<vmem>>, %arg11: memref<8x1x128xf32, #tpu.memory_space<vmem>>, %arg12: memref<8x8x128xf32, #tpu.memory_space<vmem>>, %arg13: memref<8x8x32xf32, #tpu.memory_space<vmem>>) attributes {dimension_semantics = [#tpu.dimension_semantics<parallel>], iteration_bounds = array<i64: 1>, scalar_prefetch = 0 : i64, scratch_operands = 2 : i64, tpu.core_type = #tpu.core_type<tc>, window_params = [{transform_indices = @transform_0, window_bounds = array<i64: 8, 8, 32>}, {transform_indices = @transform_1, window_bounds = array<i64: 8, 8, 64>}, {pipeline_mode = #tpu.pipeline_mode<synchronous>, transform_indices = @transform_2, window_bounds = array<i64: 32, 96>}, {pipeline_mode = #tpu.pipeline_mode<synchronous>, transform_indices = @transform_3, window_bounds = array<i64: 1, 96>}, {pipeline_mode = #tpu.pipeline_mode<synchronous>, transform_indices = @transform_4, window_bounds = array<i64: 64, 128>}, {pipeline_mode = #tpu.pipeline_mode<synchronous>, transform_indices = @transform_5, window_bounds = array<i64: 1, 128>}, {pipeline_mode = #tpu.pipeline_mode<synchronous>, transform_indices = @transform_6, window_bounds = array<i64: 32, 128>}, {pipeline_mode = #tpu.pipeline_mode<synchronous>, transform_indices = @transform_7, window_bounds = array<i64: 1, 128>}, {pipeline_mode = #tpu.pipeline_mode<synchronous>, transform_indices = @transform_8, window_bounds = array<i64: 1, 1>}, {transform_indices = @transform_9, window_bounds = array<i64: 8, 8, 128>}, {transform_indices = @transform_10, window_bounds = array<i64: 8, 1, 128>}]} {
    %c0 = arith.constant 0 : index
    %c0_0 = arith.constant 0 : index
    %c0_1 = arith.constant 0 : index
    %0 = vector.load %arg1[%c0, %c0_0, %c0_1] : memref<8x8x32xf32, #tpu.memory_space<vmem>>, vector<8x8x32xf32>
    %1 = vector.shape_cast %0 : vector<8x8x32xf32> to vector<64x32xf32>
    %c0_2 = arith.constant 0 : index
    %c0_3 = arith.constant 0 : index
    %2 = vector.load %arg3[%c0_2, %c0_3] : memref<32x96xf32, #tpu.memory_space<vmem>>, vector<32x96xf32>
    %cst = arith.constant dense<0.000000e+00> : vector<64x96xf32>
    %3 = tpu.matmul %1, %2, %cst {dimension_numbers = #tpu.dot_dimension_numbers<[1], [0], [0], [1], [0, 0, 1, 1], [], []>} : vector<64x32xf32>, vector<32x96xf32>, vector<64x96xf32> -> vector<64x96xf32>
    %c0_4 = arith.constant 0 : index
    %c0_5 = arith.constant 0 : index
    %4 = vector.load %arg4[%c0_4, %c0_5] : memref<1x96xf32, #tpu.memory_space<vmem>>, vector<1x96xf32>
    %5 = vector.broadcast %4 : vector<1x96xf32> to vector<64x96xf32>
    %6 = arith.addf %3, %5 : vector<64x96xf32>
    %7 = vector.extract_strided_slice %6 {offsets = [0, 0], sizes = [64, 32], strides = [1, 1]} : vector<64x96xf32> to vector<64x32xf32>
    %8 = vector.shape_cast %7 : vector<64x32xf32> to vector<8x8x32xf32>
    %9 = vector.extract_strided_slice %6 {offsets = [0, 32], sizes = [64, 32], strides = [1, 1]} : vector<64x96xf32> to vector<64x32xf32>
    %10 = vector.shape_cast %9 : vector<64x32xf32> to vector<8x8x32xf32>
    %11 = vector.extract_strided_slice %6 {offsets = [0, 64], sizes = [64, 32], strides = [1, 1]} : vector<64x96xf32> to vector<64x32xf32>
    %12 = vector.shape_cast %11 : vector<64x32xf32> to vector<8x8x32xf32>
    %c0_6 = arith.constant 0 : index
    %c0_7 = arith.constant 0 : index
    %c0_8 = arith.constant 0 : index
    %13 = vector.load %arg2[%c0_6, %c0_7, %c0_8] : memref<8x8x64xf32, #tpu.memory_space<vmem>>, vector<8x8x64xf32>
    %14 = vector.shape_cast %13 : vector<8x8x64xf32> to vector<64x64xf32>
    %c0_9 = arith.constant 0 : index
    %c0_10 = arith.constant 0 : index
    %15 = vector.load %arg5[%c0_9, %c0_10] : memref<64x128xf32, #tpu.memory_space<vmem>>, vector<64x128xf32>
    %cst_11 = arith.constant dense<0.000000e+00> : vector<64x128xf32>
    %16 = tpu.matmul %14, %15, %cst_11 {dimension_numbers = #tpu.dot_dimension_numbers<[1], [0], [0], [1], [0, 0, 1, 1], [], []>} : vector<64x64xf32>, vector<64x128xf32>, vector<64x128xf32> -> vector<64x128xf32>
    %c0_12 = arith.constant 0 : index
    %c0_13 = arith.constant 0 : index
    %17 = vector.load %arg6[%c0_12, %c0_13] : memref<1x128xf32, #tpu.memory_space<vmem>>, vector<1x128xf32>
    %18 = vector.broadcast %17 : vector<1x128xf32> to vector<64x128xf32>
    %19 = arith.addf %16, %18 : vector<64x128xf32>
    %20 = vector.shape_cast %19 : vector<64x128xf32> to vector<8x8x128xf32>
    %c0_14 = arith.constant 0 : index
    %c0_15 = arith.constant 0 : index
    %c0_16 = arith.constant 0 : index
    %21 = vector.load %arg12[%c0_14, %c0_15, %c0_16] : memref<8x8x128xf32, #tpu.memory_space<vmem>>, vector<8x8x128xf32>
    tpu.vector_store %arg12[%c0_14, %c0_15, %c0_16], %20 {strides = array<i32>} : memref<8x8x128xf32, #tpu.memory_space<vmem>>, vector<8x8x128xf32>,
    "tpu.trace_start"() <{level = 10 : i32, message = "bqh,bkh->bqk"}> : () -> ()
    %cst_17 = arith.constant dense<0.000000e+00> : vector<8x8x8xf32>
    %22 = tpu.matmul %8, %10, %cst_17 {dimension_numbers = #tpu.dot_dimension_numbers<[2], [2], [1], [1], [0, 0, 0, 1, 1, 1], [0], [0]>} : vector<8x8x32xf32>, vector<8x8x32xf32>, vector<8x8x8xf32> -> vector<8x8x8xf32>
    "tpu.trace_stop"() : () -> ()
    %cst_18 = arith.constant dense<0xFF800000> : vector<8x8xf32>
    %23 = vector.multi_reduction <maximumf>, %22, %cst_18 [2] : vector<8x8x8xf32> to vector<8x8xf32>
    %24 = vector.shape_cast %23 : vector<8x8xf32> to vector<8x8x1xf32>
    %25 = vector.broadcast %24 : vector<8x8x1xf32> to vector<8x8x8xf32>
    %26 = arith.subf %22, %25 : vector<8x8x8xf32>
    %27 = math.exp %26 : vector<8x8x8xf32>
    %cst_19 = arith.constant dense<0.000000e+00> : vector<8x8xf32>
    %28 = vector.multi_reduction <add>, %27, %cst_19 [2] : vector<8x8x8xf32> to vector<8x8xf32>
    %29 = vector.shape_cast %28 : vector<8x8xf32> to vector<8x8x1xf32>
    %cst_20 = arith.constant 0.176776692 : f32
    %30 = vector.broadcast %cst_20 : f32 to vector<8x8x1xf32>
    %31 = arith.divf %30, %29 : vector<8x8x1xf32>
    %32 = vector.broadcast %31 : vector<8x8x1xf32> to vector<8x8x8xf32>
    %33 = arith.mulf %27, %32 : vector<8x8x8xf32>
    "tpu.trace_start"() <{level = 10 : i32, message = "bqk,bkd->bqd"}> : () -> ()
    %cst_21 = arith.constant dense<0.000000e+00> : vector<8x8x32xf32>
    %34 = tpu.matmul %33, %12, %cst_21 {dimension_numbers = #tpu.dot_dimension_numbers<[2], [1], [1], [2], [0, 0, 0, 1, 1, 2], [0], [0]>} : vector<8x8x8xf32>, vector<8x8x32xf32>, vector<8x8x32xf32> -> vector<8x8x32xf32>
    "tpu.trace_stop"() : () -> ()
    %c0_22 = arith.constant 0 : index
    %c0_23 = arith.constant 0 : index
    %35 = vector.load %arg7[%c0_22, %c0_23] : memref<32x128xf32, #tpu.memory_space<vmem>>, vector<32x128xf32>
    %cst_24 = arith.constant 0.000000e+00 : f32
    %36 = vector.broadcast %cst_24 : f32 to vector<8x32xf32>
    %c0_i32 = arith.constant 0 : i32
    %37 = arith.index_cast %c0_i32 : i32 to index
    %c0_25 = arith.constant 0 : index
    %c0_26 = arith.constant 0 : index
    %38 = vector.load %arg12[%37, %c0_25, %c0_26] : memref<8x8x128xf32, #tpu.memory_space<vmem>>, vector<1x8x128xf32>
    %39 = vector.shape_cast %38 : vector<1x8x128xf32> to vector<8x128xf32>
    %cst_27 = arith.constant dense<0.000000e+00> : vector<8x128xf32>
    %40 = tpu.matmul %36, %35, %cst_27 {dimension_numbers = #tpu.dot_dimension_numbers<[1], [0], [0], [1], [0, 0, 1, 1], [], []>} : vector<8x32xf32>, vector<32x128xf32>, vector<8x128xf32> -> vector<8x128xf32>
    %41 = arith.addf %39, %40 : vector<8x128xf32>
    %42 = arith.negf %41 : vector<8x128xf32>
    %43 = math.exp %42 : vector<8x128xf32>
    %cst_28 = arith.constant 1.000000e+00 : f32
    %44 = vector.broadcast %cst_28 : f32 to vector<8x128xf32>
    %45 = arith.addf %44, %43 : vector<8x128xf32>
    %46 = arith.divf %44, %45 : vector<8x128xf32>
    %47 = math.tanh %41 : vector<8x128xf32>
    %48 = vector.extract_strided_slice %46 {offsets = [0, 0], sizes = [8, 32], strides = [1, 1]} : vector<8x128xf32> to vector<8x32xf32>
    %49 = vector.extract_strided_slice %46 {offsets = [0, 32], sizes = [8, 32], strides = [1, 1]} : vector<8x128xf32> to vector<8x32xf32>
    %50 = vector.extract_strided_slice %47 {offsets = [0, 64], sizes = [8, 32], strides = [1, 1]} : vector<8x128xf32> to vector<8x32xf32>
    %51 = vector.extract_strided_slice %46 {offsets = [0, 96], sizes = [8, 32], strides = [1, 1]} : vector<8x128xf32> to vector<8x32xf32>
    %52 = arith.mulf %49, %36 : vector<8x32xf32>
    %53 = arith.mulf %48, %50 : vector<8x32xf32>
    %54 = arith.addf %52, %53 : vector<8x32xf32>
    %55 = math.tanh %54 : vector<8x32xf32>
    %56 = arith.mulf %51, %55 : vector<8x32xf32>
    %57 = vector.shape_cast %56 : vector<8x32xf32> to vector<1x8x32xf32>
    %58 = arith.index_cast %c0_i32 : i32 to index
    %c0_29 = arith.constant 0 : index
    %c0_30 = arith.constant 0 : index
    %59 = vector.load %arg13[%58, %c0_29, %c0_30] : memref<8x8x32xf32, #tpu.memory_space<vmem>>, vector<1x8x32xf32>
    tpu.vector_store %arg13[%58, %c0_29, %c0_30], %57 {strides = array<i32>} : memref<8x8x32xf32, #tpu.memory_space<vmem>>, vector<1x8x32xf32>,
    %c1_i32 = arith.constant 1 : i32
    %60 = arith.index_cast %c1_i32 : i32 to index
    %c0_31 = arith.constant 0 : index
    %c0_32 = arith.constant 0 : index
    %61 = vector.load %arg12[%60, %c0_31, %c0_32] : memref<8x8x128xf32, #tpu.memory_space<vmem>>, vector<1x8x128xf32>
    %62 = vector.shape_cast %61 : vector<1x8x128xf32> to vector<8x128xf32>
    %cst_33 = arith.constant dense<0.000000e+00> : vector<8x128xf32>
    %63 = tpu.matmul %56, %35, %cst_33 {dimension_numbers = #tpu.dot_dimension_numbers<[1], [0], [0], [1], [0, 0, 1, 1], [], []>} : vector<8x32xf32>, vector<32x128xf32>, vector<8x128xf32> -> vector<8x128xf32>
    %64 = arith.addf %62, %63 : vector<8x128xf32>
    %65 = arith.negf %64 : vector<8x128xf32>
    %66 = math.exp %65 : vector<8x128xf32>
    %cst_34 = arith.constant 1.000000e+00 : f32
    %67 = vector.broadcast %cst_34 : f32 to vector<8x128xf32>
    %68 = arith.addf %67, %66 : vector<8x128xf32>
    %69 = arith.divf %67, %68 : vector<8x128xf32>
    %70 = math.tanh %64 : vector<8x128xf32>
    %71 = vector.extract_strided_slice %69 {offsets = [0, 0], sizes = [8, 32], strides = [1, 1]} : vector<8x128xf32> to vector<8x32xf32>
    %72 = vector.extract_strided_slice %69 {offsets = [0, 32], sizes = [8, 32], strides = [1, 1]} : vector<8x128xf32> to vector<8x32xf32>
    %73 = vector.extract_strided_slice %70 {offsets = [0, 64], sizes = [8, 32], strides = [1, 1]} : vector<8x128xf32> to vector<8x32xf32>
    %74 = vector.extract_strided_slice %69 {offsets = [0, 96], sizes = [8, 32], strides = [1, 1]} : vector<8x128xf32> to vector<8x32xf32>
    %75 = arith.mulf %72, %54 : vector<8x32xf32>
    %76 = arith.mulf %71, %73 : vector<8x32xf32>
    %77 = arith.addf %75, %76 : vector<8x32xf32>
    %78 = math.tanh %77 : vector<8x32xf32>
    %79 = arith.mulf %74, %78 : vector<8x32xf32>
    %80 = vector.shape_cast %79 : vector<8x32xf32> to vector<1x8x32xf32>
    %81 = arith.index_cast %c1_i32 : i32 to index
    %c0_35 = arith.constant 0 : index
    %c0_36 = arith.constant 0 : index
    %82 = vector.load %arg13[%81, %c0_35, %c0_36] : memref<8x8x32xf32, #tpu.memory_space<vmem>>, vector<1x8x32xf32>
    tpu.vector_store %arg13[%81, %c0_35, %c0_36], %80 {strides = array<i32>} : memref<8x8x32xf32, #tpu.memory_space<vmem>>, vector<1x8x32xf32>,
    %c2_i32 = arith.constant 2 : i32
    %83 = arith.index_cast %c2_i32 : i32 to index
    %c0_37 = arith.constant 0 : index
    %c0_38 = arith.constant 0 : index
    %84 = vector.load %arg12[%83, %c0_37, %c0_38] : memref<8x8x128xf32, #tpu.memory_space<vmem>>, vector<1x8x128xf32>
    %85 = vector.shape_cast %84 : vector<1x8x128xf32> to vector<8x128xf32>
    %cst_39 = arith.constant dense<0.000000e+00> : vector<8x128xf32>
    %86 = tpu.matmul %79, %35, %cst_39 {dimension_numbers = #tpu.dot_dimension_numbers<[1], [0], [0], [1], [0, 0, 1, 1], [], []>} : vector<8x32xf32>, vector<32x128xf32>, vector<8x128xf32> -> vector<8x128xf32>
    %87 = arith.addf %85, %86 : vector<8x128xf32>
    %88 = arith.negf %87 : vector<8x128xf32>
    %89 = math.exp %88 : vector<8x128xf32>
    %cst_40 = arith.constant 1.000000e+00 : f32
    %90 = vector.broadcast %cst_40 : f32 to vector<8x128xf32>
    %91 = arith.addf %90, %89 : vector<8x128xf32>
    %92 = arith.divf %90, %91 : vector<8x128xf32>
    %93 = math.tanh %87 : vector<8x128xf32>
    %94 = vector.extract_strided_slice %92 {offsets = [0, 0], sizes = [8, 32], strides = [1, 1]} : vector<8x128xf32> to vector<8x32xf32>
    %95 = vector.extract_strided_slice %92 {offsets = [0, 32], sizes = [8, 32], strides = [1, 1]} : vector<8x128xf32> to vector<8x32xf32>
    %96 = vector.extract_strided_slice %93 {offsets = [0, 64], sizes = [8, 32], strides = [1, 1]} : vector<8x128xf32> to vector<8x32xf32>
    %97 = vector.extract_strided_slice %92 {offsets = [0, 96], sizes = [8, 32], strides = [1, 1]} : vector<8x128xf32> to vector<8x32xf32>
    %98 = arith.mulf %95, %77 : vector<8x32xf32>
    %99 = arith.mulf %94, %96 : vector<8x32xf32>
    %100 = arith.addf %98, %99 : vector<8x32xf32>
    %101 = math.tanh %100 : vector<8x32xf32>
    %102 = arith.mulf %97, %101 : vector<8x32xf32>
    %103 = vector.shape_cast %102 : vector<8x32xf32> to vector<1x8x32xf32>
    %104 = arith.index_cast %c2_i32 : i32 to index
    %c0_41 = arith.constant 0 : index
    %c0_42 = arith.constant 0 : index
    %105 = vector.load %arg13[%104, %c0_41, %c0_42] : memref<8x8x32xf32, #tpu.memory_space<vmem>>, vector<1x8x32xf32>
    tpu.vector_store %arg13[%104, %c0_41, %c0_42], %103 {strides = array<i32>} : memref<8x8x32xf32, #tpu.memory_space<vmem>>, vector<1x8x32xf32>,
    %c3_i32 = arith.constant 3 : i32
    %106 = arith.index_cast %c3_i32 : i32 to index
    %c0_43 = arith.constant 0 : index
    %c0_44 = arith.constant 0 : index
    %107 = vector.load %arg12[%106, %c0_43, %c0_44] : memref<8x8x128xf32, #tpu.memory_space<vmem>>, vector<1x8x128xf32>
    %108 = vector.shape_cast %107 : vector<1x8x128xf32> to vector<8x128xf32>
    %cst_45 = arith.constant dense<0.000000e+00> : vector<8x128xf32>
    %109 = tpu.matmul %102, %35, %cst_45 {dimension_numbers = #tpu.dot_dimension_numbers<[1], [0], [0], [1], [0, 0, 1, 1], [], []>} : vector<8x32xf32>, vector<32x128xf32>, vector<8x128xf32> -> vector<8x128xf32>
    %110 = arith.addf %108, %109 : vector<8x128xf32>
    %111 = arith.negf %110 : vector<8x128xf32>
    %112 = math.exp %111 : vector<8x128xf32>
    %cst_46 = arith.constant 1.000000e+00 : f32
    %113 = vector.broadcast %cst_46 : f32 to vector<8x128xf32>
    %114 = arith.addf %113, %112 : vector<8x128xf32>
    %115 = arith.divf %113, %114 : vector<8x128xf32>
    %116 = math.tanh %110 : vector<8x128xf32>
    %117 = vector.extract_strided_slice %115 {offsets = [0, 0], sizes = [8, 32], strides = [1, 1]} : vector<8x128xf32> to vector<8x32xf32>
    %118 = vector.extract_strided_slice %115 {offsets = [0, 32], sizes = [8, 32], strides = [1, 1]} : vector<8x128xf32> to vector<8x32xf32>
    %119 = vector.extract_strided_slice %116 {offsets = [0, 64], sizes = [8, 32], strides = [1, 1]} : vector<8x128xf32> to vector<8x32xf32>
    %120 = vector.extract_strided_slice %115 {offsets = [0, 96], sizes = [8, 32], strides = [1, 1]} : vector<8x128xf32> to vector<8x32xf32>
    %121 = arith.mulf %118, %100 : vector<8x32xf32>
    %122 = arith.mulf %117, %119 : vector<8x32xf32>
    %123 = arith.addf %121, %122 : vector<8x32xf32>
    %124 = math.tanh %123 : vector<8x32xf32>
    %125 = arith.mulf %120, %124 : vector<8x32xf32>
    %126 = vector.shape_cast %125 : vector<8x32xf32> to vector<1x8x32xf32>
    %127 = arith.index_cast %c3_i32 : i32 to index
    %c0_47 = arith.constant 0 : index
    %c0_48 = arith.constant 0 : index
    %128 = vector.load %arg13[%127, %c0_47, %c0_48] : memref<8x8x32xf32, #tpu.memory_space<vmem>>, vector<1x8x32xf32>
    tpu.vector_store %arg13[%127, %c0_47, %c0_48], %126 {strides = array<i32>} : memref<8x8x32xf32, #tpu.memory_space<vmem>>, vector<1x8x32xf32>,
    %c4_i32 = arith.constant 4 : i32
    %129 = arith.index_cast %c4_i32 : i32 to index
    %c0_49 = arith.constant 0 : index
    %c0_50 = arith.constant 0 : index
    %130 = vector.load %arg12[%129, %c0_49, %c0_50] : memref<8x8x128xf32, #tpu.memory_space<vmem>>, vector<1x8x128xf32>
    %131 = vector.shape_cast %130 : vector<1x8x128xf32> to vector<8x128xf32>
    %cst_51 = arith.constant dense<0.000000e+00> : vector<8x128xf32>
    %132 = tpu.matmul %125, %35, %cst_51 {dimension_numbers = #tpu.dot_dimension_numbers<[1], [0], [0], [1], [0, 0, 1, 1], [], []>} : vector<8x32xf32>, vector<32x128xf32>, vector<8x128xf32> -> vector<8x128xf32>
    %133 = arith.addf %131, %132 : vector<8x128xf32>
    %134 = arith.negf %133 : vector<8x128xf32>
    %135 = math.exp %134 : vector<8x128xf32>
    %cst_52 = arith.constant 1.000000e+00 : f32
    %136 = vector.broadcast %cst_52 : f32 to vector<8x128xf32>
    %137 = arith.addf %136, %135 : vector<8x128xf32>
    %138 = arith.divf %136, %137 : vector<8x128xf32>
    %139 = math.tanh %133 : vector<8x128xf32>
    %140 = vector.extract_strided_slice %138 {offsets = [0, 0], sizes = [8, 32], strides = [1, 1]} : vector<8x128xf32> to vector<8x32xf32>
    %141 = vector.extract_strided_slice %138 {offsets = [0, 32], sizes = [8, 32], strides = [1, 1]} : vector<8x128xf32> to vector<8x32xf32>
    %142 = vector.extract_strided_slice %139 {offsets = [0, 64], sizes = [8, 32], strides = [1, 1]} : vector<8x128xf32> to vector<8x32xf32>
    %143 = vector.extract_strided_slice %138 {offsets = [0, 96], sizes = [8, 32], strides = [1, 1]} : vector<8x128xf32> to vector<8x32xf32>
    %144 = arith.mulf %141, %123 : vector<8x32xf32>
    %145 = arith.mulf %140, %142 : vector<8x32xf32>
    %146 = arith.addf %144, %145 : vector<8x32xf32>
    %147 = math.tanh %146 : vector<8x32xf32>
    %148 = arith.mulf %143, %147 : vector<8x32xf32>
    %149 = vector.shape_cast %148 : vector<8x32xf32> to vector<1x8x32xf32>
    %150 = arith.index_cast %c4_i32 : i32 to index
    %c0_53 = arith.constant 0 : index
    %c0_54 = arith.constant 0 : index
    %151 = vector.load %arg13[%150, %c0_53, %c0_54] : memref<8x8x32xf32, #tpu.memory_space<vmem>>, vector<1x8x32xf32>
    tpu.vector_store %arg13[%150, %c0_53, %c0_54], %149 {strides = array<i32>} : memref<8x8x32xf32, #tpu.memory_space<vmem>>, vector<1x8x32xf32>,
    %c5_i32 = arith.constant 5 : i32
    %152 = arith.index_cast %c5_i32 : i32 to index
    %c0_55 = arith.constant 0 : index
    %c0_56 = arith.constant 0 : index
    %153 = vector.load %arg12[%152, %c0_55, %c0_56] : memref<8x8x128xf32, #tpu.memory_space<vmem>>, vector<1x8x128xf32>
    %154 = vector.shape_cast %153 : vector<1x8x128xf32> to vector<8x128xf32>
    %cst_57 = arith.constant dense<0.000000e+00> : vector<8x128xf32>
    %155 = tpu.matmul %148, %35, %cst_57 {dimension_numbers = #tpu.dot_dimension_numbers<[1], [0], [0], [1], [0, 0, 1, 1], [], []>} : vector<8x32xf32>, vector<32x128xf32>, vector<8x128xf32> -> vector<8x128xf32>
    %156 = arith.addf %154, %155 : vector<8x128xf32>
    %157 = arith.negf %156 : vector<8x128xf32>
    %158 = math.exp %157 : vector<8x128xf32>
    %cst_58 = arith.constant 1.000000e+00 : f32
    %159 = vector.broadcast %cst_58 : f32 to vector<8x128xf32>
    %160 = arith.addf %159, %158 : vector<8x128xf32>
    %161 = arith.divf %159, %160 : vector<8x128xf32>
    %162 = math.tanh %156 : vector<8x128xf32>
    %163 = vector.extract_strided_slice %161 {offsets = [0, 0], sizes = [8, 32], strides = [1, 1]} : vector<8x128xf32> to vector<8x32xf32>
    %164 = vector.extract_strided_slice %161 {offsets = [0, 32], sizes = [8, 32], strides = [1, 1]} : vector<8x128xf32> to vector<8x32xf32>
    %165 = vector.extract_strided_slice %162 {offsets = [0, 64], sizes = [8, 32], strides = [1, 1]} : vector<8x128xf32> to vector<8x32xf32>
    %166 = vector.extract_strided_slice %161 {offsets = [0, 96], sizes = [8, 32], strides = [1, 1]} : vector<8x128xf32> to vector<8x32xf32>
    %167 = arith.mulf %164, %146 : vector<8x32xf32>
    %168 = arith.mulf %163, %165 : vector<8x32xf32>
    %169 = arith.addf %167, %168 : vector<8x32xf32>
    %170 = math.tanh %169 : vector<8x32xf32>
    %171 = arith.mulf %166, %170 : vector<8x32xf32>
    %172 = vector.shape_cast %171 : vector<8x32xf32> to vector<1x8x32xf32>
    %173 = arith.index_cast %c5_i32 : i32 to index
    %c0_59 = arith.constant 0 : index
    %c0_60 = arith.constant 0 : index
    %174 = vector.load %arg13[%173, %c0_59, %c0_60] : memref<8x8x32xf32, #tpu.memory_space<vmem>>, vector<1x8x32xf32>
    tpu.vector_store %arg13[%173, %c0_59, %c0_60], %172 {strides = array<i32>} : memref<8x8x32xf32, #tpu.memory_space<vmem>>, vector<1x8x32xf32>,
    %c6_i32 = arith.constant 6 : i32
    %175 = arith.index_cast %c6_i32 : i32 to index
    %c0_61 = arith.constant 0 : index
    %c0_62 = arith.constant 0 : index
    %176 = vector.load %arg12[%175, %c0_61, %c0_62] : memref<8x8x128xf32, #tpu.memory_space<vmem>>, vector<1x8x128xf32>
    %177 = vector.shape_cast %176 : vector<1x8x128xf32> to vector<8x128xf32>
    %cst_63 = arith.constant dense<0.000000e+00> : vector<8x128xf32>
    %178 = tpu.matmul %171, %35, %cst_63 {dimension_numbers = #tpu.dot_dimension_numbers<[1], [0], [0], [1], [0, 0, 1, 1], [], []>} : vector<8x32xf32>, vector<32x128xf32>, vector<8x128xf32> -> vector<8x128xf32>
    %179 = arith.addf %177, %178 : vector<8x128xf32>
    %180 = arith.negf %179 : vector<8x128xf32>
    %181 = math.exp %180 : vector<8x128xf32>
    %cst_64 = arith.constant 1.000000e+00 : f32
    %182 = vector.broadcast %cst_64 : f32 to vector<8x128xf32>
    %183 = arith.addf %182, %181 : vector<8x128xf32>
    %184 = arith.divf %182, %183 : vector<8x128xf32>
    %185 = math.tanh %179 : vector<8x128xf32>
    %186 = vector.extract_strided_slice %184 {offsets = [0, 0], sizes = [8, 32], strides = [1, 1]} : vector<8x128xf32> to vector<8x32xf32>
    %187 = vector.extract_strided_slice %184 {offsets = [0, 32], sizes = [8, 32], strides = [1, 1]} : vector<8x128xf32> to vector<8x32xf32>
    %188 = vector.extract_strided_slice %185 {offsets = [0, 64], sizes = [8, 32], strides = [1, 1]} : vector<8x128xf32> to vector<8x32xf32>
    %189 = vector.extract_strided_slice %184 {offsets = [0, 96], sizes = [8, 32], strides = [1, 1]} : vector<8x128xf32> to vector<8x32xf32>
    %190 = arith.mulf %187, %169 : vector<8x32xf32>
    %191 = arith.mulf %186, %188 : vector<8x32xf32>
    %192 = arith.addf %190, %191 : vector<8x32xf32>
    %193 = math.tanh %192 : vector<8x32xf32>
    %194 = arith.mulf %189, %193 : vector<8x32xf32>
    %195 = vector.shape_cast %194 : vector<8x32xf32> to vector<1x8x32xf32>
    %196 = arith.index_cast %c6_i32 : i32 to index
    %c0_65 = arith.constant 0 : index
    %c0_66 = arith.constant 0 : index
    %197 = vector.load %arg13[%196, %c0_65, %c0_66] : memref<8x8x32xf32, #tpu.memory_space<vmem>>, vector<1x8x32xf32>
    tpu.vector_store %arg13[%196, %c0_65, %c0_66], %195 {strides = array<i32>} : memref<8x8x32xf32, #tpu.memory_space<vmem>>, vector<1x8x32xf32>,
    %c7_i32 = arith.constant 7 : i32
    %198 = arith.index_cast %c7_i32 : i32 to index
    %c0_67 = arith.constant 0 : index
    %c0_68 = arith.constant 0 : index
    %199 = vector.load %arg12[%198, %c0_67, %c0_68] : memref<8x8x128xf32, #tpu.memory_space<vmem>>, vector<1x8x128xf32>
    %200 = vector.shape_cast %199 : vector<1x8x128xf32> to vector<8x128xf32>
    %cst_69 = arith.constant dense<0.000000e+00> : vector<8x128xf32>
    %201 = tpu.matmul %194, %35, %cst_69 {dimension_numbers = #tpu.dot_dimension_numbers<[1], [0], [0], [1], [0, 0, 1, 1], [], []>} : vector<8x32xf32>, vector<32x128xf32>, vector<8x128xf32> -> vector<8x128xf32>
    %202 = arith.addf %200, %201 : vector<8x128xf32>
    %203 = arith.negf %202 : vector<8x128xf32>
    %204 = math.exp %203 : vector<8x128xf32>
    %cst_70 = arith.constant 1.000000e+00 : f32
    %205 = vector.broadcast %cst_70 : f32 to vector<8x128xf32>
    %206 = arith.addf %205, %204 : vector<8x128xf32>
    %207 = arith.divf %205, %206 : vector<8x128xf32>
    %208 = math.tanh %202 : vector<8x128xf32>
    %209 = vector.extract_strided_slice %207 {offsets = [0, 0], sizes = [8, 32], strides = [1, 1]} : vector<8x128xf32> to vector<8x32xf32>
    %210 = vector.extract_strided_slice %207 {offsets = [0, 32], sizes = [8, 32], strides = [1, 1]} : vector<8x128xf32> to vector<8x32xf32>
    %211 = vector.extract_strided_slice %208 {offsets = [0, 64], sizes = [8, 32], strides = [1, 1]} : vector<8x128xf32> to vector<8x32xf32>
    %212 = vector.extract_strided_slice %207 {offsets = [0, 96], sizes = [8, 32], strides = [1, 1]} : vector<8x128xf32> to vector<8x32xf32>
    %213 = arith.mulf %210, %192 : vector<8x32xf32>
    %214 = arith.mulf %209, %211 : vector<8x32xf32>
    %215 = arith.addf %213, %214 : vector<8x32xf32>
    %216 = math.tanh %215 : vector<8x32xf32>
    %217 = arith.mulf %212, %216 : vector<8x32xf32>
    %218 = vector.shape_cast %217 : vector<8x32xf32> to vector<1x8x32xf32>
    %219 = arith.index_cast %c7_i32 : i32 to index
    %c0_71 = arith.constant 0 : index
    %c0_72 = arith.constant 0 : index
    %220 = vector.load %arg13[%219, %c0_71, %c0_72] : memref<8x8x32xf32, #tpu.memory_space<vmem>>, vector<1x8x32xf32>
    tpu.vector_store %arg13[%219, %c0_71, %c0_72], %218 {strides = array<i32>} : memref<8x8x32xf32, #tpu.memory_space<vmem>>, vector<1x8x32xf32>,
    %c8_i32 = arith.constant 8 : i32
    %c0_73 = arith.constant 0 : index
    %c0_74 = arith.constant 0 : index
    %c0_75 = arith.constant 0 : index
    %221 = vector.load %arg13[%c0_73, %c0_74, %c0_75] : memref<8x8x32xf32, #tpu.memory_space<vmem>>, vector<8x8x32xf32>
    %c7 = arith.constant 7 : index
    %c0_76 = arith.constant 0 : index
    %c0_77 = arith.constant 0 : index
    %222 = vector.load %arg13[%c7, %c0_76, %c0_77] : memref<8x8x32xf32, #tpu.memory_space<vmem>>, vector<1x8x32xf32>
    %223 = vector.shape_cast %222 : vector<1x8x32xf32> to vector<8x32xf32>
    %224 = vector.shape_cast %223 : vector<8x32xf32> to vector<1x8x32xf32>
    %c6 = arith.constant 6 : index
    %c0_78 = arith.constant 0 : index
    %c0_79 = arith.constant 0 : index
    %225 = vector.load %arg13[%c6, %c0_78, %c0_79] : memref<8x8x32xf32, #tpu.memory_space<vmem>>, vector<1x8x32xf32>
    %226 = vector.shape_cast %225 : vector<1x8x32xf32> to vector<8x32xf32>
    %227 = vector.shape_cast %226 : vector<8x32xf32> to vector<1x8x32xf32>
    %c5 = arith.constant 5 : index
    %c0_80 = arith.constant 0 : index
    %c0_81 = arith.constant 0 : index
    %228 = vector.load %arg13[%c5, %c0_80, %c0_81] : memref<8x8x32xf32, #tpu.memory_space<vmem>>, vector<1x8x32xf32>
    %229 = vector.shape_cast %228 : vector<1x8x32xf32> to vector<8x32xf32>
    %230 = vector.shape_cast %229 : vector<8x32xf32> to vector<1x8x32xf32>
    %c4 = arith.constant 4 : index
    %c0_82 = arith.constant 0 : index
    %c0_83 = arith.constant 0 : index
    %231 = vector.load %arg13[%c4, %c0_82, %c0_83] : memref<8x8x32xf32, #tpu.memory_space<vmem>>, vector<1x8x32xf32>
    %232 = vector.shape_cast %231 : vector<1x8x32xf32> to vector<8x32xf32>
    %233 = vector.shape_cast %232 : vector<8x32xf32> to vector<1x8x32xf32>
    %c3 = arith.constant 3 : index
    %c0_84 = arith.constant 0 : index
    %c0_85 = arith.constant 0 : index
    %234 = vector.load %arg13[%c3, %c0_84, %c0_85] : memref<8x8x32xf32, #tpu.memory_space<vmem>>, vector<1x8x32xf32>
    %235 = vector.shape_cast %234 : vector<1x8x32xf32> to vector<8x32xf32>
    %236 = vector.shape_cast %235 : vector<8x32xf32> to vector<1x8x32xf32>
    %c2 = arith.constant 2 : index
    %c0_86 = arith.constant 0 : index
    %c0_87 = arith.constant 0 : index
    %237 = vector.load %arg13[%c2, %c0_86, %c0_87] : memref<8x8x32xf32, #tpu.memory_space<vmem>>, vector<1x8x32xf32>
    %238 = vector.shape_cast %237 : vector<1x8x32xf32> to vector<8x32xf32>
    %239 = vector.shape_cast %238 : vector<8x32xf32> to vector<1x8x32xf32>
    %c1 = arith.constant 1 : index
    %c0_88 = arith.constant 0 : index
    %c0_89 = arith.constant 0 : index
    %240 = vector.load %arg13[%c1, %c0_88, %c0_89] : memref<8x8x32xf32, #tpu.memory_space<vmem>>, vector<1x8x32xf32>
    %241 = vector.shape_cast %240 : vector<1x8x32xf32> to vector<8x32xf32>
    %242 = vector.shape_cast %241 : vector<8x32xf32> to vector<1x8x32xf32>
    %c0_90 = arith.constant 0 : index
    %c0_91 = arith.constant 0 : index
    %c0_92 = arith.constant 0 : index
    %243 = vector.load %arg13[%c0_90, %c0_91, %c0_92] : memref<8x8x32xf32, #tpu.memory_space<vmem>>, vector<1x8x32xf32>
    %244 = vector.shape_cast %243 : vector<1x8x32xf32> to vector<8x32xf32>
    %245 = vector.shape_cast %244 : vector<8x32xf32> to vector<1x8x32xf32>
    %246 = tpu.concatenate %224, %227, %230, %233, %236, %239, %242, %245 in 0 : vector<1x8x32xf32>, vector<1x8x32xf32>, vector<1x8x32xf32>, vector<1x8x32xf32>, vector<1x8x32xf32>, vector<1x8x32xf32>, vector<1x8x32xf32>, vector<1x8x32xf32> -> vector<8x8x32xf32>
    %247 = tpu.iota {dimensions = array<i32: 2>} : vector<1x1x32xi32>
    %c16_i32 = arith.constant 16 : i32
    %248 = vector.broadcast %c16_i32 : i32 to vector<1x1x32xi32>
    %249 = arith.cmpi slt, %247, %248 : vector<1x1x32xi32>
    %250 = vector.shape_cast %249 : vector<1x1x32xi1> to vector<1x1x32xi1>
    %251 = vector.broadcast %250 : vector<1x1x32xi1> to vector<8x8x32xi1>
    %252 = arith.select %251, %221, %246 : vector<8x8x32xi1>, vector<8x8x32xf32>
    %253 = tpu.transpose %252, [1, 0, 2] : vector<8x8x32xf32> -> vector<8x8x32xf32>
    %cst_93 = arith.constant 0.000000e+00 : f32
    %254 = vector.broadcast %cst_93 : f32 to vector<8x8x64xf32>
    %255 = tpu.concatenate %34, %253, %254 in 2 : vector<8x8x32xf32>, vector<8x8x32xf32>, vector<8x8x64xf32> -> vector<8x8x128xf32>
    %c0_94 = arith.constant 0 : index
    %c0_95 = arith.constant 0 : index
    %c0_96 = arith.constant 0 : index
    %256 = vector.load %arg10[%c0_94, %c0_95, %c0_96] : memref<8x8x128xf32, #tpu.memory_space<vmem>>, vector<8x8x128xf32>
    tpu.vector_store %arg10[%c0_94, %c0_95, %c0_96], %255 {strides = array<i32>} : memref<8x8x128xf32, #tpu.memory_space<vmem>>, vector<8x8x128xf32>,
    %c0_97 = arith.constant 0 : index
    %c0_98 = arith.constant 0 : index
    %257 = vector.load %arg8[%c0_97, %c0_98] : memref<1x128xf32, #tpu.memory_space<vmem>>, vector<1x128xf32>
    %258 = vector.shape_cast %257 : vector<1x128xf32> to vector<1x1x128xf32>
    %259 = vector.broadcast %258 : vector<1x1x128xf32> to vector<8x8x128xf32>
    %260 = arith.mulf %255, %259 : vector<8x8x128xf32>
    %cst_99 = arith.constant dense<0.000000e+00> : vector<8x8xf32>
    %261 = vector.multi_reduction <add>, %260, %cst_99 [2] : vector<8x8x128xf32> to vector<8x8xf32>
    %262 = vector.shape_cast %261 : vector<8x8xf32> to vector<8x8x1xf32>
    %c0_100 = arith.constant 0 : index
    %c0_101 = arith.constant 0 : index
    %263 = vector.load %arg9[%c0_100, %c0_101] : memref<1x1xf32, #tpu.memory_space<vmem>>, vector<1x1xf32>
    %264 = vector.shape_cast %263 : vector<1x1xf32> to vector<1x1x1xf32>
    %265 = vector.broadcast %264 : vector<1x1x1xf32> to vector<8x8x1xf32>
    %266 = arith.addf %262, %265 : vector<8x8x1xf32>
    %cst_102 = arith.constant dense<0xFF800000> : vector<8x1xf32>
    %267 = vector.multi_reduction <maximumf>, %266, %cst_102 [1] : vector<8x8x1xf32> to vector<8x1xf32>
    %268 = vector.shape_cast %267 : vector<8x1xf32> to vector<8x1x1xf32>
    %269 = vector.broadcast %268 : vector<8x1x1xf32> to vector<8x8x1xf32>
    %270 = arith.subf %266, %269 : vector<8x8x1xf32>
    %271 = math.exp %270 : vector<8x8x1xf32>
    %cst_103 = arith.constant dense<0.000000e+00> : vector<8x1xf32>
    %272 = vector.multi_reduction <add>, %271, %cst_103 [1] : vector<8x8x1xf32> to vector<8x1xf32>
    %273 = vector.shape_cast %272 : vector<8x1xf32> to vector<8x1x1xf32>
    %274 = vector.broadcast %273 : vector<8x1x1xf32> to vector<8x8x1xf32>
    %275 = arith.divf %271, %274 : vector<8x8x1xf32>
    %276 = vector.broadcast %275 : vector<8x8x1xf32> to vector<8x8x128xf32>
    %277 = arith.mulf %276, %255 : vector<8x8x128xf32>
    %cst_104 = arith.constant dense<0.000000e+00> : vector<8x128xf32>
    %278 = vector.multi_reduction <add>, %277, %cst_104 [1] : vector<8x8x128xf32> to vector<8x128xf32>
    %279 = vector.shape_cast %278 : vector<8x128xf32> to vector<8x1x128xf32>
    %c0_105 = arith.constant 0 : index
    %c0_106 = arith.constant 0 : index
    %c0_107 = arith.constant 0 : index
    %280 = vector.load %arg11[%c0_105, %c0_106, %c0_107] : memref<8x1x128xf32, #tpu.memory_space<vmem>>, vector<8x1x128xf32>
    tpu.vector_store %arg11[%c0_105, %c0_106, %c0_107], %279 {strides = array<i32>} : memref<8x1x128xf32, #tpu.memory_space<vmem>>, vector<8x1x128xf32>,
    return
  }
  func.func @transform_0(%arg0: i32) -> (i32, i32, i32) {
    %c0_i32 = arith.constant 0 : i32
    %c0_i32_0 = arith.constant 0 : i32
    %c0_i32_1 = arith.constant 0 : i32
    return %arg0, %c0_i32, %c0_i32_0 : i32, i32, i32
  }
  func.func @transform_1(%arg0: i32) -> (i32, i32, i32) {
    %c0_i32 = arith.constant 0 : i32
    %c0_i32_0 = arith.constant 0 : i32
    %c0_i32_1 = arith.constant 0 : i32
    return %c0_i32, %arg0, %c0_i32_0 : i32, i32, i32
  }
  func.func @transform_2(%arg0: i32) -> (i32, i32) {
    %c0_i32 = arith.constant 0 : i32
    %c0_i32_0 = arith.constant 0 : i32
    %c0_i32_1 = arith.constant 0 : i32
    return %c0_i32, %c0_i32_0 : i32, i32
  }
  func.func @transform_3(%arg0: i32) -> (i32, i32) {
    %c0_i32 = arith.constant 0 : i32
    %c0_i32_0 = arith.constant 0 : i32
    %c0_i32_1 = arith.constant 0 : i32
    return %c0_i32, %c0_i32_0 : i32, i32
  }
  func.func @transform_4(%arg0: i32) -> (i32, i32) {
    %c0_i32 = arith.constant 0 : i32
    %c0_i32_0 = arith.constant 0 : i32
    %c0_i32_1 = arith.constant 0 : i32
    return %c0_i32, %c0_i32_0 : i32, i32
  }
  func.func @transform_5(%arg0: i32) -> (i32, i32) {
    %c0_i32 = arith.constant 0 : i32
    %c0_i32_0 = arith.constant 0 : i32
    %c0_i32_1 = arith.constant 0 : i32
    return %c0_i32, %c0_i32_0 : i32, i32
  }
  func.func @transform_6(%arg0: i32) -> (i32, i32) {
    %c0_i32 = arith.constant 0 : i32
    %c0_i32_0 = arith.constant 0 : i32
    %c0_i32_1 = arith.constant 0 : i32
    return %c0_i32, %c0_i32_0 : i32, i32
  }
  func.func @transform_7(%arg0: i32) -> (i32, i32) {
    %c0_i32 = arith.constant 0 : i32
    %c0_i32_0 = arith.constant 0 : i32
    %c0_i32_1 = arith.constant 0 : i32
    return %c0_i32, %c0_i32_0 : i32, i32
  }
  func.func @transform_8(%arg0: i32) -> (i32, i32) {
    %c0_i32 = arith.constant 0 : i32
    %c0_i32_0 = arith.constant 0 : i32
    %c0_i32_1 = arith.constant 0 : i32
    return %c0_i32, %c0_i32_0 : i32, i32
  }
  func.func @transform_9(%arg0: i32) -> (i32, i32, i32) {
    %c0_i32 = arith.constant 0 : i32
    %c0_i32_0 = arith.constant 0 : i32
    %c0_i32_1 = arith.constant 0 : i32
    return %arg0, %c0_i32, %c0_i32_0 : i32, i32, i32
  }
  func.func @transform_10(%arg0: i32) -> (i32, i32, i32) {
    %c0_i32 = arith.constant 0 : i32
    %c0_i32_0 = arith.constant 0 : i32
    %c0_i32_1 = arith.constant 0 : i32
    return %arg0, %c0_i32, %c0_i32_0 : i32, i32, i32
  }
}

</mosaic_0001>

<llo_original>
// kernel: tpu_custom_call.1
$region0: #{tpu_custom_call.1}
  #allocation0 [shape = 'u32[]', space=smem, size = 0x4, offset = 0x4, fixed_abs, tag = 'smem constant byte address 0x4 - core index']
  #allocation1 [shape = 'u32[144,128]{1,0:T(1,128)}', space=vmem, size = 0x12000, scoped, tag = 'internal scratch']
  #allocation2 [shape = 'f32[8,8,128]{2,1,0:T(8,128)}', space=vmem, size = 0x8000, scoped, tag = 'scratch operand']
  #allocation3 [shape = 'f32[8,8,32]{2,1,0:T(8,128)}', space=vmem, size = 0x8000, scoped, tag = 'scratch operand']
  #allocation4 [shape = 'f32[1,1]{1,0:T(1,128)S(1)}', space=vmem, size = 0x200, scoped, tag = 'scoped memory for tpu_custom_call.1']
  %s0 = inlined_call_operand.hbm [shape: f32[8,8,32], index: 0, kind: input, shape index: {}]
  %s1 = inlined_call_operand.hbm [shape: f32[8,8,64], index: 1, kind: input, shape index: {}]
  %s2 = inlined_call_operand.hbm [shape: f32[32,96], index: 2, kind: input, shape index: {}]
  %s3 = inlined_call_operand.vmem [shape: f32[1,96], index: 3, kind: input, shape index: {}]
  %s4 = inlined_call_operand.hbm [shape: f32[64,128], index: 4, kind: input, shape index: {}]
  %s5 = inlined_call_operand.vmem [shape: f32[1,128], index: 5, kind: input, shape index: {}]
  %s6 = inlined_call_operand.hbm [shape: f32[32,128], index: 6, kind: input, shape index: {}]
  %s7 = inlined_call_operand.vmem [shape: f32[1,128], index: 7, kind: input, shape index: {}]
  %s8 = inlined_call_operand.<no memory space> [shape: f32[1,1], index: 8, kind: input, shape index: {}]
  %s9 = inlined_call_operand.hbm [shape: f32[8,8,128], index: 9, kind: output, shape index: {0}]
  %s10 = inlined_call_operand.hbm [shape: f32[8,1,128], index: 10, kind: output, shape index: {1}]
  %11 = xla_tuple %s9, %s10
  %s12 = sld [smem:[#allocation0]]
  $region74: #{tpu_custom_call.1} parent=0
    _
  %s14 = ssub.s32 1, %s12
  %s15 = scalar_select 0, %s14, %s12
  %v16 = vstv %s8
  %17 = vst [vmem:[#allocation4] sm:$0x1] %v16
  $region1: #{tpu_custom_call.1} parent=0
    #allocation5 [shape = 'u8[32768]{0}', space=vmem, size = 0x8000, scoped, tag = 'input window, operand 0, single buffered']
    #allocation6 [shape = 's32[1]{0}', space=sflag, size = 0x4, scoped, tag = 'scoped memory for tpu_custom_call.1']
    #allocation7 [shape = 's32[1]{0}', space=sflag, size = 0x4, scoped, tag = 'scoped memory for tpu_custom_call.1']
    #allocation8 [shape = 'u8[32768]{0}', space=vmem, size = 0x8000, scoped, tag = 'input window, operand 1, single buffered']
    #allocation9 [shape = 's32[1]{0}', space=sflag, size = 0x4, scoped, tag = 'scoped memory for tpu_custom_call.1']
    #allocation10 [shape = 'u8[16384]{0}', space=vmem, size = 0x4000, scoped, tag = 'input window, operand 2, single buffered']
    #allocation11 [shape = 'u8[32768]{0}', space=vmem, size = 0x8000, scoped, tag = 'input window, operand 4, single buffered']
    #allocation12 [shape = 's32[1]{0}', space=sflag, size = 0x4, scoped, tag = 'scoped memory for tpu_custom_call.1']
    #allocation13 [shape = 'u8[16384]{0}', space=vmem, size = 0x4000, scoped, tag = 'input window, operand 6, single buffered']
    #allocation14 [shape = 'u8[32768]{0}', space=vmem, size = 0x8000, scoped, tag = 'output window, operand 0, single buffered']
    #allocation15 [shape = 'u8[4096]{0}', space=vmem, size = 0x1000, scoped, tag = 'output window, operand 1, single buffered']
    #allocation16 [shape = 's32[1]{0}', space=sflag, size = 0x4, scoped, tag = 'scoped memory for tpu_custom_call.1']
    %18 = vsyncpa [#allocation6], 0
    %19 = vsyncpa [#allocation9], 0
    %20 = vsyncpa [#allocation12], 0
    %21 = vsyncpa [#allocation7], 0
    %22 = vsyncpa [#allocation16], 0
    // Predicated region
    $region2: #{tpu_custom_call.1} parent=1 // pred_check
      _
    $region3: #{tpu_custom_call.1} parent=1 // pred_check_branch
      %24 = sbr.rel (0) target = $region5
    $region4: #{tpu_custom_call.1} parent=1 // pred_region
      %s26 = ssub.s32 1024, 1024
      %27 = vsyncadd [#allocation6], %s26
      %s28 = sshll.u32 [#allocation5], 4
      %s29 = int_to_ptr.vmem [resolvable:$true] %s28
      %34 = dma.hbm_to_vmem [thread:$0]  %s0, 1024, %s29, [#allocation6], 128, 128, 8
    $region5: #{tpu_custom_call.1} parent=1 // pred_fallthru
      _
    // Predicated region
    $region6: #{tpu_custom_call.1} parent=1 // pred_check
      _
    $region7: #{tpu_custom_call.1} parent=1 // pred_check_branch
      %36 = sbr.rel (0) target = $region9
    $region8: #{tpu_custom_call.1} parent=1 // pred_region
      %s38 = ssub.s32 1024, 1024
      %39 = vsyncadd [#allocation9], %s38
      %s40 = sshll.u32 [#allocation8], 4
      %s41 = int_to_ptr.vmem [resolvable:$true] %s40
      %46 = dma.hbm_to_vmem [thread:$0]  %s1, 1024, %s41, [#allocation9], 128, 128, 8
    $region9: #{tpu_custom_call.1} parent=1 // pred_fallthru
      _
    // Predicated region
    $region10: #{tpu_custom_call.1} parent=1 // pred_check
      _
    $region11: #{tpu_custom_call.1} parent=1 // pred_check_branch
      %48 = sbr.rel (0) target = $region13
    $region12: #{tpu_custom_call.1} parent=1 // pred_region
      %s50 = ssub.s32 512, 512
      %51 = vsyncadd [#allocation9], %s50
      %s52 = sshll.u32 [#allocation10], 4
      %s53 = int_to_ptr.vmem [resolvable:$true] %s52
      %58 = dma.hbm_to_vmem [thread:$0]  %s2, 512, %s53, [#allocation9], 128, 128, 8
    $region13: #{tpu_custom_call.1} parent=1 // pred_fallthru
      _
    // Predicated region
    $region14: #{tpu_custom_call.1} parent=1 // pred_check
      _
    $region15: #{tpu_custom_call.1} parent=1 // pred_check_branch
      %60 = sbr.rel (0) target = $region17
    $region16: #{tpu_custom_call.1} parent=1 // pred_region
      _
    $region17: #{tpu_custom_call.1} parent=1 // pred_fallthru
      _
    // Predicated region
    $region18: #{tpu_custom_call.1} parent=1 // pred_check
      _
    $region19: #{tpu_custom_call.1} parent=1 // pred_check_branch
      %62 = sbr.rel (0) target = $region21
    $region20: #{tpu_custom_call.1} parent=1 // pred_region
      %s64 = ssub.s32 1024, 1024
      %65 = vsyncadd [#allocation12], %s64
      %s66 = sshll.u32 [#allocation11], 4
      %s67 = int_to_ptr.vmem [resolvable:$true] %s66
      %72 = dma.hbm_to_vmem [thread:$0]  %s4, 1024, %s67, [#allocation12], 128, 128, 8
    $region21: #{tpu_custom_call.1} parent=1 // pred_fallthru
      _
    // Predicated region
    $region22: #{tpu_custom_call.1} parent=1 // pred_check
      _
    $region23: #{tpu_custom_call.1} parent=1 // pred_check_branch
      %74 = sbr.rel (0) target = $region25
    $region24: #{tpu_custom_call.1} parent=1 // pred_region
      _
    $region25: #{tpu_custom_call.1} parent=1 // pred_fallthru
      _
    // Predicated region
    $region26: #{tpu_custom_call.1} parent=1 // pred_check
      _
    $region27: #{tpu_custom_call.1} parent=1 // pred_check_branch
      %76 = sbr.rel (0) target = $region29
    $region28: #{tpu_custom_call.1} parent=1 // pred_region
      %s78 = ssub.s32 512, 512
      %79 = vsyncadd [#allocation12], %s78
      %s80 = sshll.u32 [#allocation13], 4
      %s81 = int_to_ptr.vmem [resolvable:$true] %s80
      %86 = dma.hbm_to_vmem [thread:$0]  %s6, 512, %s81, [#allocation12], 128, 128, 8
    $region29: #{tpu_custom_call.1} parent=1 // pred_fallthru
      _
    // Predicated region
    $region30: #{tpu_custom_call.1} parent=1 // pred_check
      _
    $region31: #{tpu_custom_call.1} parent=1 // pred_check_branch
      %88 = sbr.rel (0) target = $region33
    $region32: #{tpu_custom_call.1} parent=1 // pred_region
      _
    $region33: #{tpu_custom_call.1} parent=1 // pred_fallthru
      _
    // Predicated region
    $region34: #{tpu_custom_call.1} parent=1 // pred_check
      _
    $region35: #{tpu_custom_call.1} parent=1 // pred_check_branch
      %90 = sbr.rel (0) target = $region37
    $region36: #{tpu_custom_call.1} parent=1 // pred_region
      _
    $region37: #{tpu_custom_call.1} parent=1 // pred_fallthru
      _
    // Predicated region
    $region38: #{tpu_custom_call.1} parent=1 // pred_check
      _
    $region39: #{tpu_custom_call.1} parent=1 // pred_check_branch
      %92 = sbr.rel (0) target = $region41
    $region40: #{tpu_custom_call.1} parent=1 // pred_region
      %93 = dma.done [#allocation6], 1024
    $region41: #{tpu_custom_call.1} parent=1 // pred_fallthru
      _
    // Predicated region
    $region42: #{tpu_custom_call.1} parent=1 // pred_check
      _
    $region43: #{tpu_custom_call.1} parent=1 // pred_check_branch
      %95 = sbr.rel (0) target = $region45
    $region44: #{tpu_custom_call.1} parent=1 // pred_region
      %96 = dma.done [#allocation9], 1024
    $region45: #{tpu_custom_call.1} parent=1 // pred_fallthru
      _
    // Predicated region
    $region46: #{tpu_custom_call.1} parent=1 // pred_check
      _
    $region47: #{tpu_custom_call.1} parent=1 // pred_check_branch
      %98 = sbr.rel (0) target = $region49
    $region48: #{tpu_custom_call.1} parent=1 // pred_region
      %99 = dma.done [#allocation9], 512
    $region49: #{tpu_custom_call.1} parent=1 // pred_fallthru
      _
    // Predicated region
    $region50: #{tpu_custom_call.1} parent=1 // pred_check
      _
    $region51: #{tpu_custom_call.1} parent=1 // pred_check_branch
      %101 = sbr.rel (0) target = $region53
    $region52: #{tpu_custom_call.1} parent=1 // pred_region
      %102 = dma.done [#allocation12], 1024
    $region53: #{tpu_custom_call.1} parent=1 // pred_fallthru
      _
    // Predicated region
    $region54: #{tpu_custom_call.1} parent=1 // pred_check
      _
    $region55: #{tpu_custom_call.1} parent=1 // pred_check_branch
      %104 = sbr.rel (0) target = $region57
    $region56: #{tpu_custom_call.1} parent=1 // pred_region
      %105 = dma.done [#allocation12], 512
    $region57: #{tpu_custom_call.1} parent=1 // pred_fallthru
      _
    %v106 = vld [vmem:[#allocation5] sm:$0xff]
    %v107 = vld [vmem:[#allocation5 + $0x8] sm:$0xff]
    %v108 = vld [vmem:[#allocation5 + $0x10] sm:$0xff]
    %v109 = vld [vmem:[#allocation5 + $0x18] sm:$0xff]
    %v110 = vld [vmem:[#allocation5 + $0x20] sm:$0xff]
    %v111 = vld [vmem:[#allocation5 + $0x28] sm:$0xff]
    %v112 = vld [vmem:[#allocation5 + $0x30] sm:$0xff]
    %v113 = vld [vmem:[#allocation5 + $0x38] sm:$0xff]
    %v114 = vld [vmem:[#allocation10] sm:$0xff]
    %v115 = vld [vmem:[#allocation10 + $0x8] sm:$0xff]
    %v116 = vld [vmem:[#allocation10 + $0x10] sm:$0xff]
    %v117 = vld [vmem:[#allocation10 + $0x18] sm:$0xff]
    %v118 = vld [vmem:[%s3] sm:$0x1]
    %v120 = vlaneseq
    %v121 = vshrl.u32 %v120, 7
    %v122 = vsub.s32 0, %v121
    %v123 = vrot.slane %v118, %v122
    %vm125 = vcmask 261120
    %v127 = vsel %vm125, %v106, 0
    %v130 = vsel %vm125, %v107, 0
    %v133 = vsel %vm125, %v108, 0
    %v136 = vsel %vm125, %v109, 0
    %v139 = vsel %vm125, %v110, 0
    %v142 = vsel %vm125, %v111, 0
    %v145 = vsel %vm125, %v112, 0
    %v148 = vsel %vm125, %v113, 0
    %150 = vmatprep.subr.mxu0 0.0
    %151 = vmatpush1.msra.mxu0 %v114
    %152 = vmatprep.subr.mxu0 0.0
    %153 = vmatpush1.msra.mxu0 %v115
    %154 = vmatprep.subr.mxu0 0.0
    %155 = vmatpush1.msra.mxu0 %v116
    %156 = vmatprep.subr.mxu0 0.0
    %157 = vmatpush1.msra.mxu0 %v117
    %158 = vmatprep.subr.mxu0 0.0
    %159 = vmatpush1.msra.mxu0 0.0
    %160 = vmatprep.subr.mxu0 0.0
    %161 = vmatpush1.msra.mxu0 0.0
    %162 = vmatprep.subr.mxu0 0.0
    %163 = vmatpush1.msra.mxu0 0.0
    %164 = vmatprep.subr.mxu0 0.0
    %165 = vmatpush1.msra.mxu0 0.0
    %166 = vmatprep.subr.mxu0 0.0
    %167 = vmatpush1.msra.mxu0 0.0
    %168 = vmatprep.subr.mxu0 0.0
    %169 = vmatpush1.msra.mxu0 0.0
    %170 = vmatprep.subr.mxu0 0.0
    %171 = vmatpush1.msra.mxu0 0.0
    %172 = vmatprep.subr.mxu0 0.0
    %173 = vmatpush1.msra.mxu0 0.0
    %174 = vmatprep.subr.mxu0 0.0
    %175 = vmatpush1.msra.mxu0 0.0
    %176 = vmatprep.subr.mxu0 0.0
    %177 = vmatpush1.msra.mxu0 0.0
    %178 = vmatprep.subr.mxu0 0.0
    %179 = vmatpush1.msra.mxu0 0.0
    %180 = vmatprep.subr.mxu0 0.0
    %181 = vmatpush1.msra.mxu0 0.0
    %182 = vmatprep.subr.mxu0 0.0
    %183 = vmatpush1.msra.mxu0 0.0
    %184 = vmatprep.subr.mxu0 0.0
    %185 = vmatpush1.msra.mxu0 0.0
    %186 = vmatprep.subr.mxu0 0.0
    %187 = vmatpush1.msra.mxu0 0.0
    %188 = vmatprep.subr.mxu0 0.0
    %189 = vmatpush1.msra.mxu0 0.0
    %190 = vmatprep.subr.mxu0 0.0
    %191 = vmatpush1.msra.mxu0 0.0
    %192 = vmatprep.subr.mxu0 0.0
    %193 = vmatpush1.msra.mxu0 0.0
    %194 = vmatprep.subr.mxu0 0.0
    %195 = vmatpush1.msra.mxu0 0.0
    %196 = vmatprep.subr.mxu0 0.0
    %197 = vmatpush1.msra.mxu0 0.0
    %198 = vmatprep.subr.mxu0 0.0
    %199 = vmatpush1.msra.mxu0 0.0
    %200 = vmatprep.subr.mxu0 0.0
    %201 = vmatpush1.msra.mxu0 0.0
    %202 = vmatprep.subr.mxu0 0.0
    %203 = vmatpush1.msra.mxu0 0.0
    %204 = vmatprep.subr.mxu0 0.0
    %205 = vmatpush1.msra.mxu0 0.0
    %206 = vmatprep.subr.mxu0 0.0
    %207 = vmatpush1.msra.mxu0 0.0
    %208 = vmatprep.subr.mxu0 0.0
    %209 = vmatpush1.msra.mxu0 0.0
    %210 = vmatprep.subr.mxu0 0.0
    %211 = vmatpush1.msra.mxu0 0.0
    %212 = vmatprep.subr.mxu0 0.0
    %213 = vmatpush1.msra.mxu0 0.0
    %214 = vmatprep.mubr.f32.mxu0 0.0
    %215 = vmatmul.mubr.f32.gmra.mrb[0].mxu0 %v127
    %v216 = vpop.f32.mrb[0].mxu0
    %v217 = vadd.f32 %v123, %v216
    %v218 = vpop.f32.mrb[0].mxu0
    %219 = vmatprep.mubr.f32.mxu0 0.0
    %220 = vmatmul.mubr.f32.gmra.mrb[0].mxu0 %v130
    %v221 = vpop.f32.mrb[0].mxu0
    %v222 = vadd.f32 %v123, %v221
    %v223 = vpop.f32.mrb[0].mxu0
    %224 = vmatprep.mubr.f32.mxu0 0.0
    %225 = vmatmul.mubr.f32.gmra.mrb[0].mxu0 %v133
    %v226 = vpop.f32.mrb[0].mxu0
    %v227 = vadd.f32 %v123, %v226
    %v228 = vpop.f32.mrb[0].mxu0
    %229 = vmatprep.mubr.f32.mxu0 0.0
    %230 = vmatmul.mubr.f32.gmra.mrb[0].mxu0 %v136
    %v231 = vpop.f32.mrb[0].mxu0
    %v232 = vadd.f32 %v123, %v231
    %v233 = vpop.f32.mrb[0].mxu0
    %234 = vmatprep.mubr.f32.mxu0 0.0
    %235 = vmatmul.mubr.f32.gmra.mrb[0].mxu0 %v139
    %v236 = vpop.f32.mrb[0].mxu0
    %v237 = vadd.f32 %v123, %v236
    %v238 = vpop.f32.mrb[0].mxu0
    %239 = vmatprep.mubr.f32.mxu0 0.0
    %240 = vmatmul.mubr.f32.gmra.mrb[0].mxu0 %v142
    %v241 = vpop.f32.mrb[0].mxu0
    %v242 = vadd.f32 %v123, %v241
    %v243 = vpop.f32.mrb[0].mxu0
    %244 = vmatprep.mubr.f32.mxu0 0.0
    %245 = vmatmul.mubr.f32.gmra.mrb[0].mxu0 %v145
    %v246 = vpop.f32.mrb[0].mxu0
    %v247 = vadd.f32 %v123, %v246
    %v248 = vpop.f32.mrb[0].mxu0
    %249 = vmatprep.mubr.f32.mxu0 0.0
    %250 = vmatmul.mubr.f32.gmra.mrb[0].mxu0 %v148
    %v251 = vpop.f32.mrb[0].mxu0
    %v252 = vadd.f32 %v123, %v251
    %v253 = vpop.f32.mrb[0].mxu0
    %254 = vdwg.mxu0
    %v255 = vld [vmem:[#allocation8] sm:$0xff]
    %v256 = vld [vmem:[#allocation8 + $0x8] sm:$0xff]
    %v257 = vld [vmem:[#allocation8 + $0x10] sm:$0xff]
    %v258 = vld [vmem:[#allocation8 + $0x18] sm:$0xff]
    %v259 = vld [vmem:[#allocation8 + $0x20] sm:$0xff]
    %v260 = vld [vmem:[#allocation8 + $0x28] sm:$0xff]
    %v261 = vld [vmem:[#allocation8 + $0x30] sm:$0xff]
    %v262 = vld [vmem:[#allocation8 + $0x38] sm:$0xff]
    %v263 = vld [vmem:[#allocation11] sm:$0xff]
    %v264 = vld [vmem:[#allocation11 + $0x8] sm:$0xff]
    %v265 = vld [vmem:[#allocation11 + $0x10] sm:$0xff]
    %v266 = vld [vmem:[#allocation11 + $0x18] sm:$0xff]
    %v267 = vld [vmem:[#allocation11 + $0x20] sm:$0xff]
    %v268 = vld [vmem:[#allocation11 + $0x28] sm:$0xff]
    %v269 = vld [vmem:[#allocation11 + $0x30] sm:$0xff]
    %v270 = vld [vmem:[#allocation11 + $0x38] sm:$0xff]
    %v271 = vld [vmem:[%s5] sm:$0x1]
    %v273 = vlaneseq
    %v274 = vshrl.u32 %v273, 7
    %v275 = vsub.s32 0, %v274
    %v276 = vrot.slane %v271, %v275
    %vm278 = vcmask 523264
    %v280 = vsel %vm278, %v255, 0
    %v283 = vsel %vm278, %v256, 0
    %v286 = vsel %vm278, %v257, 0
    %v289 = vsel %vm278, %v258, 0
    %v292 = vsel %vm278, %v259, 0
    %v295 = vsel %vm278, %v260, 0
    %v298 = vsel %vm278, %v261, 0
    %v301 = vsel %vm278, %v262, 0
    %303 = vmatprep.subr.mxu0 0.0
    %304 = vmatpush1.msra.mxu0 %v263
    %305 = vmatprep.subr.mxu0 0.0
    %306 = vmatpush1.msra.mxu0 %v264
    %307 = vmatprep.subr.mxu0 0.0
    %308 = vmatpush1.msra.mxu0 %v265
    %309 = vmatprep.subr.mxu0 0.0
    %310 = vmatpush1.msra.mxu0 %v266
    %311 = vmatprep.subr.mxu0 0.0
    %312 = vmatpush1.msra.mxu0 %v267
    %313 = vmatprep.subr.mxu0 0.0
    %314 = vmatpush1.msra.mxu0 %v268
    %315 = vmatprep.subr.mxu0 0.0
    %316 = vmatpush1.msra.mxu0 %v269
    %317 = vmatprep.subr.mxu0 0.0
    %318 = vmatpush1.msra.mxu0 %v270
    %319 = vmatprep.subr.mxu0 0.0
    %320 = vmatpush1.msra.mxu0 0.0
    %321 = vmatprep.subr.mxu0 0.0
    %322 = vmatpush1.msra.mxu0 0.0
    %323 = vmatprep.subr.mxu0 0.0
    %324 = vmatpush1.msra.mxu0 0.0
    %325 = vmatprep.subr.mxu0 0.0
    %326 = vmatpush1.msra.mxu0 0.0
    %327 = vmatprep.subr.mxu0 0.0
    %328 = vmatpush1.msra.mxu0 0.0
    %329 = vmatprep.subr.mxu0 0.0
    %330 = vmatpush1.msra.mxu0 0.0
    %331 = vmatprep.subr.mxu0 0.0
    %332 = vmatpush1.msra.mxu0 0.0
    %333 = vmatprep.subr.mxu0 0.0
    %334 = vmatpush1.msra.mxu0 0.0
    %335 = vmatprep.subr.mxu0 0.0
    %336 = vmatpush1.msra.mxu0 0.0
    %337 = vmatprep.subr.mxu0 0.0
    %338 = vmatpush1.msra.mxu0 0.0
    %339 = vmatprep.subr.mxu0 0.0
    %340 = vmatpush1.msra.mxu0 0.0
    %341 = vmatprep.subr.mxu0 0.0
    %342 = vmatpush1.msra.mxu0 0.0
    %343 = vmatprep.subr.mxu0 0.0
    %344 = vmatpush1.msra.mxu0 0.0
    %345 = vmatprep.subr.mxu0 0.0
    %346 = vmatpush1.msra.mxu0 0.0
    %347 = vmatprep.subr.mxu0 0.0
    %348 = vmatpush1.msra.mxu0 0.0
    %349 = vmatprep.subr.mxu0 0.0
    %350 = vmatpush1.msra.mxu0 0.0
    %351 = vmatprep.subr.mxu0 0.0
    %352 = vmatpush1.msra.mxu0 0.0
    %353 = vmatprep.subr.mxu0 0.0
    %354 = vmatpush1.msra.mxu0 0.0
    %355 = vmatprep.subr.mxu0 0.0
    %356 = vmatpush1.msra.mxu0 0.0
    %357 = vmatprep.subr.mxu0 0.0
    %358 = vmatpush1.msra.mxu0 0.0
    %359 = vmatprep.subr.mxu0 0.0
    %360 = vmatpush1.msra.mxu0 0.0
    %361 = vmatprep.subr.mxu0 0.0
    %362 = vmatpush1.msra.mxu0 0.0
    %363 = vmatprep.subr.mxu0 0.0
    %364 = vmatpush1.msra.mxu0 0.0
    %365 = vmatprep.subr.mxu0 0.0
    %366 = vmatpush1.msra.mxu0 0.0
    %367 = vmatprep.mubr.f32.mxu0 0.0
    %368 = vmatmul.mubr.f32.gmra.mrb[0].mxu0 %v280
    %v369 = vpop.f32.mrb[0].mxu0
    %v370 = vadd.f32 %v276, %v369
    %v371 = vpop.f32.mrb[0].mxu0
    %372 = vmatprep.mubr.f32.mxu0 0.0
    %373 = vmatmul.mubr.f32.gmra.mrb[0].mxu0 %v283
    %v374 = vpop.f32.mrb[0].mxu0
    %v375 = vadd.f32 %v276, %v374
    %v376 = vpop.f32.mrb[0].mxu0
    %377 = vmatprep.mubr.f32.mxu0 0.0
    %378 = vmatmul.mubr.f32.gmra.mrb[0].mxu0 %v286
    %v379 = vpop.f32.mrb[0].mxu0
    %v380 = vadd.f32 %v276, %v379
    %v381 = vpop.f32.mrb[0].mxu0
    %382 = vmatprep.mubr.f32.mxu0 0.0
    %383 = vmatmul.mubr.f32.gmra.mrb[0].mxu0 %v289
    %v384 = vpop.f32.mrb[0].mxu0
    %v385 = vadd.f32 %v276, %v384
    %v386 = vpop.f32.mrb[0].mxu0
    %387 = vmatprep.mubr.f32.mxu0 0.0
    %388 = vmatmul.mubr.f32.gmra.mrb[0].mxu0 %v292
    %v389 = vpop.f32.mrb[0].mxu0
    %v390 = vadd.f32 %v276, %v389
    %v391 = vpop.f32.mrb[0].mxu0
    %392 = vmatprep.mubr.f32.mxu0 0.0
    %393 = vmatmul.mubr.f32.gmra.mrb[0].mxu0 %v295
    %v394 = vpop.f32.mrb[0].mxu0
    %v395 = vadd.f32 %v276, %v394
    %v396 = vpop.f32.mrb[0].mxu0
    %397 = vmatprep.mubr.f32.mxu0 0.0
    %398 = vmatmul.mubr.f32.gmra.mrb[0].mxu0 %v298
    %v399 = vpop.f32.mrb[0].mxu0
    %v400 = vadd.f32 %v276, %v399
    %v401 = vpop.f32.mrb[0].mxu0
    %402 = vmatprep.mubr.f32.mxu0 0.0
    %403 = vmatmul.mubr.f32.gmra.mrb[0].mxu0 %v301
    %v404 = vpop.f32.mrb[0].mxu0
    %v405 = vadd.f32 %v276, %v404
    %v406 = vpop.f32.mrb[0].mxu0
    %407 = vdwg.mxu0
    %408 = vst [vmem:[#allocation2] sm:$0xff] %v370
    %409 = vst [vmem:[#allocation2 + $0x8] sm:$0xff] %v375
    %410 = vst [vmem:[#allocation2 + $0x10] sm:$0xff] %v380
    %411 = vst [vmem:[#allocation2 + $0x18] sm:$0xff] %v385
    %412 = vst [vmem:[#allocation2 + $0x20] sm:$0xff] %v390
    %413 = vst [vmem:[#allocation2 + $0x28] sm:$0xff] %v395
    %414 = vst [vmem:[#allocation2 + $0x30] sm:$0xff] %v400
    %415 = vst [vmem:[#allocation2 + $0x38] sm:$0xff] %v405
    %417 = vrot.lane.b32.xlu0 %v217, 96
    %v418 = vpop.permute.xlu0 %417
    %v419 = vsel %vm125, %v217, 0
    %v421 = vsel %vm125, %v418, 0
    %423 = vmatprep.subr.mxu0 0.0
    %424 = vmatpush1.xpose.msra.mxu0 %v421
    %425 = vmatprep.subr.mxu0 0.0
    %426 = vmatpush1.xpose.msra.mxu0 0.0
    %427 = vmatprep.subr.mxu0 0.0
    %428 = vmatpush1.xpose.msra.mxu0 0.0
    %429 = vmatprep.subr.mxu0 0.0
    %430 = vmatpush1.xpose.msra.mxu0 0.0
    %431 = vmatprep.subr.mxu0 0.0
    %432 = vmatpush1.xpose.msra.mxu0 0.0
    %433 = vmatprep.subr.mxu0 0.0
    %434 = vmatpush1.xpose.msra.mxu0 0.0
    %435 = vmatprep.subr.mxu0 0.0
    %436 = vmatpush1.xpose.msra.mxu0 0.0
    %437 = vmatprep.subr.mxu0 0.0
    %438 = vmatpush1.xpose.msra.mxu0 0.0
    %439 = vmatprep.subr.mxu0 0.0
    %440 = vmatpush1.xpose.msra.mxu0 0.0
    %441 = vmatprep.subr.mxu0 0.0
    %442 = vmatpush1.xpose.msra.mxu0 0.0
    %443 = vmatprep.subr.mxu0 0.0
    %444 = vmatpush1.xpose.msra.mxu0 0.0
    %445 = vmatprep.subr.mxu0 0.0
    %446 = vmatpush1.xpose.msra.mxu0 0.0
    %447 = vmatprep.subr.mxu0 0.0
    %448 = vmatpush1.xpose.msra.mxu0 0.0
    %449 = vmatprep.subr.mxu0 0.0
    %450 = vmatpush1.xpose.msra.mxu0 0.0
    %451 = vmatprep.subr.mxu0 0.0
    %452 = vmatpush1.xpose.msra.mxu0 0.0
    %453 = vmatprep.subr.mxu0 0.0
    %454 = vmatpush1.xpose.msra.mxu0 0.0
    %455 = vmatprep.subr.mxu0 0.0
    %456 = vmatpush1.xpose.msra.mxu0 0.0
    %457 = vmatprep.subr.mxu0 0.0
    %458 = vmatpush1.xpose.msra.mxu0 0.0
    %459 = vmatprep.subr.mxu0 0.0
    %460 = vmatpush1.xpose.msra.mxu0 0.0
    %461 = vmatprep.subr.mxu0 0.0
    %462 = vmatpush1.xpose.msra.mxu0 0.0
    %463 = vmatprep.subr.mxu0 0.0
    %464 = vmatpush1.xpose.msra.mxu0 0.0
    %465 = vmatprep.subr.mxu0 0.0
    %466 = vmatpush1.xpose.msra.mxu0 0.0
    %467 = vmatprep.subr.mxu0 0.0
    %468 = vmatpush1.xpose.msra.mxu0 0.0
    %469 = vmatprep.subr.mxu0 0.0
    %470 = vmatpush1.xpose.msra.mxu0 0.0
    %471 = vmatprep.subr.mxu0 0.0
    %472 = vmatpush1.xpose.msra.mxu0 0.0
    %473 = vmatprep.subr.mxu0 0.0
    %474 = vmatpush1.xpose.msra.mxu0 0.0
    %475 = vmatprep.subr.mxu0 0.0
    %476 = vmatpush1.xpose.msra.mxu0 0.0
    %477 = vmatprep.subr.mxu0 0.0
    %478 = vmatpush1.xpose.msra.mxu0 0.0
    %479 = vmatprep.subr.mxu0 0.0
    %480 = vmatpush1.xpose.msra.mxu0 0.0
    %481 = vmatprep.subr.mxu0 0.0
    %482 = vmatpush1.xpose.msra.mxu0 0.0
    %483 = vmatprep.subr.mxu0 0.0
    %484 = vmatpush1.xpose.msra.mxu0 0.0
    %485 = vmatprep.subr.mxu0 0.0
    %486 = vmatpush1.xpose.msra.mxu0 0.0
    %487 = vmatprep.mubr.f32.mxu0 0.0
    %488 = vmatmul.mubr.f32.gmra.mrb[0].mxu0 %v419
    %v489 = vpop.f32.mrb[0].mxu0
    %v490 = vadd.f32 0.0, %v489
    %v491 = vpop.f32.mrb[0].mxu0
    %492 = vdwg.mxu0
    %494 = vrot.lane.b32.xlu0 %v222, 96
    %v495 = vpop.permute.xlu0 %494
    %v496 = vsel %vm125, %v222, 0
    %v498 = vsel %vm125, %v495, 0
    %500 = vmatprep.subr.mxu0 0.0
    %501 = vmatpush1.xpose.msra.mxu0 %v498
    %502 = vmatprep.subr.mxu0 0.0
    %503 = vmatpush1.xpose.msra.mxu0 0.0
    %504 = vmatprep.subr.mxu0 0.0
    %505 = vmatpush1.xpose.msra.mxu0 0.0
    %506 = vmatprep.subr.mxu0 0.0
    %507 = vmatpush1.xpose.msra.mxu0 0.0
    %508 = vmatprep.subr.mxu0 0.0
    %509 = vmatpush1.xpose.msra.mxu0 0.0
    %510 = vmatprep.subr.mxu0 0.0
    %511 = vmatpush1.xpose.msra.mxu0 0.0
    %512 = vmatprep.subr.mxu0 0.0
    %513 = vmatpush1.xpose.msra.mxu0 0.0
    %514 = vmatprep.subr.mxu0 0.0
    %515 = vmatpush1.xpose.msra.mxu0 0.0
    %516 = vmatprep.subr.mxu0 0.0
    %517 = vmatpush1.xpose.msra.mxu0 0.0
    %518 = vmatprep.subr.mxu0 0.0
    %519 = vmatpush1.xpose.msra.mxu0 0.0
    %520 = vmatprep.subr.mxu0 0.0
    %521 = vmatpush1.xpose.msra.mxu0 0.0
    %522 = vmatprep.subr.mxu0 0.0
    %523 = vmatpush1.xpose.msra.mxu0 0.0
    %524 = vmatprep.subr.mxu0 0.0
    %525 = vmatpush1.xpose.msra.mxu0 0.0
    %526 = vmatprep.subr.mxu0 0.0
    %527 = vmatpush1.xpose.msra.mxu0 0.0
    %528 = vmatprep.subr.mxu0 0.0
    %529 = vmatpush1.xpose.msra.mxu0 0.0
    %530 = vmatprep.subr.mxu0 0.0
    %531 = vmatpush1.xpose.msra.mxu0 0.0
    %532 = vmatprep.subr.mxu0 0.0
    %533 = vmatpush1.xpose.msra.mxu0 0.0
    %534 = vmatprep.subr.mxu0 0.0
    %535 = vmatpush1.xpose.msra.mxu0 0.0
    %536 = vmatprep.subr.mxu0 0.0
    %537 = vmatpush1.xpose.msra.mxu0 0.0
    %538 = vmatprep.subr.mxu0 0.0
    %539 = vmatpush1.xpose.msra.mxu0 0.0
    %540 = vmatprep.subr.mxu0 0.0
    %541 = vmatpush1.xpose.msra.mxu0 0.0
    %542 = vmatprep.subr.mxu0 0.0
    %543 = vmatpush1.xpose.msra.mxu0 0.0
    %544 = vmatprep.subr.mxu0 0.0
    %545 = vmatpush1.xpose.msra.mxu0 0.0
    %546 = vmatprep.subr.mxu0 0.0
    %547 = vmatpush1.xpose.msra.mxu0 0.0
    %548 = vmatprep.subr.mxu0 0.0
    %549 = vmatpush1.xpose.msra.mxu0 0.0
    %550 = vmatprep.subr.mxu0 0.0
    %551 = vmatpush1.xpose.msra.mxu0 0.0
    %552 = vmatprep.subr.mxu0 0.0
    %553 = vmatpush1.xpose.msra.mxu0 0.0
    %554 = vmatprep.subr.mxu0 0.0
    %555 = vmatpush1.xpose.msra.mxu0 0.0
    %556 = vmatprep.subr.mxu0 0.0
    %557 = vmatpush1.xpose.msra.mxu0 0.0
    %558 = vmatprep.subr.mxu0 0.0
    %559 = vmatpush1.xpose.msra.mxu0 0.0
    %560 = vmatprep.subr.mxu0 0.0
    %561 = vmatpush1.xpose.msra.mxu0 0.0
    %562 = vmatprep.subr.mxu0 0.0
    %563 = vmatpush1.xpose.msra.mxu0 0.0
    %564 = vmatprep.mubr.f32.mxu0 0.0
    %565 = vmatmul.mubr.f32.gmra.mrb[0].mxu0 %v496
    %v566 = vpop.f32.mrb[0].mxu0
    %v567 = vadd.f32 0.0, %v566
    %v568 = vpop.f32.mrb[0].mxu0
    %569 = vdwg.mxu0
    %571 = vrot.lane.b32.xlu0 %v227, 96
    %v572 = vpop.permute.xlu0 %571
    %v573 = vsel %vm125, %v227, 0
    %v575 = vsel %vm125, %v572, 0
    %577 = vmatprep.subr.mxu0 0.0
    %578 = vmatpush1.xpose.msra.mxu0 %v575
    %579 = vmatprep.subr.mxu0 0.0
    %580 = vmatpush1.xpose.msra.mxu0 0.0
    %581 = vmatprep.subr.mxu0 0.0
    %582 = vmatpush1.xpose.msra.mxu0 0.0
    %583 = vmatprep.subr.mxu0 0.0
    %584 = vmatpush1.xpose.msra.mxu0 0.0
    %585 = vmatprep.subr.mxu0 0.0
    %586 = vmatpush1.xpose.msra.mxu0 0.0
    %587 = vmatprep.subr.mxu0 0.0
    %588 = vmatpush1.xpose.msra.mxu0 0.0
    %589 = vmatprep.subr.mxu0 0.0
    %590 = vmatpush1.xpose.msra.mxu0 0.0
    %591 = vmatprep.subr.mxu0 0.0
    %592 = vmatpush1.xpose.msra.mxu0 0.0
    %593 = vmatprep.subr.mxu0 0.0
    %594 = vmatpush1.xpose.msra.mxu0 0.0
    %595 = vmatprep.subr.mxu0 0.0
    %596 = vmatpush1.xpose.msra.mxu0 0.0
    %597 = vmatprep.subr.mxu0 0.0
    %598 = vmatpush1.xpose.msra.mxu0 0.0
    %599 = vmatprep.subr.mxu0 0.0
    %600 = vmatpush1.xpose.msra.mxu0 0.0
    %601 = vmatprep.subr.mxu0 0.0
    %602 = vmatpush1.xpose.msra.mxu0 0.0
    %603 = vmatprep.subr.mxu0 0.0
    %604 = vmatpush1.xpose.msra.mxu0 0.0
    %605 = vmatprep.subr.mxu0 0.0
    %606 = vmatpush1.xpose.msra.mxu0 0.0
    %607 = vmatprep.subr.mxu0 0.0
    %608 = vmatpush1.xpose.msra.mxu0 0.0
    %609 = vmatprep.subr.mxu0 0.0
    %610 = vmatpush1.xpose.msra.mxu0 0.0
    %611 = vmatprep.subr.mxu0 0.0
    %612 = vmatpush1.xpose.msra.mxu0 0.0
    %613 = vmatprep.subr.mxu0 0.0
    %614 = vmatpush1.xpose.msra.mxu0 0.0
    %615 = vmatprep.subr.mxu0 0.0
    %616 = vmatpush1.xpose.msra.mxu0 0.0
    %617 = vmatprep.subr.mxu0 0.0
    %618 = vmatpush1.xpose.msra.mxu0 0.0
    %619 = vmatprep.subr.mxu0 0.0
    %620 = vmatpush1.xpose.msra.mxu0 0.0
    %621 = vmatprep.subr.mxu0 0.0
    %622 = vmatpush1.xpose.msra.mxu0 0.0
    %623 = vmatprep.subr.mxu0 0.0
    %624 = vmatpush1.xpose.msra.mxu0 0.0
    %625 = vmatprep.subr.mxu0 0.0
    %626 = vmatpush1.xpose.msra.mxu0 0.0
    %627 = vmatprep.subr.mxu0 0.0
    %628 = vmatpush1.xpose.msra.mxu0 0.0
    %629 = vmatprep.subr.mxu0 0.0
    %630 = vmatpush1.xpose.msra.mxu0 0.0
    %631 = vmatprep.subr.mxu0 0.0
    %632 = vmatpush1.xpose.msra.mxu0 0.0
    %633 = vmatprep.subr.mxu0 0.0
    %634 = vmatpush1.xpose.msra.mxu0 0.0
    %635 = vmatprep.subr.mxu0 0.0
    %636 = vmatpush1.xpose.msra.mxu0 0.0
    %637 = vmatprep.subr.mxu0 0.0
    %638 = vmatpush1.xpose.msra.mxu0 0.0
    %639 = vmatprep.subr.mxu0 0.0
    %640 = vmatpush1.xpose.msra.mxu0 0.0
    %641 = vmatprep.mubr.f32.mxu0 0.0
    %642 = vmatmul.mubr.f32.gmra.mrb[0].mxu0 %v573
    %v643 = vpop.f32.mrb[0].mxu0
    %v644 = vadd.f32 0.0, %v643
    %v645 = vpop.f32.mrb[0].mxu0
    %646 = vdwg.mxu0
    %648 = vrot.lane.b32.xlu0 %v232, 96
    %v649 = vpop.permute.xlu0 %648
    %v650 = vsel %vm125, %v232, 0
    %v652 = vsel %vm125, %v649, 0
    %654 = vmatprep.subr.mxu0 0.0
    %655 = vmatpush1.xpose.msra.mxu0 %v652
    %656 = vmatprep.subr.mxu0 0.0
    %657 = vmatpush1.xpose.msra.mxu0 0.0
    %658 = vmatprep.subr.mxu0 0.0
    %659 = vmatpush1.xpose.msra.mxu0 0.0
    %660 = vmatprep.subr.mxu0 0.0
    %661 = vmatpush1.xpose.msra.mxu0 0.0
    %662 = vmatprep.subr.mxu0 0.0
    %663 = vmatpush1.xpose.msra.mxu0 0.0
    %664 = vmatprep.subr.mxu0 0.0
    %665 = vmatpush1.xpose.msra.mxu0 0.0
    %666 = vmatprep.subr.mxu0 0.0
    %667 = vmatpush1.xpose.msra.mxu0 0.0
    %668 = vmatprep.subr.mxu0 0.0
    %669 = vmatpush1.xpose.msra.mxu0 0.0
    %670 = vmatprep.subr.mxu0 0.0
    %671 = vmatpush1.xpose.msra.mxu0 0.0
    %672 = vmatprep.subr.mxu0 0.0
    %673 = vmatpush1.xpose.msra.mxu0 0.0
    %674 = vmatprep.subr.mxu0 0.0
    %675 = vmatpush1.xpose.msra.mxu0 0.0
    %676 = vmatprep.subr.mxu0 0.0
    %677 = vmatpush1.xpose.msra.mxu0 0.0
    %678 = vmatprep.subr.mxu0 0.0
    %679 = vmatpush1.xpose.msra.mxu0 0.0
    %680 = vmatprep.subr.mxu0 0.0
    %681 = vmatpush1.xpose.msra.mxu0 0.0
    %682 = vmatprep.subr.mxu0 0.0
    %683 = vmatpush1.xpose.msra.mxu0 0.0
    %684 = vmatprep.subr.mxu0 0.0
    %685 = vmatpush1.xpose.msra.mxu0 0.0
    %686 = vmatprep.subr.mxu0 0.0
    %687 = vmatpush1.xpose.msra.mxu0 0.0
    %688 = vmatprep.subr.mxu0 0.0
    %689 = vmatpush1.xpose.msra.mxu0 0.0
    %690 = vmatprep.subr.mxu0 0.0
    %691 = vmatpush1.xpose.msra.mxu0 0.0
    %692 = vmatprep.subr.mxu0 0.0
    %693 = vmatpush1.xpose.msra.mxu0 0.0
    %694 = vmatprep.subr.mxu0 0.0
    %695 = vmatpush1.xpose.msra.mxu0 0.0
    %696 = vmatprep.subr.mxu0 0.0
    %697 = vmatpush1.xpose.msra.mxu0 0.0
    %698 = vmatprep.subr.mxu0 0.0
    %699 = vmatpush1.xpose.msra.mxu0 0.0
    %700 = vmatprep.subr.mxu0 0.0
    %701 = vmatpush1.xpose.msra.mxu0 0.0
    %702 = vmatprep.subr.mxu0 0.0
    %703 = vmatpush1.xpose.msra.mxu0 0.0
    %704 = vmatprep.subr.mxu0 0.0
    %705 = vmatpush1.xpose.msra.mxu0 0.0
    %706 = vmatprep.subr.mxu0 0.0
    %707 = vmatpush1.xpose.msra.mxu0 0.0
    %708 = vmatprep.subr.mxu0 0.0
    %709 = vmatpush1.xpose.msra.mxu0 0.0
    %710 = vmatprep.subr.mxu0 0.0
    %711 = vmatpush1.xpose.msra.mxu0 0.0
    %712 = vmatprep.subr.mxu0 0.0
    %713 = vmatpush1.xpose.msra.mxu0 0.0
    %714 = vmatprep.subr.mxu0 0.0
    %715 = vmatpush1.xpose.msra.mxu0 0.0
    %716 = vmatprep.subr.mxu0 0.0
    %717 = vmatpush1.xpose.msra.mxu0 0.0
    %718 = vmatprep.mubr.f32.mxu0 0.0
    %719 = vmatmul.mubr.f32.gmra.mrb[0].mxu0 %v650
    %v720 = vpop.f32.mrb[0].mxu0
    %v721 = vadd.f32 0.0, %v720
    %v722 = vpop.f32.mrb[0].mxu0
    %723 = vdwg.mxu0
    %725 = vrot.lane.b32.xlu0 %v237, 96
    %v726 = vpop.permute.xlu0 %725
    %v727 = vsel %vm125, %v237, 0
    %v729 = vsel %vm125, %v726, 0
    %731 = vmatprep.subr.mxu0 0.0
    %732 = vmatpush1.xpose.msra.mxu0 %v729
    %733 = vmatprep.subr.mxu0 0.0
    %734 = vmatpush1.xpose.msra.mxu0 0.0
    %735 = vmatprep.subr.mxu0 0.0
    %736 = vmatpush1.xpose.msra.mxu0 0.0
    %737 = vmatprep.subr.mxu0 0.0
    %738 = vmatpush1.xpose.msra.mxu0 0.0
    %739 = vmatprep.subr.mxu0 0.0
    %740 = vmatpush1.xpose.msra.mxu0 0.0
    %741 = vmatprep.subr.mxu0 0.0
    %742 = vmatpush1.xpose.msra.mxu0 0.0
    %743 = vmatprep.subr.mxu0 0.0
    %744 = vmatpush1.xpose.msra.mxu0 0.0
    %745 = vmatprep.subr.mxu0 0.0
    %746 = vmatpush1.xpose.msra.mxu0 0.0
    %747 = vmatprep.subr.mxu0 0.0
    %748 = vmatpush1.xpose.msra.mxu0 0.0
    %749 = vmatprep.subr.mxu0 0.0
    %750 = vmatpush1.xpose.msra.mxu0 0.0
    %751 = vmatprep.subr.mxu0 0.0
    %752 = vmatpush1.xpose.msra.mxu0 0.0
    %753 = vmatprep.subr.mxu0 0.0
    %754 = vmatpush1.xpose.msra.mxu0 0.0
    %755 = vmatprep.subr.mxu0 0.0
    %756 = vmatpush1.xpose.msra.mxu0 0.0
    %757 = vmatprep.subr.mxu0 0.0
    %758 = vmatpush1.xpose.msra.mxu0 0.0
    %759 = vmatprep.subr.mxu0 0.0
    %760 = vmatpush1.xpose.msra.mxu0 0.0
    %761 = vmatprep.subr.mxu0 0.0
    %762 = vmatpush1.xpose.msra.mxu0 0.0
    %763 = vmatprep.subr.mxu0 0.0
    %764 = vmatpush1.xpose.msra.mxu0 0.0
    %765 = vmatprep.subr.mxu0 0.0
    %766 = vmatpush1.xpose.msra.mxu0 0.0
    %767 = vmatprep.subr.mxu0 0.0
    %768 = vmatpush1.xpose.msra.mxu0 0.0
    %769 = vmatprep.subr.mxu0 0.0
    %770 = vmatpush1.xpose.msra.mxu0 0.0
    %771 = vmatprep.subr.mxu0 0.0
    %772 = vmatpush1.xpose.msra.mxu0 0.0
    %773 = vmatprep.subr.mxu0 0.0
    %774 = vmatpush1.xpose.msra.mxu0 0.0
    %775 = vmatprep.subr.mxu0 0.0
    %776 = vmatpush1.xpose.msra.mxu0 0.0
    %777 = vmatprep.subr.mxu0 0.0
    %778 = vmatpush1.xpose.msra.mxu0 0.0
    %779 = vmatprep.subr.mxu0 0.0
    %780 = vmatpush1.xpose.msra.mxu0 0.0
    %781 = vmatprep.subr.mxu0 0.0
    %782 = vmatpush1.xpose.msra.mxu0 0.0
    %783 = vmatprep.subr.mxu0 0.0
    %784 = vmatpush1.xpose.msra.mxu0 0.0
    %785 = vmatprep.subr.mxu0 0.0
    %786 = vmatpush1.xpose.msra.mxu0 0.0
    %787 = vmatprep.subr.mxu0 0.0
    %788 = vmatpush1.xpose.msra.mxu0 0.0
    %789 = vmatprep.subr.mxu0 0.0
    %790 = vmatpush1.xpose.msra.mxu0 0.0
    %791 = vmatprep.subr.mxu0 0.0
    %792 = vmatpush1.xpose.msra.mxu0 0.0
    %793 = vmatprep.subr.mxu0 0.0
    %794 = vmatpush1.xpose.msra.mxu0 0.0
    %795 = vmatprep.mubr.f32.mxu0 0.0
    %796 = vmatmul.mubr.f32.gmra.mrb[0].mxu0 %v727
    %v797 = vpop.f32.mrb[0].mxu0
    %v798 = vadd.f32 0.0, %v797
    %v799 = vpop.f32.mrb[0].mxu0
    %800 = vdwg.mxu0
    %802 = vrot.lane.b32.xlu0 %v242, 96
    %v803 = vpop.permute.xlu0 %802
    %v804 = vsel %vm125, %v242, 0
    %v806 = vsel %vm125, %v803, 0
    %808 = vmatprep.subr.mxu0 0.0
    %809 = vmatpush1.xpose.msra.mxu0 %v806
    %810 = vmatprep.subr.mxu0 0.0
    %811 = vmatpush1.xpose.msra.mxu0 0.0
    %812 = vmatprep.subr.mxu0 0.0
    %813 = vmatpush1.xpose.msra.mxu0 0.0
    %814 = vmatprep.subr.mxu0 0.0
    %815 = vmatpush1.xpose.msra.mxu0 0.0
    %816 = vmatprep.subr.mxu0 0.0
    %817 = vmatpush1.xpose.msra.mxu0 0.0
    %818 = vmatprep.subr.mxu0 0.0
    %819 = vmatpush1.xpose.msra.mxu0 0.0
    %820 = vmatprep.subr.mxu0 0.0
    %821 = vmatpush1.xpose.msra.mxu0 0.0
    %822 = vmatprep.subr.mxu0 0.0
    %823 = vmatpush1.xpose.msra.mxu0 0.0
    %824 = vmatprep.subr.mxu0 0.0
    %825 = vmatpush1.xpose.msra.mxu0 0.0
    %826 = vmatprep.subr.mxu0 0.0
    %827 = vmatpush1.xpose.msra.mxu0 0.0
    %828 = vmatprep.subr.mxu0 0.0
    %829 = vmatpush1.xpose.msra.mxu0 0.0
    %830 = vmatprep.subr.mxu0 0.0
    %831 = vmatpush1.xpose.msra.mxu0 0.0
    %832 = vmatprep.subr.mxu0 0.0
    %833 = vmatpush1.xpose.msra.mxu0 0.0
    %834 = vmatprep.subr.mxu0 0.0
    %835 = vmatpush1.xpose.msra.mxu0 0.0
    %836 = vmatprep.subr.mxu0 0.0
    %837 = vmatpush1.xpose.msra.mxu0 0.0
    %838 = vmatprep.subr.mxu0 0.0
    %839 = vmatpush1.xpose.msra.mxu0 0.0
    %840 = vmatprep.subr.mxu0 0.0
    %841 = vmatpush1.xpose.msra.mxu0 0.0
    %842 = vmatprep.subr.mxu0 0.0
    %843 = vmatpush1.xpose.msra.mxu0 0.0
    %844 = vmatprep.subr.mxu0 0.0
    %845 = vmatpush1.xpose.msra.mxu0 0.0
    %846 = vmatprep.subr.mxu0 0.0
    %847 = vmatpush1.xpose.msra.mxu0 0.0
    %848 = vmatprep.subr.mxu0 0.0
    %849 = vmatpush1.xpose.msra.mxu0 0.0
    %850 = vmatprep.subr.mxu0 0.0
    %851 = vmatpush1.xpose.msra.mxu0 0.0
    %852 = vmatprep.subr.mxu0 0.0
    %853 = vmatpush1.xpose.msra.mxu0 0.0
    %854 = vmatprep.subr.mxu0 0.0
    %855 = vmatpush1.xpose.msra.mxu0 0.0
    %856 = vmatprep.subr.mxu0 0.0
    %857 = vmatpush1.xpose.msra.mxu0 0.0
    %858 = vmatprep.subr.mxu0 0.0
    %859 = vmatpush1.xpose.msra.mxu0 0.0
    %860 = vmatprep.subr.mxu0 0.0
    %861 = vmatpush1.xpose.msra.mxu0 0.0
    %862 = vmatprep.subr.mxu0 0.0
    %863 = vmatpush1.xpose.msra.mxu0 0.0
    %864 = vmatprep.subr.mxu0 0.0
    %865 = vmatpush1.xpose.msra.mxu0 0.0
    %866 = vmatprep.subr.mxu0 0.0
    %867 = vmatpush1.xpose.msra.mxu0 0.0
    %868 = vmatprep.subr.mxu0 0.0
    %869 = vmatpush1.xpose.msra.mxu0 0.0
    %870 = vmatprep.subr.mxu0 0.0
    %871 = vmatpush1.xpose.msra.mxu0 0.0
    %872 = vmatprep.mubr.f32.mxu0 0.0
    %873 = vmatmul.mubr.f32.gmra.mrb[0].mxu0 %v804
    %v874 = vpop.f32.mrb[0].mxu0
    %v875 = vadd.f32 0.0, %v874
    %v876 = vpop.f32.mrb[0].mxu0
    %877 = vdwg.mxu0
    %879 = vrot.lane.b32.xlu0 %v247, 96
    %v880 = vpop.permute.xlu0 %879
    %v881 = vsel %vm125, %v247, 0
    %v883 = vsel %vm125, %v880, 0
    %885 = vmatprep.subr.mxu0 0.0
    %886 = vmatpush1.xpose.msra.mxu0 %v883
    %887 = vmatprep.subr.mxu0 0.0
    %888 = vmatpush1.xpose.msra.mxu0 0.0
    %889 = vmatprep.subr.mxu0 0.0
    %890 = vmatpush1.xpose.msra.mxu0 0.0
    %891 = vmatprep.subr.mxu0 0.0
    %892 = vmatpush1.xpose.msra.mxu0 0.0
    %893 = vmatprep.subr.mxu0 0.0
    %894 = vmatpush1.xpose.msra.mxu0 0.0
    %895 = vmatprep.subr.mxu0 0.0
    %896 = vmatpush1.xpose.msra.mxu0 0.0
    %897 = vmatprep.subr.mxu0 0.0
    %898 = vmatpush1.xpose.msra.mxu0 0.0
    %899 = vmatprep.subr.mxu0 0.0
    %900 = vmatpush1.xpose.msra.mxu0 0.0
    %901 = vmatprep.subr.mxu0 0.0
    %902 = vmatpush1.xpose.msra.mxu0 0.0
    %903 = vmatprep.subr.mxu0 0.0
    %904 = vmatpush1.xpose.msra.mxu0 0.0
    %905 = vmatprep.subr.mxu0 0.0
    %906 = vmatpush1.xpose.msra.mxu0 0.0
    %907 = vmatprep.subr.mxu0 0.0
    %908 = vmatpush1.xpose.msra.mxu0 0.0
    %909 = vmatprep.subr.mxu0 0.0
    %910 = vmatpush1.xpose.msra.mxu0 0.0
    %911 = vmatprep.subr.mxu0 0.0
    %912 = vmatpush1.xpose.msra.mxu0 0.0
    %913 = vmatprep.subr.mxu0 0.0
    %914 = vmatpush1.xpose.msra.mxu0 0.0
    %915 = vmatprep.subr.mxu0 0.0
    %916 = vmatpush1.xpose.msra.mxu0 0.0
    %917 = vmatprep.subr.mxu0 0.0
    %918 = vmatpush1.xpose.msra.mxu0 0.0
    %919 = vmatprep.subr.mxu0 0.0
    %920 = vmatpush1.xpose.msra.mxu0 0.0
    %921 = vmatprep.subr.mxu0 0.0
    %922 = vmatpush1.xpose.msra.mxu0 0.0
    %923 = vmatprep.subr.mxu0 0.0
    %924 = vmatpush1.xpose.msra.mxu0 0.0
    %925 = vmatprep.subr.mxu0 0.0
    %926 = vmatpush1.xpose.msra.mxu0 0.0
    %927 = vmatprep.subr.mxu0 0.0
    %928 = vmatpush1.xpose.msra.mxu0 0.0
    %929 = vmatprep.subr.mxu0 0.0
    %930 = vmatpush1.xpose.msra.mxu0 0.0
    %931 = vmatprep.subr.mxu0 0.0
    %932 = vmatpush1.xpose.msra.mxu0 0.0
    %933 = vmatprep.subr.mxu0 0.0
    %934 = vmatpush1.xpose.msra.mxu0 0.0
    %935 = vmatprep.subr.mxu0 0.0
    %936 = vmatpush1.xpose.msra.mxu0 0.0
    %937 = vmatprep.subr.mxu0 0.0
    %938 = vmatpush1.xpose.msra.mxu0 0.0
    %939 = vmatprep.subr.mxu0 0.0
    %940 = vmatpush1.xpose.msra.mxu0 0.0
    %941 = vmatprep.subr.mxu0 0.0
    %942 = vmatpush1.xpose.msra.mxu0 0.0
    %943 = vmatprep.subr.mxu0 0.0
    %944 = vmatpush1.xpose.msra.mxu0 0.0
    %945 = vmatprep.subr.mxu0 0.0
    %946 = vmatpush1.xpose.msra.mxu0 0.0
    %947 = vmatprep.subr.mxu0 0.0
    %948 = vmatpush1.xpose.msra.mxu0 0.0
    %949 = vmatprep.mubr.f32.mxu0 0.0
    %950 = vmatmul.mubr.f32.gmra.mrb[0].mxu0 %v881
    %v951 = vpop.f32.mrb[0].mxu0
    %v952 = vadd.f32 0.0, %v951
    %v953 = vpop.f32.mrb[0].mxu0
    %954 = vdwg.mxu0
    %956 = vrot.lane.b32.xlu0 %v252, 96
    %v957 = vpop.permute.xlu0 %956
    %v958 = vsel %vm125, %v252, 0
    %v960 = vsel %vm125, %v957, 0
    %962 = vmatprep.subr.mxu0 0.0
    %963 = vmatpush1.xpose.msra.mxu0 %v960
    %964 = vmatprep.subr.mxu0 0.0
    %965 = vmatpush1.xpose.msra.mxu0 0.0
    %966 = vmatprep.subr.mxu0 0.0
    %967 = vmatpush1.xpose.msra.mxu0 0.0
    %968 = vmatprep.subr.mxu0 0.0
    %969 = vmatpush1.xpose.msra.mxu0 0.0
    %970 = vmatprep.subr.mxu0 0.0
    %971 = vmatpush1.xpose.msra.mxu0 0.0
    %972 = vmatprep.subr.mxu0 0.0
    %973 = vmatpush1.xpose.msra.mxu0 0.0
    %974 = vmatprep.subr.mxu0 0.0
    %975 = vmatpush1.xpose.msra.mxu0 0.0
    %976 = vmatprep.subr.mxu0 0.0
    %977 = vmatpush1.xpose.msra.mxu0 0.0
    %978 = vmatprep.subr.mxu0 0.0
    %979 = vmatpush1.xpose.msra.mxu0 0.0
    %980 = vmatprep.subr.mxu0 0.0
    %981 = vmatpush1.xpose.msra.mxu0 0.0
    %982 = vmatprep.subr.mxu0 0.0
    %983 = vmatpush1.xpose.msra.mxu0 0.0
    %984 = vmatprep.subr.mxu0 0.0
    %985 = vmatpush1.xpose.msra.mxu0 0.0
    %986 = vmatprep.subr.mxu0 0.0
    %987 = vmatpush1.xpose.msra.mxu0 0.0
    %988 = vmatprep.subr.mxu0 0.0
    %989 = vmatpush1.xpose.msra.mxu0 0.0
    %990 = vmatprep.subr.mxu0 0.0
    %991 = vmatpush1.xpose.msra.mxu0 0.0
    %992 = vmatprep.subr.mxu0 0.0
    %993 = vmatpush1.xpose.msra.mxu0 0.0
    %994 = vmatprep.subr.mxu0 0.0
    %995 = vmatpush1.xpose.msra.mxu0 0.0
    %996 = vmatprep.subr.mxu0 0.0
    %997 = vmatpush1.xpose.msra.mxu0 0.0
    %998 = vmatprep.subr.mxu0 0.0
    %999 = vmatpush1.xpose.msra.mxu0 0.0
    %1000 = vmatprep.subr.mxu0 0.0
    %1001 = vmatpush1.xpose.msra.mxu0 0.0
    %1002 = vmatprep.subr.mxu0 0.0
    %1003 = vmatpush1.xpose.msra.mxu0 0.0
    %1004 = vmatprep.subr.mxu0 0.0
    %1005 = vmatpush1.xpose.msra.mxu0 0.0
    %1006 = vmatprep.subr.mxu0 0.0
    %1007 = vmatpush1.xpose.msra.mxu0 0.0
    %1008 = vmatprep.subr.mxu0 0.0
    %1009 = vmatpush1.xpose.msra.mxu0 0.0
    %1010 = vmatprep.subr.mxu0 0.0
    %1011 = vmatpush1.xpose.msra.mxu0 0.0
    %1012 = vmatprep.subr.mxu0 0.0
    %1013 = vmatpush1.xpose.msra.mxu0 0.0
    %1014 = vmatprep.subr.mxu0 0.0
    %1015 = vmatpush1.xpose.msra.mxu0 0.0
    %1016 = vmatprep.subr.mxu0 0.0
    %1017 = vmatpush1.xpose.msra.mxu0 0.0
    %1018 = vmatprep.subr.mxu0 0.0
    %1019 = vmatpush1.xpose.msra.mxu0 0.0
    %1020 = vmatprep.subr.mxu0 0.0
    %1021 = vmatpush1.xpose.msra.mxu0 0.0
    %1022 = vmatprep.subr.mxu0 0.0
    %1023 = vmatpush1.xpose.msra.mxu0 0.0
    %1024 = vmatprep.subr.mxu0 0.0
    %1025 = vmatpush1.xpose.msra.mxu0 0.0
    %1026 = vmatprep.mubr.f32.mxu0 0.0
    %1027 = vmatmul.mubr.f32.gmra.mrb[0].mxu0 %v958
    %v1028 = vpop.f32.mrb[0].mxu0
    %v1029 = vadd.f32 0.0, %v1028
    %v1030 = vpop.f32.mrb[0].mxu0
    %1031 = vdwg.mxu0
    %vm1032 = vcmask 64512
    %v1033 = vsel %vm1032, %v490, -inf
    %1034 = vmax.xlane.f32.xlu0 %v1033
    %v1035 = vpop.xlane.xlu0 %1034
    %v1036 = vsel %vm1032, %v567, -inf
    %1037 = vmax.xlane.f32.xlu0 %v1036
    %v1038 = vpop.xlane.xlu0 %1037
    %v1039 = vsel %vm1032, %v644, -inf
    %1040 = vmax.xlane.f32.xlu0 %v1039
    %v1041 = vpop.xlane.xlu0 %1040
    %v1042 = vsel %vm1032, %v721, -inf
    %1043 = vmax.xlane.f32.xlu0 %v1042
    %v1044 = vpop.xlane.xlu0 %1043
    %v1045 = vsel %vm1032, %v798, -inf
    %1046 = vmax.xlane.f32.xlu0 %v1045
    %v1047 = vpop.xlane.xlu0 %1046
    %v1048 = vsel %vm1032, %v875, -inf
    %1049 = vmax.xlane.f32.xlu0 %v1048
    %v1050 = vpop.xlane.xlu0 %1049
    %v1051 = vsel %vm1032, %v952, -inf
    %1052 = vmax.xlane.f32.xlu0 %v1051
    %v1053 = vpop.xlane.xlu0 %1052
    %v1054 = vsel %vm1032, %v1029, -inf
    %1055 = vmax.xlane.f32.xlu0 %v1054
    %v1056 = vpop.xlane.xlu0 %1055
    %v1057 = vsub.f32 %v490, %v1035
    %v1058 = vsub.f32 %v567, %v1038
    %v1059 = vsub.f32 %v644, %v1041
    %v1060 = vsub.f32 %v721, %v1044
    %v1061 = vsub.f32 %v798, %v1047
    %v1062 = vsub.f32 %v875, %v1050
    %v1063 = vsub.f32 %v952, %v1053
    %v1064 = vsub.f32 %v1029, %v1056
    %v1065 = vmul.f32 %v1057, 1.442695
    %v1066 = vpow.pop %v1065
    %v1067 = vmul.f32 %v1058, 1.442695
    %v1068 = vpow.pop %v1067
    %v1069 = vmul.f32 %v1059, 1.442695
    %v1070 = vpow.pop %v1069
    %v1071 = vmul.f32 %v1060, 1.442695
    %v1072 = vpow.pop %v1071
    %v1073 = vmul.f32 %v1061, 1.442695
    %v1074 = vpow.pop %v1073
    %v1075 = vmul.f32 %v1062, 1.442695
    %v1076 = vpow.pop %v1075
    %v1077 = vmul.f32 %v1063, 1.442695
    %v1078 = vpow.pop %v1077
    %v1079 = vmul.f32 %v1064, 1.442695
    %v1080 = vpow.pop %v1079
    %v1081 = vsel %vm1032, %v1066, 0.0
    %1082 = vadd.xlane.f32.xlu0 %v1081
    %v1083 = vpop.xlane.xlu0 %1082
    %v1084 = vsel %vm1032, %v1068, 0.0
    %1085 = vadd.xlane.f32.xlu0 %v1084
    %v1086 = vpop.xlane.xlu0 %1085
    %v1087 = vsel %vm1032, %v1070, 0.0
    %1088 = vadd.xlane.f32.xlu0 %v1087
    %v1089 = vpop.xlane.xlu0 %1088
    %v1090 = vsel %vm1032, %v1072, 0.0
    %1091 = vadd.xlane.f32.xlu0 %v1090
    %v1092 = vpop.xlane.xlu0 %1091
    %v1093 = vsel %vm1032, %v1074, 0.0
    %1094 = vadd.xlane.f32.xlu0 %v1093
    %v1095 = vpop.xlane.xlu0 %1094
    %v1096 = vsel %vm1032, %v1076, 0.0
    %1097 = vadd.xlane.f32.xlu0 %v1096
    %v1098 = vpop.xlane.xlu0 %1097
    %v1099 = vsel %vm1032, %v1078, 0.0
    %1100 = vadd.xlane.f32.xlu0 %v1099
    %v1101 = vpop.xlane.xlu0 %1100
    %v1102 = vsel %vm1032, %v1080, 0.0
    %1103 = vadd.xlane.f32.xlu0 %v1102
    %v1104 = vpop.xlane.xlu0 %1103
    %v1105 = vrcp.pop %v1083
    %v1106 = vmul.f32 0.17677669, %v1105
    %v1107 = vrcp.pop %v1086
    %v1108 = vmul.f32 0.17677669, %v1107
    %v1109 = vrcp.pop %v1089
    %v1110 = vmul.f32 0.17677669, %v1109
    %v1111 = vrcp.pop %v1092
    %v1112 = vmul.f32 0.17677669, %v1111
    %v1113 = vrcp.pop %v1095
    %v1114 = vmul.f32 0.17677669, %v1113
    %v1115 = vrcp.pop %v1098
    %v1116 = vmul.f32 0.17677669, %v1115
    %v1117 = vrcp.pop %v1101
    %v1118 = vmul.f32 0.17677669, %v1117
    %v1119 = vrcp.pop %v1104
    %v1120 = vmul.f32 0.17677669, %v1119
    %v1121 = vmul.f32 %v1066, %v1106
    %v1122 = vmul.f32 %v1068, %v1108
    %v1123 = vmul.f32 %v1070, %v1110
    %v1124 = vmul.f32 %v1072, %v1112
    %v1125 = vmul.f32 %v1074, %v1114
    %v1126 = vmul.f32 %v1076, %v1116
    %v1127 = vmul.f32 %v1078, %v1118
    %v1128 = vmul.f32 %v1080, %v1120
    %1129 = vrot.lane.b32.xlu0 %v217, 64
    %v1130 = vpop.permute.xlu0 %1129
    %v1133 = vsel %vm1032, %v1121, 0
    %1135 = vmatprep.subr.mxu0 0.0
    %1136 = vmatpush1.msra.mxu0 %v1130
    %1137 = vmatprep.subr.mxu0 0.0
    %1138 = vmatpush1.msra.mxu0 0.0
    %1139 = vmatprep.subr.mxu0 0.0
    %1140 = vmatpush1.msra.mxu0 0.0
    %1141 = vmatprep.subr.mxu0 0.0
    %1142 = vmatpush1.msra.mxu0 0.0
    %1143 = vmatprep.subr.mxu0 0.0
    %1144 = vmatpush1.msra.mxu0 0.0
    %1145 = vmatprep.subr.mxu0 0.0
    %1146 = vmatpush1.msra.mxu0 0.0
    %1147 = vmatprep.subr.mxu0 0.0
    %1148 = vmatpush1.msra.mxu0 0.0
    %1149 = vmatprep.subr.mxu0 0.0
    %1150 = vmatpush1.msra.mxu0 0.0
    %1151 = vmatprep.subr.mxu0 0.0
    %1152 = vmatpush1.msra.mxu0 0.0
    %1153 = vmatprep.subr.mxu0 0.0
    %1154 = vmatpush1.msra.mxu0 0.0
    %1155 = vmatprep.subr.mxu0 0.0
    %1156 = vmatpush1.msra.mxu0 0.0
    %1157 = vmatprep.subr.mxu0 0.0
    %1158 = vmatpush1.msra.mxu0 0.0
    %1159 = vmatprep.subr.mxu0 0.0
    %1160 = vmatpush1.msra.mxu0 0.0
    %1161 = vmatprep.subr.mxu0 0.0
    %1162 = vmatpush1.msra.mxu0 0.0
    %1163 = vmatprep.subr.mxu0 0.0
    %1164 = vmatpush1.msra.mxu0 0.0
    %1165 = vmatprep.subr.mxu0 0.0
    %1166 = vmatpush1.msra.mxu0 0.0
    %1167 = vmatprep.subr.mxu0 0.0
    %1168 = vmatpush1.msra.mxu0 0.0
    %1169 = vmatprep.subr.mxu0 0.0
    %1170 = vmatpush1.msra.mxu0 0.0
    %1171 = vmatprep.subr.mxu0 0.0
    %1172 = vmatpush1.msra.mxu0 0.0
    %1173 = vmatprep.subr.mxu0 0.0
    %1174 = vmatpush1.msra.mxu0 0.0
    %1175 = vmatprep.subr.mxu0 0.0
    %1176 = vmatpush1.msra.mxu0 0.0
    %1177 = vmatprep.subr.mxu0 0.0
    %1178 = vmatpush1.msra.mxu0 0.0
    %1179 = vmatprep.subr.mxu0 0.0
    %1180 = vmatpush1.msra.mxu0 0.0
    %1181 = vmatprep.subr.mxu0 0.0
    %1182 = vmatpush1.msra.mxu0 0.0
    %1183 = vmatprep.subr.mxu0 0.0
    %1184 = vmatpush1.msra.mxu0 0.0
    %1185 = vmatprep.subr.mxu0 0.0
    %1186 = vmatpush1.msra.mxu0 0.0
    %1187 = vmatprep.subr.mxu0 0.0
    %1188 = vmatpush1.msra.mxu0 0.0
    %1189 = vmatprep.subr.mxu0 0.0
    %1190 = vmatpush1.msra.mxu0 0.0
    %1191 = vmatprep.subr.mxu0 0.0
    %1192 = vmatpush1.msra.mxu0 0.0
    %1193 = vmatprep.subr.mxu0 0.0
    %1194 = vmatpush1.msra.mxu0 0.0
    %1195 = vmatprep.subr.mxu0 0.0
    %1196 = vmatpush1.msra.mxu0 0.0
    %1197 = vmatprep.subr.mxu0 0.0
    %1198 = vmatpush1.msra.mxu0 0.0
    %1199 = vmatprep.mubr.f32.mxu0 0.0
    %1200 = vmatmul.mubr.f32.gmra.mrb[0].mxu0 %v1133
    %v1201 = vpop.f32.mrb[0].mxu0
    %v1202 = vadd.f32 0.0, %v1201
    %v1203 = vpop.f32.mrb[0].mxu0
    %1204 = vdwg.mxu0
    %1205 = vrot.lane.b32.xlu0 %v222, 64
    %v1206 = vpop.permute.xlu0 %1205
    %v1209 = vsel %vm1032, %v1122, 0
    %1211 = vmatprep.subr.mxu0 0.0
    %1212 = vmatpush1.msra.mxu0 %v1206
    %1213 = vmatprep.subr.mxu0 0.0
    %1214 = vmatpush1.msra.mxu0 0.0
    %1215 = vmatprep.subr.mxu0 0.0
    %1216 = vmatpush1.msra.mxu0 0.0
    %1217 = vmatprep.subr.mxu0 0.0
    %1218 = vmatpush1.msra.mxu0 0.0
    %1219 = vmatprep.subr.mxu0 0.0
    %1220 = vmatpush1.msra.mxu0 0.0
    %1221 = vmatprep.subr.mxu0 0.0
    %1222 = vmatpush1.msra.mxu0 0.0
    %1223 = vmatprep.subr.mxu0 0.0
    %1224 = vmatpush1.msra.mxu0 0.0
    %1225 = vmatprep.subr.mxu0 0.0
    %1226 = vmatpush1.msra.mxu0 0.0
    %1227 = vmatprep.subr.mxu0 0.0
    %1228 = vmatpush1.msra.mxu0 0.0
    %1229 = vmatprep.subr.mxu0 0.0
    %1230 = vmatpush1.msra.mxu0 0.0
    %1231 = vmatprep.subr.mxu0 0.0
    %1232 = vmatpush1.msra.mxu0 0.0
    %1233 = vmatprep.subr.mxu0 0.0
    %1234 = vmatpush1.msra.mxu0 0.0
    %1235 = vmatprep.subr.mxu0 0.0
    %1236 = vmatpush1.msra.mxu0 0.0
    %1237 = vmatprep.subr.mxu0 0.0
    %1238 = vmatpush1.msra.mxu0 0.0
    %1239 = vmatprep.subr.mxu0 0.0
    %1240 = vmatpush1.msra.mxu0 0.0
    %1241 = vmatprep.subr.mxu0 0.0
    %1242 = vmatpush1.msra.mxu0 0.0
    %1243 = vmatprep.subr.mxu0 0.0
    %1244 = vmatpush1.msra.mxu0 0.0
    %1245 = vmatprep.subr.mxu0 0.0
    %1246 = vmatpush1.msra.mxu0 0.0
    %1247 = vmatprep.subr.mxu0 0.0
    %1248 = vmatpush1.msra.mxu0 0.0
    %1249 = vmatprep.subr.mxu0 0.0
    %1250 = vmatpush1.msra.mxu0 0.0
    %1251 = vmatprep.subr.mxu0 0.0
    %1252 = vmatpush1.msra.mxu0 0.0
    %1253 = vmatprep.subr.mxu0 0.0
    %1254 = vmatpush1.msra.mxu0 0.0
    %1255 = vmatprep.subr.mxu0 0.0
    %1256 = vmatpush1.msra.mxu0 0.0
    %1257 = vmatprep.subr.mxu0 0.0
    %1258 = vmatpush1.msra.mxu0 0.0
    %1259 = vmatprep.subr.mxu0 0.0
    %1260 = vmatpush1.msra.mxu0 0.0
    %1261 = vmatprep.subr.mxu0 0.0
    %1262 = vmatpush1.msra.mxu0 0.0
    %1263 = vmatprep.subr.mxu0 0.0
    %1264 = vmatpush1.msra.mxu0 0.0
    %1265 = vmatprep.subr.mxu0 0.0
    %1266 = vmatpush1.msra.mxu0 0.0
    %1267 = vmatprep.subr.mxu0 0.0
    %1268 = vmatpush1.msra.mxu0 0.0
    %1269 = vmatprep.subr.mxu0 0.0
    %1270 = vmatpush1.msra.mxu0 0.0
    %1271 = vmatprep.subr.mxu0 0.0
    %1272 = vmatpush1.msra.mxu0 0.0
    %1273 = vmatprep.subr.mxu0 0.0
    %1274 = vmatpush1.msra.mxu0 0.0
    %1275 = vmatprep.mubr.f32.mxu0 0.0
    %1276 = vmatmul.mubr.f32.gmra.mrb[0].mxu0 %v1209
    %v1277 = vpop.f32.mrb[0].mxu0
    %v1278 = vadd.f32 0.0, %v1277
    %v1279 = vpop.f32.mrb[0].mxu0
    %1280 = vdwg.mxu0
    %1281 = vrot.lane.b32.xlu0 %v227, 64
    %v1282 = vpop.permute.xlu0 %1281
    %v1285 = vsel %vm1032, %v1123, 0
    %1287 = vmatprep.subr.mxu0 0.0
    %1288 = vmatpush1.msra.mxu0 %v1282
    %1289 = vmatprep.subr.mxu0 0.0
    %1290 = vmatpush1.msra.mxu0 0.0
    %1291 = vmatprep.subr.mxu0 0.0
    %1292 = vmatpush1.msra.mxu0 0.0
    %1293 = vmatprep.subr.mxu0 0.0
    %1294 = vmatpush1.msra.mxu0 0.0
    %1295 = vmatprep.subr.mxu0 0.0
    %1296 = vmatpush1.msra.mxu0 0.0
    %1297 = vmatprep.subr.mxu0 0.0
    %1298 = vmatpush1.msra.mxu0 0.0
    %1299 = vmatprep.subr.mxu0 0.0
    %1300 = vmatpush1.msra.mxu0 0.0
    %1301 = vmatprep.subr.mxu0 0.0
    %1302 = vmatpush1.msra.mxu0 0.0
    %1303 = vmatprep.subr.mxu0 0.0
    %1304 = vmatpush1.msra.mxu0 0.0
    %1305 = vmatprep.subr.mxu0 0.0
    %1306 = vmatpush1.msra.mxu0 0.0
    %1307 = vmatprep.subr.mxu0 0.0
    %1308 = vmatpush1.msra.mxu0 0.0
    %1309 = vmatprep.subr.mxu0 0.0
    %1310 = vmatpush1.msra.mxu0 0.0
    %1311 = vmatprep.subr.mxu0 0.0
    %1312 = vmatpush1.msra.mxu0 0.0
    %1313 = vmatprep.subr.mxu0 0.0
    %1314 = vmatpush1.msra.mxu0 0.0
    %1315 = vmatprep.subr.mxu0 0.0
    %1316 = vmatpush1.msra.mxu0 0.0
    %1317 = vmatprep.subr.mxu0 0.0
    %1318 = vmatpush1.msra.mxu0 0.0
    %1319 = vmatprep.subr.mxu0 0.0
    %1320 = vmatpush1.msra.mxu0 0.0
    %1321 = vmatprep.subr.mxu0 0.0
    %1322 = vmatpush1.msra.mxu0 0.0
    %1323 = vmatprep.subr.mxu0 0.0
    %1324 = vmatpush1.msra.mxu0 0.0
    %1325 = vmatprep.subr.mxu0 0.0
    %1326 = vmatpush1.msra.mxu0 0.0
    %1327 = vmatprep.subr.mxu0 0.0
    %1328 = vmatpush1.msra.mxu0 0.0
    %1329 = vmatprep.subr.mxu0 0.0
    %1330 = vmatpush1.msra.mxu0 0.0
    %1331 = vmatprep.subr.mxu0 0.0
    %1332 = vmatpush1.msra.mxu0 0.0
    %1333 = vmatprep.subr.mxu0 0.0
    %1334 = vmatpush1.msra.mxu0 0.0
    %1335 = vmatprep.subr.mxu0 0.0
    %1336 = vmatpush1.msra.mxu0 0.0
    %1337 = vmatprep.subr.mxu0 0.0
    %1338 = vmatpush1.msra.mxu0 0.0
    %1339 = vmatprep.subr.mxu0 0.0
    %1340 = vmatpush1.msra.mxu0 0.0
    %1341 = vmatprep.subr.mxu0 0.0
    %1342 = vmatpush1.msra.mxu0 0.0
    %1343 = vmatprep.subr.mxu0 0.0
    %1344 = vmatpush1.msra.mxu0 0.0
    %1345 = vmatprep.subr.mxu0 0.0
    %1346 = vmatpush1.msra.mxu0 0.0
    %1347 = vmatprep.subr.mxu0 0.0
    %1348 = vmatpush1.msra.mxu0 0.0
    %1349 = vmatprep.subr.mxu0 0.0
    %1350 = vmatpush1.msra.mxu0 0.0
    %1351 = vmatprep.mubr.f32.mxu0 0.0
    %1352 = vmatmul.mubr.f32.gmra.mrb[0].mxu0 %v1285
    %v1353 = vpop.f32.mrb[0].mxu0
    %v1354 = vadd.f32 0.0, %v1353
    %v1355 = vpop.f32.mrb[0].mxu0
    %1356 = vdwg.mxu0
    %1357 = vrot.lane.b32.xlu0 %v232, 64
    %v1358 = vpop.permute.xlu0 %1357
    %v1361 = vsel %vm1032, %v1124, 0
    %1363 = vmatprep.subr.mxu0 0.0
    %1364 = vmatpush1.msra.mxu0 %v1358
    %1365 = vmatprep.subr.mxu0 0.0
    %1366 = vmatpush1.msra.mxu0 0.0
    %1367 = vmatprep.subr.mxu0 0.0
    %1368 = vmatpush1.msra.mxu0 0.0
    %1369 = vmatprep.subr.mxu0 0.0
    %1370 = vmatpush1.msra.mxu0 0.0
    %1371 = vmatprep.subr.mxu0 0.0
    %1372 = vmatpush1.msra.mxu0 0.0
    %1373 = vmatprep.subr.mxu0 0.0
    %1374 = vmatpush1.msra.mxu0 0.0
    %1375 = vmatprep.subr.mxu0 0.0
    %1376 = vmatpush1.msra.mxu0 0.0
    %1377 = vmatprep.subr.mxu0 0.0
    %1378 = vmatpush1.msra.mxu0 0.0
    %1379 = vmatprep.subr.mxu0 0.0
    %1380 = vmatpush1.msra.mxu0 0.0
    %1381 = vmatprep.subr.mxu0 0.0
    %1382 = vmatpush1.msra.mxu0 0.0
    %1383 = vmatprep.subr.mxu0 0.0
    %1384 = vmatpush1.msra.mxu0 0.0
    %1385 = vmatprep.subr.mxu0 0.0
    %1386 = vmatpush1.msra.mxu0 0.0
    %1387 = vmatprep.subr.mxu0 0.0
    %1388 = vmatpush1.msra.mxu0 0.0
    %1389 = vmatprep.subr.mxu0 0.0
    %1390 = vmatpush1.msra.mxu0 0.0
    %1391 = vmatprep.subr.mxu0 0.0
    %1392 = vmatpush1.msra.mxu0 0.0
    %1393 = vmatprep.subr.mxu0 0.0
    %1394 = vmatpush1.msra.mxu0 0.0
    %1395 = vmatprep.subr.mxu0 0.0
    %1396 = vmatpush1.msra.mxu0 0.0
    %1397 = vmatprep.subr.mxu0 0.0
    %1398 = vmatpush1.msra.mxu0 0.0
    %1399 = vmatprep.subr.mxu0 0.0
    %1400 = vmatpush1.msra.mxu0 0.0
    %1401 = vmatprep.subr.mxu0 0.0
    %1402 = vmatpush1.msra.mxu0 0.0
    %1403 = vmatprep.subr.mxu0 0.0
    %1404 = vmatpush1.msra.mxu0 0.0
    %1405 = vmatprep.subr.mxu0 0.0
    %1406 = vmatpush1.msra.mxu0 0.0
    %1407 = vmatprep.subr.mxu0 0.0
    %1408 = vmatpush1.msra.mxu0 0.0
    %1409 = vmatprep.subr.mxu0 0.0
    %1410 = vmatpush1.msra.mxu0 0.0
    %1411 = vmatprep.subr.mxu0 0.0
    %1412 = vmatpush1.msra.mxu0 0.0
    %1413 = vmatprep.subr.mxu0 0.0
    %1414 = vmatpush1.msra.mxu0 0.0
    %1415 = vmatprep.subr.mxu0 0.0
    %1416 = vmatpush1.msra.mxu0 0.0
    %1417 = vmatprep.subr.mxu0 0.0
    %1418 = vmatpush1.msra.mxu0 0.0
    %1419 = vmatprep.subr.mxu0 0.0
    %1420 = vmatpush1.msra.mxu0 0.0
    %1421 = vmatprep.subr.mxu0 0.0
    %1422 = vmatpush1.msra.mxu0 0.0
    %1423 = vmatprep.subr.mxu0 0.0
    %1424 = vmatpush1.msra.mxu0 0.0
    %1425 = vmatprep.subr.mxu0 0.0
    %1426 = vmatpush1.msra.mxu0 0.0
    %1427 = vmatprep.mubr.f32.mxu0 0.0
    %1428 = vmatmul.mubr.f32.gmra.mrb[0].mxu0 %v1361
    %v1429 = vpop.f32.mrb[0].mxu0
    %v1430 = vadd.f32 0.0, %v1429
    %v1431 = vpop.f32.mrb[0].mxu0
    %1432 = vdwg.mxu0
    %1433 = vrot.lane.b32.xlu0 %v237, 64
    %v1434 = vpop.permute.xlu0 %1433
    %v1437 = vsel %vm1032, %v1125, 0
    %1439 = vmatprep.subr.mxu0 0.0
    %1440 = vmatpush1.msra.mxu0 %v1434
    %1441 = vmatprep.subr.mxu0 0.0
    %1442 = vmatpush1.msra.mxu0 0.0
    %1443 = vmatprep.subr.mxu0 0.0
    %1444 = vmatpush1.msra.mxu0 0.0
    %1445 = vmatprep.subr.mxu0 0.0
    %1446 = vmatpush1.msra.mxu0 0.0
    %1447 = vmatprep.subr.mxu0 0.0
    %1448 = vmatpush1.msra.mxu0 0.0
    %1449 = vmatprep.subr.mxu0 0.0
    %1450 = vmatpush1.msra.mxu0 0.0
    %1451 = vmatprep.subr.mxu0 0.0
    %1452 = vmatpush1.msra.mxu0 0.0
    %1453 = vmatprep.subr.mxu0 0.0
    %1454 = vmatpush1.msra.mxu0 0.0
    %1455 = vmatprep.subr.mxu0 0.0
    %1456 = vmatpush1.msra.mxu0 0.0
    %1457 = vmatprep.subr.mxu0 0.0
    %1458 = vmatpush1.msra.mxu0 0.0
    %1459 = vmatprep.subr.mxu0 0.0
    %1460 = vmatpush1.msra.mxu0 0.0
    %1461 = vmatprep.subr.mxu0 0.0
    %1462 = vmatpush1.msra.mxu0 0.0
    %1463 = vmatprep.subr.mxu0 0.0
    %1464 = vmatpush1.msra.mxu0 0.0
    %1465 = vmatprep.subr.mxu0 0.0
    %1466 = vmatpush1.msra.mxu0 0.0
    %1467 = vmatprep.subr.mxu0 0.0
    %1468 = vmatpush1.msra.mxu0 0.0
    %1469 = vmatprep.subr.mxu0 0.0
    %1470 = vmatpush1.msra.mxu0 0.0
    %1471 = vmatprep.subr.mxu0 0.0
    %1472 = vmatpush1.msra.mxu0 0.0
    %1473 = vmatprep.subr.mxu0 0.0
    %1474 = vmatpush1.msra.mxu0 0.0
    %1475 = vmatprep.subr.mxu0 0.0
    %1476 = vmatpush1.msra.mxu0 0.0
    %1477 = vmatprep.subr.mxu0 0.0
    %1478 = vmatpush1.msra.mxu0 0.0
    %1479 = vmatprep.subr.mxu0 0.0
    %1480 = vmatpush1.msra.mxu0 0.0
    %1481 = vmatprep.subr.mxu0 0.0
    %1482 = vmatpush1.msra.mxu0 0.0
    %1483 = vmatprep.subr.mxu0 0.0
    %1484 = vmatpush1.msra.mxu0 0.0
    %1485 = vmatprep.subr.mxu0 0.0
    %1486 = vmatpush1.msra.mxu0 0.0
    %1487 = vmatprep.subr.mxu0 0.0
    %1488 = vmatpush1.msra.mxu0 0.0
    %1489 = vmatprep.subr.mxu0 0.0
    %1490 = vmatpush1.msra.mxu0 0.0
    %1491 = vmatprep.subr.mxu0 0.0
    %1492 = vmatpush1.msra.mxu0 0.0
    %1493 = vmatprep.subr.mxu0 0.0
    %1494 = vmatpush1.msra.mxu0 0.0
    %1495 = vmatprep.subr.mxu0 0.0
    %1496 = vmatpush1.msra.mxu0 0.0
    %1497 = vmatprep.subr.mxu0 0.0
    %1498 = vmatpush1.msra.mxu0 0.0
    %1499 = vmatprep.subr.mxu0 0.0
    %1500 = vmatpush1.msra.mxu0 0.0
    %1501 = vmatprep.subr.mxu0 0.0
    %1502 = vmatpush1.msra.mxu0 0.0
    %1503 = vmatprep.mubr.f32.mxu0 0.0
    %1504 = vmatmul.mubr.f32.gmra.mrb[0].mxu0 %v1437
    %v1505 = vpop.f32.mrb[0].mxu0
    %v1506 = vadd.f32 0.0, %v1505
    %v1507 = vpop.f32.mrb[0].mxu0
    %1508 = vdwg.mxu0
    %1509 = vrot.lane.b32.xlu0 %v242, 64
    %v1510 = vpop.permute.xlu0 %1509
    %v1513 = vsel %vm1032, %v1126, 0
    %1515 = vmatprep.subr.mxu0 0.0
    %1516 = vmatpush1.msra.mxu0 %v1510
    %1517 = vmatprep.subr.mxu0 0.0
    %1518 = vmatpush1.msra.mxu0 0.0
    %1519 = vmatprep.subr.mxu0 0.0
    %1520 = vmatpush1.msra.mxu0 0.0
    %1521 = vmatprep.subr.mxu0 0.0
    %1522 = vmatpush1.msra.mxu0 0.0
    %1523 = vmatprep.subr.mxu0 0.0
    %1524 = vmatpush1.msra.mxu0 0.0
    %1525 = vmatprep.subr.mxu0 0.0
    %1526 = vmatpush1.msra.mxu0 0.0
    %1527 = vmatprep.subr.mxu0 0.0
    %1528 = vmatpush1.msra.mxu0 0.0
    %1529 = vmatprep.subr.mxu0 0.0
    %1530 = vmatpush1.msra.mxu0 0.0
    %1531 = vmatprep.subr.mxu0 0.0
    %1532 = vmatpush1.msra.mxu0 0.0
    %1533 = vmatprep.subr.mxu0 0.0
    %1534 = vmatpush1.msra.mxu0 0.0
    %1535 = vmatprep.subr.mxu0 0.0
    %1536 = vmatpush1.msra.mxu0 0.0
    %1537 = vmatprep.subr.mxu0 0.0
    %1538 = vmatpush1.msra.mxu0 0.0
    %1539 = vmatprep.subr.mxu0 0.0
    %1540 = vmatpush1.msra.mxu0 0.0
    %1541 = vmatprep.subr.mxu0 0.0
    %1542 = vmatpush1.msra.mxu0 0.0
    %1543 = vmatprep.subr.mxu0 0.0
    %1544 = vmatpush1.msra.mxu0 0.0
    %1545 = vmatprep.subr.mxu0 0.0
    %1546 = vmatpush1.msra.mxu0 0.0
    %1547 = vmatprep.subr.mxu0 0.0
    %1548 = vmatpush1.msra.mxu0 0.0
    %1549 = vmatprep.subr.mxu0 0.0
    %1550 = vmatpush1.msra.mxu0 0.0
    %1551 = vmatprep.subr.mxu0 0.0
    %1552 = vmatpush1.msra.mxu0 0.0
    %1553 = vmatprep.subr.mxu0 0.0
    %1554 = vmatpush1.msra.mxu0 0.0
    %1555 = vmatprep.subr.mxu0 0.0
    %1556 = vmatpush1.msra.mxu0 0.0
    %1557 = vmatprep.subr.mxu0 0.0
    %1558 = vmatpush1.msra.mxu0 0.0
    %1559 = vmatprep.subr.mxu0 0.0
    %1560 = vmatpush1.msra.mxu0 0.0
    %1561 = vmatprep.subr.mxu0 0.0
    %1562 = vmatpush1.msra.mxu0 0.0
    %1563 = vmatprep.subr.mxu0 0.0
    %1564 = vmatpush1.msra.mxu0 0.0
    %1565 = vmatprep.subr.mxu0 0.0
    %1566 = vmatpush1.msra.mxu0 0.0
    %1567 = vmatprep.subr.mxu0 0.0
    %1568 = vmatpush1.msra.mxu0 0.0
    %1569 = vmatprep.subr.mxu0 0.0
    %1570 = vmatpush1.msra.mxu0 0.0
    %1571 = vmatprep.subr.mxu0 0.0
    %1572 = vmatpush1.msra.mxu0 0.0
    %1573 = vmatprep.subr.mxu0 0.0
    %1574 = vmatpush1.msra.mxu0 0.0
    %1575 = vmatprep.subr.mxu0 0.0
    %1576 = vmatpush1.msra.mxu0 0.0
    %1577 = vmatprep.subr.mxu0 0.0
    %1578 = vmatpush1.msra.mxu0 0.0
    %1579 = vmatprep.mubr.f32.mxu0 0.0
    %1580 = vmatmul.mubr.f32.gmra.mrb[0].mxu0 %v1513
    %v1581 = vpop.f32.mrb[0].mxu0
    %v1582 = vadd.f32 0.0, %v1581
    %v1583 = vpop.f32.mrb[0].mxu0
    %1584 = vdwg.mxu0
    %1585 = vrot.lane.b32.xlu0 %v247, 64
    %v1586 = vpop.permute.xlu0 %1585
    %v1589 = vsel %vm1032, %v1127, 0
    %1591 = vmatprep.subr.mxu0 0.0
    %1592 = vmatpush1.msra.mxu0 %v1586
    %1593 = vmatprep.subr.mxu0 0.0
    %1594 = vmatpush1.msra.mxu0 0.0
    %1595 = vmatprep.subr.mxu0 0.0
    %1596 = vmatpush1.msra.mxu0 0.0
    %1597 = vmatprep.subr.mxu0 0.0
    %1598 = vmatpush1.msra.mxu0 0.0
    %1599 = vmatprep.subr.mxu0 0.0
    %1600 = vmatpush1.msra.mxu0 0.0
    %1601 = vmatprep.subr.mxu0 0.0
    %1602 = vmatpush1.msra.mxu0 0.0
    %1603 = vmatprep.subr.mxu0 0.0
    %1604 = vmatpush1.msra.mxu0 0.0
    %1605 = vmatprep.subr.mxu0 0.0
    %1606 = vmatpush1.msra.mxu0 0.0
    %1607 = vmatprep.subr.mxu0 0.0
    %1608 = vmatpush1.msra.mxu0 0.0
    %1609 = vmatprep.subr.mxu0 0.0
    %1610 = vmatpush1.msra.mxu0 0.0
    %1611 = vmatprep.subr.mxu0 0.0
    %1612 = vmatpush1.msra.mxu0 0.0
    %1613 = vmatprep.subr.mxu0 0.0
    %1614 = vmatpush1.msra.mxu0 0.0
    %1615 = vmatprep.subr.mxu0 0.0
    %1616 = vmatpush1.msra.mxu0 0.0
    %1617 = vmatprep.subr.mxu0 0.0
    %1618 = vmatpush1.msra.mxu0 0.0
    %1619 = vmatprep.subr.mxu0 0.0
    %1620 = vmatpush1.msra.mxu0 0.0
    %1621 = vmatprep.subr.mxu0 0.0
    %1622 = vmatpush1.msra.mxu0 0.0
    %1623 = vmatprep.subr.mxu0 0.0
    %1624 = vmatpush1.msra.mxu0 0.0
    %1625 = vmatprep.subr.mxu0 0.0
    %1626 = vmatpush1.msra.mxu0 0.0
    %1627 = vmatprep.subr.mxu0 0.0
    %1628 = vmatpush1.msra.mxu0 0.0
    %1629 = vmatprep.subr.mxu0 0.0
    %1630 = vmatpush1.msra.mxu0 0.0
    %1631 = vmatprep.subr.mxu0 0.0
    %1632 = vmatpush1.msra.mxu0 0.0
    %1633 = vmatprep.subr.mxu0 0.0
    %1634 = vmatpush1.msra.mxu0 0.0
    %1635 = vmatprep.subr.mxu0 0.0
    %1636 = vmatpush1.msra.mxu0 0.0
    %1637 = vmatprep.subr.mxu0 0.0
    %1638 = vmatpush1.msra.mxu0 0.0
    %1639 = vmatprep.subr.mxu0 0.0
    %1640 = vmatpush1.msra.mxu0 0.0
    %1641 = vmatprep.subr.mxu0 0.0
    %1642 = vmatpush1.msra.mxu0 0.0
    %1643 = vmatprep.subr.mxu0 0.0
    %1644 = vmatpush1.msra.mxu0 0.0
    %1645 = vmatprep.subr.mxu0 0.0
    %1646 = vmatpush1.msra.mxu0 0.0
    %1647 = vmatprep.subr.mxu0 0.0
    %1648 = vmatpush1.msra.mxu0 0.0
    %1649 = vmatprep.subr.mxu0 0.0
    %1650 = vmatpush1.msra.mxu0 0.0
    %1651 = vmatprep.subr.mxu0 0.0
    %1652 = vmatpush1.msra.mxu0 0.0
    %1653 = vmatprep.subr.mxu0 0.0
    %1654 = vmatpush1.msra.mxu0 0.0
    %1655 = vmatprep.mubr.f32.mxu0 0.0
    %1656 = vmatmul.mubr.f32.gmra.mrb[0].mxu0 %v1589
    %v1657 = vpop.f32.mrb[0].mxu0
    %v1658 = vadd.f32 0.0, %v1657
    %v1659 = vpop.f32.mrb[0].mxu0
    %1660 = vdwg.mxu0
    %1661 = vrot.lane.b32.xlu0 %v252, 64
    %v1662 = vpop.permute.xlu0 %1661
    %v1665 = vsel %vm1032, %v1128, 0
    %1667 = vmatprep.subr.mxu0 0.0
    %1668 = vmatpush1.msra.mxu0 %v1662
    %1669 = vmatprep.subr.mxu0 0.0
    %1670 = vmatpush1.msra.mxu0 0.0
    %1671 = vmatprep.subr.mxu0 0.0
    %1672 = vmatpush1.msra.mxu0 0.0
    %1673 = vmatprep.subr.mxu0 0.0
    %1674 = vmatpush1.msra.mxu0 0.0
    %1675 = vmatprep.subr.mxu0 0.0
    %1676 = vmatpush1.msra.mxu0 0.0
    %1677 = vmatprep.subr.mxu0 0.0
    %1678 = vmatpush1.msra.mxu0 0.0
    %1679 = vmatprep.subr.mxu0 0.0
    %1680 = vmatpush1.msra.mxu0 0.0
    %1681 = vmatprep.subr.mxu0 0.0
    %1682 = vmatpush1.msra.mxu0 0.0
    %1683 = vmatprep.subr.mxu0 0.0
    %1684 = vmatpush1.msra.mxu0 0.0
    %1685 = vmatprep.subr.mxu0 0.0
    %1686 = vmatpush1.msra.mxu0 0.0
    %1687 = vmatprep.subr.mxu0 0.0
    %1688 = vmatpush1.msra.mxu0 0.0
    %1689 = vmatprep.subr.mxu0 0.0
    %1690 = vmatpush1.msra.mxu0 0.0
    %1691 = vmatprep.subr.mxu0 0.0
    %1692 = vmatpush1.msra.mxu0 0.0
    %1693 = vmatprep.subr.mxu0 0.0
    %1694 = vmatpush1.msra.mxu0 0.0
    %1695 = vmatprep.subr.mxu0 0.0
    %1696 = vmatpush1.msra.mxu0 0.0
    %1697 = vmatprep.subr.mxu0 0.0
    %1698 = vmatpush1.msra.mxu0 0.0
    %1699 = vmatprep.subr.mxu0 0.0
    %1700 = vmatpush1.msra.mxu0 0.0
    %1701 = vmatprep.subr.mxu0 0.0
    %1702 = vmatpush1.msra.mxu0 0.0
    %1703 = vmatprep.subr.mxu0 0.0
    %1704 = vmatpush1.msra.mxu0 0.0
    %1705 = vmatprep.subr.mxu0 0.0
    %1706 = vmatpush1.msra.mxu0 0.0
    %1707 = vmatprep.subr.mxu0 0.0
    %1708 = vmatpush1.msra.mxu0 0.0
    %1709 = vmatprep.subr.mxu0 0.0
    %1710 = vmatpush1.msra.mxu0 0.0
    %1711 = vmatprep.subr.mxu0 0.0
    %1712 = vmatpush1.msra.mxu0 0.0
    %1713 = vmatprep.subr.mxu0 0.0
    %1714 = vmatpush1.msra.mxu0 0.0
    %1715 = vmatprep.subr.mxu0 0.0
    %1716 = vmatpush1.msra.mxu0 0.0
    %1717 = vmatprep.subr.mxu0 0.0
    %1718 = vmatpush1.msra.mxu0 0.0
    %1719 = vmatprep.subr.mxu0 0.0
    %1720 = vmatpush1.msra.mxu0 0.0
    %1721 = vmatprep.subr.mxu0 0.0
    %1722 = vmatpush1.msra.mxu0 0.0
    %1723 = vmatprep.subr.mxu0 0.0
    %1724 = vmatpush1.msra.mxu0 0.0
    %1725 = vmatprep.subr.mxu0 0.0
    %1726 = vmatpush1.msra.mxu0 0.0
    %1727 = vmatprep.subr.mxu0 0.0
    %1728 = vmatpush1.msra.mxu0 0.0
    %1729 = vmatprep.subr.mxu0 0.0
    %1730 = vmatpush1.msra.mxu0 0.0
    %1731 = vmatprep.mubr.f32.mxu0 0.0
    %1732 = vmatmul.mubr.f32.gmra.mrb[0].mxu0 %v1665
    %v1733 = vpop.f32.mrb[0].mxu0
    %v1734 = vadd.f32 0.0, %v1733
    %v1735 = vpop.f32.mrb[0].mxu0
    %1736 = vdwg.mxu0
    %v1737 = vld [vmem:[#allocation13] sm:$0xff]
    %v1738 = vld [vmem:[#allocation13 + $0x8] sm:$0xff]
    %v1739 = vld [vmem:[#allocation13 + $0x10] sm:$0xff]
    %v1740 = vld [vmem:[#allocation13 + $0x18] sm:$0xff]
    %v1741 = vld [vmem:[#allocation2] sm:$0xff]
    %v1743 = vsel %vm125, 0.0, 0
    %1745 = vmatprep.subr.mxu0 0.0
    %1746 = vmatpush1.msra.mxu0 %v1737
    %1747 = vmatprep.subr.mxu0 0.0
    %1748 = vmatpush1.msra.mxu0 %v1738
    %1749 = vmatprep.subr.mxu0 0.0
    %1750 = vmatpush1.msra.mxu0 %v1739
    %1751 = vmatprep.subr.mxu0 0.0
    %1752 = vmatpush1.msra.mxu0 %v1740
    %1753 = vmatprep.subr.mxu0 0.0
    %1754 = vmatpush1.msra.mxu0 0.0
    %1755 = vmatprep.subr.mxu0 0.0
    %1756 = vmatpush1.msra.mxu0 0.0
    %1757 = vmatprep.subr.mxu0 0.0
    %1758 = vmatpush1.msra.mxu0 0.0
    %1759 = vmatprep.subr.mxu0 0.0
    %1760 = vmatpush1.msra.mxu0 0.0
    %1761 = vmatprep.subr.mxu0 0.0
    %1762 = vmatpush1.msra.mxu0 0.0
    %1763 = vmatprep.subr.mxu0 0.0
    %1764 = vmatpush1.msra.mxu0 0.0
    %1765 = vmatprep.subr.mxu0 0.0
    %1766 = vmatpush1.msra.mxu0 0.0
    %1767 = vmatprep.subr.mxu0 0.0
    %1768 = vmatpush1.msra.mxu0 0.0
    %1769 = vmatprep.subr.mxu0 0.0
    %1770 = vmatpush1.msra.mxu0 0.0
    %1771 = vmatprep.subr.mxu0 0.0
    %1772 = vmatpush1.msra.mxu0 0.0
    %1773 = vmatprep.subr.mxu0 0.0
    %1774 = vmatpush1.msra.mxu0 0.0
    %1775 = vmatprep.subr.mxu0 0.0
    %1776 = vmatpush1.msra.mxu0 0.0
    %1777 = vmatprep.subr.mxu0 0.0
    %1778 = vmatpush1.msra.mxu0 0.0
    %1779 = vmatprep.subr.mxu0 0.0
    %1780 = vmatpush1.msra.mxu0 0.0
    %1781 = vmatprep.subr.mxu0 0.0
    %1782 = vmatpush1.msra.mxu0 0.0
    %1783 = vmatprep.subr.mxu0 0.0
    %1784 = vmatpush1.msra.mxu0 0.0
    %1785 = vmatprep.subr.mxu0 0.0
    %1786 = vmatpush1.msra.mxu0 0.0
    %1787 = vmatprep.subr.mxu0 0.0
    %1788 = vmatpush1.msra.mxu0 0.0
    %1789 = vmatprep.subr.mxu0 0.0
    %1790 = vmatpush1.msra.mxu0 0.0
    %1791 = vmatprep.subr.mxu0 0.0
    %1792 = vmatpush1.msra.mxu0 0.0
    %1793 = vmatprep.subr.mxu0 0.0
    %1794 = vmatpush1.msra.mxu0 0.0
    %1795 = vmatprep.subr.mxu0 0.0
    %1796 = vmatpush1.msra.mxu0 0.0
    %1797 = vmatprep.subr.mxu0 0.0
    %1798 = vmatpush1.msra.mxu0 0.0
    %1799 = vmatprep.subr.mxu0 0.0
    %1800 = vmatpush1.msra.mxu0 0.0
    %1801 = vmatprep.subr.mxu0 0.0
    %1802 = vmatpush1.msra.mxu0 0.0
    %1803 = vmatprep.subr.mxu0 0.0
    %1804 = vmatpush1.msra.mxu0 0.0
    %1805 = vmatprep.subr.mxu0 0.0
    %1806 = vmatpush1.msra.mxu0 0.0
    %1807 = vmatprep.subr.mxu0 0.0
    %1808 = vmatpush1.msra.mxu0 0.0
    %1809 = vmatprep.mubr.f32.mxu0 0.0
    %1810 = vmatmul.mubr.f32.gmra.mrb[0].mxu0 %v1743
    %v1811 = vpop.f32.mrb[0].mxu0
    %v1812 = vadd.f32 0.0, %v1811
    %v1813 = vpop.f32.mrb[0].mxu0
    %1814 = vdwg.mxu0
    %v1815 = vadd.f32 %v1741, %v1812
    %v1816 = vxor.u32 %v1815, 2147483648
    %v1817 = vmul.f32 %v1816, 1.442695
    %v1818 = vpow.pop %v1817
    %v1819 = vadd.f32 %v1818, 1.0
    %v1820 = vrcp.pop %v1819
    %v1821 = vmul.f32 1.0, %v1820
    %v1822 = vtanh.pop %v1815
    %v1823 = vmul.f32 %v1821, 0.0
    %1825 = vrot.lane.b32.xlu0 %v1822, 64
    %v1826 = vpop.permute.xlu0 %1825
    %v1828 = vmul.f32 %v1821, %v1826
    %1830 = vrot.lane.b32.xlu0 %v1828, 32
    %v1831 = vpop.permute.xlu0 %1830
    %v1833 = vadd.f32 %v1823, %v1831
    %v1834 = vtanh.pop %v1833
    %1836 = vrot.lane.b32.xlu0 %v1834, 64
    %v1837 = vpop.permute.xlu0 %1836
    %v1839 = vmul.f32 %v1821, %v1837
    %1841 = vrot.lane.b32.xlu0 %v1839, 32
    %v1842 = vpop.permute.xlu0 %1841
    %1844 = vst.msk [vmem:[#allocation3] sm:$0xff] %vm125, %v1842
    %s1845 = scalar_lea.vmem [#allocation2], 8
    %v1846 = vld [vmem:[%s1845] sm:$0xff]
    %v1847 = vsel %vm125, %v1842, 0
    %1849 = vmatprep.subr.mxu0 0.0
    %1850 = vmatpush1.msra.mxu0 %v1737
    %1851 = vmatprep.subr.mxu0 0.0
    %1852 = vmatpush1.msra.mxu0 %v1738
    %1853 = vmatprep.subr.mxu0 0.0
    %1854 = vmatpush1.msra.mxu0 %v1739
    %1855 = vmatprep.subr.mxu0 0.0
    %1856 = vmatpush1.msra.mxu0 %v1740
    %1857 = vmatprep.subr.mxu0 0.0
    %1858 = vmatpush1.msra.mxu0 0.0
    %1859 = vmatprep.subr.mxu0 0.0
    %1860 = vmatpush1.msra.mxu0 0.0
    %1861 = vmatprep.subr.mxu0 0.0
    %1862 = vmatpush1.msra.mxu0 0.0
    %1863 = vmatprep.subr.mxu0 0.0
    %1864 = vmatpush1.msra.mxu0 0.0
    %1865 = vmatprep.subr.mxu0 0.0
    %1866 = vmatpush1.msra.mxu0 0.0
    %1867 = vmatprep.subr.mxu0 0.0
    %1868 = vmatpush1.msra.mxu0 0.0
    %1869 = vmatprep.subr.mxu0 0.0
    %1870 = vmatpush1.msra.mxu0 0.0
    %1871 = vmatprep.subr.mxu0 0.0
    %1872 = vmatpush1.msra.mxu0 0.0
    %1873 = vmatprep.subr.mxu0 0.0
    %1874 = vmatpush1.msra.mxu0 0.0
    %1875 = vmatprep.subr.mxu0 0.0
    %1876 = vmatpush1.msra.mxu0 0.0
    %1877 = vmatprep.subr.mxu0 0.0
    %1878 = vmatpush1.msra.mxu0 0.0
    %1879 = vmatprep.subr.mxu0 0.0
    %1880 = vmatpush1.msra.mxu0 0.0
    %1881 = vmatprep.subr.mxu0 0.0
    %1882 = vmatpush1.msra.mxu0 0.0
    %1883 = vmatprep.subr.mxu0 0.0
    %1884 = vmatpush1.msra.mxu0 0.0
    %1885 = vmatprep.subr.mxu0 0.0
    %1886 = vmatpush1.msra.mxu0 0.0
    %1887 = vmatprep.subr.mxu0 0.0
    %1888 = vmatpush1.msra.mxu0 0.0
    %1889 = vmatprep.subr.mxu0 0.0
    %1890 = vmatpush1.msra.mxu0 0.0
    %1891 = vmatprep.subr.mxu0 0.0
    %1892 = vmatpush1.msra.mxu0 0.0
    %1893 = vmatprep.subr.mxu0 0.0
    %1894 = vmatpush1.msra.mxu0 0.0
    %1895 = vmatprep.subr.mxu0 0.0
    %1896 = vmatpush1.msra.mxu0 0.0
    %1897 = vmatprep.subr.mxu0 0.0
    %1898 = vmatpush1.msra.mxu0 0.0
    %1899 = vmatprep.subr.mxu0 0.0
    %1900 = vmatpush1.msra.mxu0 0.0
    %1901 = vmatprep.subr.mxu0 0.0
    %1902 = vmatpush1.msra.mxu0 0.0
    %1903 = vmatprep.subr.mxu0 0.0
    %1904 = vmatpush1.msra.mxu0 0.0
    %1905 = vmatprep.subr.mxu0 0.0
    %1906 = vmatpush1.msra.mxu0 0.0
    %1907 = vmatprep.subr.mxu0 0.0
    %1908 = vmatpush1.msra.mxu0 0.0
    %1909 = vmatprep.subr.mxu0 0.0
    %1910 = vmatpush1.msra.mxu0 0.0
    %1911 = vmatprep.subr.mxu0 0.0
    %1912 = vmatpush1.msra.mxu0 0.0
    %1913 = vmatprep.mubr.f32.mxu0 0.0
    %1914 = vmatmul.mubr.f32.gmra.mrb[0].mxu0 %v1847
    %v1915 = vpop.f32.mrb[0].mxu0
    %v1916 = vadd.f32 0.0, %v1915
    %v1917 = vpop.f32.mrb[0].mxu0
    %1918 = vdwg.mxu0
    %v1919 = vadd.f32 %v1846, %v1916
    %v1920 = vxor.u32 %v1919, 2147483648
    %v1921 = vmul.f32 %v1920, 1.442695
    %v1922 = vpow.pop %v1921
    %v1923 = vadd.f32 %v1922, 1.0
    %v1924 = vrcp.pop %v1923
    %v1925 = vmul.f32 1.0, %v1924
    %v1926 = vtanh.pop %v1919
    %v1927 = vmul.f32 %v1925, %v1833
    %1929 = vrot.lane.b32.xlu0 %v1926, 64
    %v1930 = vpop.permute.xlu0 %1929
    %v1932 = vmul.f32 %v1925, %v1930
    %1934 = vrot.lane.b32.xlu0 %v1932, 32
    %v1935 = vpop.permute.xlu0 %1934
    %v1937 = vadd.f32 %v1927, %v1935
    %v1938 = vtanh.pop %v1937
    %1940 = vrot.lane.b32.xlu0 %v1938, 64
    %v1941 = vpop.permute.xlu0 %1940
    %v1943 = vmul.f32 %v1925, %v1941
    %1945 = vrot.lane.b32.xlu0 %v1943, 32
    %v1946 = vpop.permute.xlu0 %1945
    %s1948 = scalar_lea.vmem [#allocation3], 8
    %1949 = vst.msk [vmem:[%s1948] sm:$0xff] %vm125, %v1946
    %s1950 = scalar_lea.vmem [#allocation2], 16
    %v1951 = vld [vmem:[%s1950] sm:$0xff]
    %v1952 = vsel %vm125, %v1946, 0
    %1954 = vmatprep.subr.mxu0 0.0
    %1955 = vmatpush1.msra.mxu0 %v1737
    %1956 = vmatprep.subr.mxu0 0.0
    %1957 = vmatpush1.msra.mxu0 %v1738
    %1958 = vmatprep.subr.mxu0 0.0
    %1959 = vmatpush1.msra.mxu0 %v1739
    %1960 = vmatprep.subr.mxu0 0.0
    %1961 = vmatpush1.msra.mxu0 %v1740
    %1962 = vmatprep.subr.mxu0 0.0
    %1963 = vmatpush1.msra.mxu0 0.0
    %1964 = vmatprep.subr.mxu0 0.0
    %1965 = vmatpush1.msra.mxu0 0.0
    %1966 = vmatprep.subr.mxu0 0.0
    %1967 = vmatpush1.msra.mxu0 0.0
    %1968 = vmatprep.subr.mxu0 0.0
    %1969 = vmatpush1.msra.mxu0 0.0
    %1970 = vmatprep.subr.mxu0 0.0
    %1971 = vmatpush1.msra.mxu0 0.0
    %1972 = vmatprep.subr.mxu0 0.0
    %1973 = vmatpush1.msra.mxu0 0.0
    %1974 = vmatprep.subr.mxu0 0.0
    %1975 = vmatpush1.msra.mxu0 0.0
    %1976 = vmatprep.subr.mxu0 0.0
    %1977 = vmatpush1.msra.mxu0 0.0
    %1978 = vmatprep.subr.mxu0 0.0
    %1979 = vmatpush1.msra.mxu0 0.0
    %1980 = vmatprep.subr.mxu0 0.0
    %1981 = vmatpush1.msra.mxu0 0.0
    %1982 = vmatprep.subr.mxu0 0.0
    %1983 = vmatpush1.msra.mxu0 0.0
    %1984 = vmatprep.subr.mxu0 0.0
    %1985 = vmatpush1.msra.mxu0 0.0
    %1986 = vmatprep.subr.mxu0 0.0
    %1987 = vmatpush1.msra.mxu0 0.0
    %1988 = vmatprep.subr.mxu0 0.0
    %1989 = vmatpush1.msra.mxu0 0.0
    %1990 = vmatprep.subr.mxu0 0.0
    %1991 = vmatpush1.msra.mxu0 0.0
    %1992 = vmatprep.subr.mxu0 0.0
    %1993 = vmatpush1.msra.mxu0 0.0
    %1994 = vmatprep.subr.mxu0 0.0
    %1995 = vmatpush1.msra.mxu0 0.0
    %1996 = vmatprep.subr.mxu0 0.0
    %1997 = vmatpush1.msra.mxu0 0.0
    %1998 = vmatprep.subr.mxu0 0.0
    %1999 = vmatpush1.msra.mxu0 0.0
    %2000 = vmatprep.subr.mxu0 0.0
    %2001 = vmatpush1.msra.mxu0 0.0
    %2002 = vmatprep.subr.mxu0 0.0
    %2003 = vmatpush1.msra.mxu0 0.0
    %2004 = vmatprep.subr.mxu0 0.0
    %2005 = vmatpush1.msra.mxu0 0.0
    %2006 = vmatprep.subr.mxu0 0.0
    %2007 = vmatpush1.msra.mxu0 0.0
    %2008 = vmatprep.subr.mxu0 0.0
    %2009 = vmatpush1.msra.mxu0 0.0
    %2010 = vmatprep.subr.mxu0 0.0
    %2011 = vmatpush1.msra.mxu0 0.0
    %2012 = vmatprep.subr.mxu0 0.0
    %2013 = vmatpush1.msra.mxu0 0.0
    %2014 = vmatprep.subr.mxu0 0.0
    %2015 = vmatpush1.msra.mxu0 0.0
    %2016 = vmatprep.subr.mxu0 0.0
    %2017 = vmatpush1.msra.mxu0 0.0
    %2018 = vmatprep.mubr.f32.mxu0 0.0
    %2019 = vmatmul.mubr.f32.gmra.mrb[0].mxu0 %v1952
    %v2020 = vpop.f32.mrb[0].mxu0
    %v2021 = vadd.f32 0.0, %v2020
    %v2022 = vpop.f32.mrb[0].mxu0
    %2023 = vdwg.mxu0
    %v2024 = vadd.f32 %v1951, %v2021
    %v2025 = vxor.u32 %v2024, 2147483648
    %v2026 = vmul.f32 %v2025, 1.442695
    %v2027 = vpow.pop %v2026
    %v2028 = vadd.f32 %v2027, 1.0
    %v2029 = vrcp.pop %v2028
    %v2030 = vmul.f32 1.0, %v2029
    %v2031 = vtanh.pop %v2024
    %v2032 = vmul.f32 %v2030, %v1937
    %2034 = vrot.lane.b32.xlu0 %v2031, 64
    %v2035 = vpop.permute.xlu0 %2034
    %v2037 = vmul.f32 %v2030, %v2035
    %2039 = vrot.lane.b32.xlu0 %v2037, 32
    %v2040 = vpop.permute.xlu0 %2039
    %v2042 = vadd.f32 %v2032, %v2040
    %v2043 = vtanh.pop %v2042
    %2045 = vrot.lane.b32.xlu0 %v2043, 64
    %v2046 = vpop.permute.xlu0 %2045
    %v2048 = vmul.f32 %v2030, %v2046
    %2050 = vrot.lane.b32.xlu0 %v2048, 32
    %v2051 = vpop.permute.xlu0 %2050
    %s2053 = scalar_lea.vmem [#allocation3], 16
    %2054 = vst.msk [vmem:[%s2053] sm:$0xff] %vm125, %v2051
    %s2055 = scalar_lea.vmem [#allocation2], 24
    %v2056 = vld [vmem:[%s2055] sm:$0xff]
    %v2057 = vsel %vm125, %v2051, 0
    %2059 = vmatprep.subr.mxu0 0.0
    %2060 = vmatpush1.msra.mxu0 %v1737
    %2061 = vmatprep.subr.mxu0 0.0
    %2062 = vmatpush1.msra.mxu0 %v1738
    %2063 = vmatprep.subr.mxu0 0.0
    %2064 = vmatpush1.msra.mxu0 %v1739
    %2065 = vmatprep.subr.mxu0 0.0
    %2066 = vmatpush1.msra.mxu0 %v1740
    %2067 = vmatprep.subr.mxu0 0.0
    %2068 = vmatpush1.msra.mxu0 0.0
    %2069 = vmatprep.subr.mxu0 0.0
    %2070 = vmatpush1.msra.mxu0 0.0
    %2071 = vmatprep.subr.mxu0 0.0
    %2072 = vmatpush1.msra.mxu0 0.0
    %2073 = vmatprep.subr.mxu0 0.0
    %2074 = vmatpush1.msra.mxu0 0.0
    %2075 = vmatprep.subr.mxu0 0.0
    %2076 = vmatpush1.msra.mxu0 0.0
    %2077 = vmatprep.subr.mxu0 0.0
    %2078 = vmatpush1.msra.mxu0 0.0
    %2079 = vmatprep.subr.mxu0 0.0
    %2080 = vmatpush1.msra.mxu0 0.0
    %2081 = vmatprep.subr.mxu0 0.0
    %2082 = vmatpush1.msra.mxu0 0.0
    %2083 = vmatprep.subr.mxu0 0.0
    %2084 = vmatpush1.msra.mxu0 0.0
    %2085 = vmatprep.subr.mxu0 0.0
    %2086 = vmatpush1.msra.mxu0 0.0
    %2087 = vmatprep.subr.mxu0 0.0
    %2088 = vmatpush1.msra.mxu0 0.0
    %2089 = vmatprep.subr.mxu0 0.0
    %2090 = vmatpush1.msra.mxu0 0.0
    %2091 = vmatprep.subr.mxu0 0.0
    %2092 = vmatpush1.msra.mxu0 0.0
    %2093 = vmatprep.subr.mxu0 0.0
    %2094 = vmatpush1.msra.mxu0 0.0
    %2095 = vmatprep.subr.mxu0 0.0
    %2096 = vmatpush1.msra.mxu0 0.0
    %2097 = vmatprep.subr.mxu0 0.0
    %2098 = vmatpush1.msra.mxu0 0.0
    %2099 = vmatprep.subr.mxu0 0.0
    %2100 = vmatpush1.msra.mxu0 0.0
    %2101 = vmatprep.subr.mxu0 0.0
    %2102 = vmatpush1.msra.mxu0 0.0
    %2103 = vmatprep.subr.mxu0 0.0
    %2104 = vmatpush1.msra.mxu0 0.0
    %2105 = vmatprep.subr.mxu0 0.0
    %2106 = vmatpush1.msra.mxu0 0.0
    %2107 = vmatprep.subr.mxu0 0.0
    %2108 = vmatpush1.msra.mxu0 0.0
    %2109 = vmatprep.subr.mxu0 0.0
    %2110 = vmatpush1.msra.mxu0 0.0
    %2111 = vmatprep.subr.mxu0 0.0
    %2112 = vmatpush1.msra.mxu0 0.0
    %2113 = vmatprep.subr.mxu0 0.0
    %2114 = vmatpush1.msra.mxu0 0.0
    %2115 = vmatprep.subr.mxu0 0.0
    %2116 = vmatpush1.msra.mxu0 0.0
    %2117 = vmatprep.subr.mxu0 0.0
    %2118 = vmatpush1.msra.mxu0 0.0
    %2119 = vmatprep.subr.mxu0 0.0
    %2120 = vmatpush1.msra.mxu0 0.0
    %2121 = vmatprep.subr.mxu0 0.0
    %2122 = vmatpush1.msra.mxu0 0.0
    %2123 = vmatprep.mubr.f32.mxu0 0.0
    %2124 = vmatmul.mubr.f32.gmra.mrb[0].mxu0 %v2057
    %v2125 = vpop.f32.mrb[0].mxu0
    %v2126 = vadd.f32 0.0, %v2125
    %v2127 = vpop.f32.mrb[0].mxu0
    %2128 = vdwg.mxu0
    %v2129 = vadd.f32 %v2056, %v2126
    %v2130 = vxor.u32 %v2129, 2147483648
    %v2131 = vmul.f32 %v2130, 1.442695
    %v2132 = vpow.pop %v2131
    %v2133 = vadd.f32 %v2132, 1.0
    %v2134 = vrcp.pop %v2133
    %v2135 = vmul.f32 1.0, %v2134
    %v2136 = vtanh.pop %v2129
    %v2137 = vmul.f32 %v2135, %v2042
    %2139 = vrot.lane.b32.xlu0 %v2136, 64
    %v2140 = vpop.permute.xlu0 %2139
    %v2142 = vmul.f32 %v2135, %v2140
    %2144 = vrot.lane.b32.xlu0 %v2142, 32
    %v2145 = vpop.permute.xlu0 %2144
    %v2147 = vadd.f32 %v2137, %v2145
    %v2148 = vtanh.pop %v2147
    %2150 = vrot.lane.b32.xlu0 %v2148, 64
    %v2151 = vpop.permute.xlu0 %2150
    %v2153 = vmul.f32 %v2135, %v2151
    %2155 = vrot.lane.b32.xlu0 %v2153, 32
    %v2156 = vpop.permute.xlu0 %2155
    %s2158 = scalar_lea.vmem [#allocation3], 24
    %2159 = vst.msk [vmem:[%s2158] sm:$0xff] %vm125, %v2156
    %s2160 = scalar_lea.vmem [#allocation2], 32
    %v2161 = vld [vmem:[%s2160] sm:$0xff]
    %v2162 = vsel %vm125, %v2156, 0
    %2164 = vmatprep.subr.mxu0 0.0
    %2165 = vmatpush1.msra.mxu0 %v1737
    %2166 = vmatprep.subr.mxu0 0.0
    %2167 = vmatpush1.msra.mxu0 %v1738
    %2168 = vmatprep.subr.mxu0 0.0
    %2169 = vmatpush1.msra.mxu0 %v1739
    %2170 = vmatprep.subr.mxu0 0.0
    %2171 = vmatpush1.msra.mxu0 %v1740
    %2172 = vmatprep.subr.mxu0 0.0
    %2173 = vmatpush1.msra.mxu0 0.0
    %2174 = vmatprep.subr.mxu0 0.0
    %2175 = vmatpush1.msra.mxu0 0.0
    %2176 = vmatprep.subr.mxu0 0.0
    %2177 = vmatpush1.msra.mxu0 0.0
    %2178 = vmatprep.subr.mxu0 0.0
    %2179 = vmatpush1.msra.mxu0 0.0
    %2180 = vmatprep.subr.mxu0 0.0
    %2181 = vmatpush1.msra.mxu0 0.0
    %2182 = vmatprep.subr.mxu0 0.0
    %2183 = vmatpush1.msra.mxu0 0.0
    %2184 = vmatprep.subr.mxu0 0.0
    %2185 = vmatpush1.msra.mxu0 0.0
    %2186 = vmatprep.subr.mxu0 0.0
    %2187 = vmatpush1.msra.mxu0 0.0
    %2188 = vmatprep.subr.mxu0 0.0
    %2189 = vmatpush1.msra.mxu0 0.0
    %2190 = vmatprep.subr.mxu0 0.0
    %2191 = vmatpush1.msra.mxu0 0.0
    %2192 = vmatprep.subr.mxu0 0.0
    %2193 = vmatpush1.msra.mxu0 0.0
    %2194 = vmatprep.subr.mxu0 0.0
    %2195 = vmatpush1.msra.mxu0 0.0
    %2196 = vmatprep.subr.mxu0 0.0
    %2197 = vmatpush1.msra.mxu0 0.0
    %2198 = vmatprep.subr.mxu0 0.0
    %2199 = vmatpush1.msra.mxu0 0.0
    %2200 = vmatprep.subr.mxu0 0.0
    %2201 = vmatpush1.msra.mxu0 0.0
    %2202 = vmatprep.subr.mxu0 0.0
    %2203 = vmatpush1.msra.mxu0 0.0
    %2204 = vmatprep.subr.mxu0 0.0
    %2205 = vmatpush1.msra.mxu0 0.0
    %2206 = vmatprep.subr.mxu0 0.0
    %2207 = vmatpush1.msra.mxu0 0.0
    %2208 = vmatprep.subr.mxu0 0.0
    %2209 = vmatpush1.msra.mxu0 0.0
    %2210 = vmatprep.subr.mxu0 0.0
    %2211 = vmatpush1.msra.mxu0 0.0
    %2212 = vmatprep.subr.mxu0 0.0
    %2213 = vmatpush1.msra.mxu0 0.0
    %2214 = vmatprep.subr.mxu0 0.0
    %2215 = vmatpush1.msra.mxu0 0.0
    %2216 = vmatprep.subr.mxu0 0.0
    %2217 = vmatpush1.msra.mxu0 0.0
    %2218 = vmatprep.subr.mxu0 0.0
    %2219 = vmatpush1.msra.mxu0 0.0
    %2220 = vmatprep.subr.mxu0 0.0
    %2221 = vmatpush1.msra.mxu0 0.0
    %2222 = vmatprep.subr.mxu0 0.0
    %2223 = vmatpush1.msra.mxu0 0.0
    %2224 = vmatprep.subr.mxu0 0.0
    %2225 = vmatpush1.msra.mxu0 0.0
    %2226 = vmatprep.subr.mxu0 0.0
    %2227 = vmatpush1.msra.mxu0 0.0
    %2228 = vmatprep.mubr.f32.mxu0 0.0
    %2229 = vmatmul.mubr.f32.gmra.mrb[0].mxu0 %v2162
    %v2230 = vpop.f32.mrb[0].mxu0
    %v2231 = vadd.f32 0.0, %v2230
    %v2232 = vpop.f32.mrb[0].mxu0
    %2233 = vdwg.mxu0
    %v2234 = vadd.f32 %v2161, %v2231
    %v2235 = vxor.u32 %v2234, 2147483648
    %v2236 = vmul.f32 %v2235, 1.442695
    %v2237 = vpow.pop %v2236
    %v2238 = vadd.f32 %v2237, 1.0
    %v2239 = vrcp.pop %v2238
    %v2240 = vmul.f32 1.0, %v2239
    %v2241 = vtanh.pop %v2234
    %v2242 = vmul.f32 %v2240, %v2147
    %2244 = vrot.lane.b32.xlu0 %v2241, 64
    %v2245 = vpop.permute.xlu0 %2244
    %v2247 = vmul.f32 %v2240, %v2245
    %2249 = vrot.lane.b32.xlu0 %v2247, 32
    %v2250 = vpop.permute.xlu0 %2249
    %v2252 = vadd.f32 %v2242, %v2250
    %v2253 = vtanh.pop %v2252
    %2255 = vrot.lane.b32.xlu0 %v2253, 64
    %v2256 = vpop.permute.xlu0 %2255
    %v2258 = vmul.f32 %v2240, %v2256
    %2260 = vrot.lane.b32.xlu0 %v2258, 32
    %v2261 = vpop.permute.xlu0 %2260
    %s2263 = scalar_lea.vmem [#allocation3], 32
    %2264 = vst.msk [vmem:[%s2263] sm:$0xff] %vm125, %v2261
    %s2265 = scalar_lea.vmem [#allocation2], 40
    %v2266 = vld [vmem:[%s2265] sm:$0xff]
    %v2267 = vsel %vm125, %v2261, 0
    %2269 = vmatprep.subr.mxu0 0.0
    %2270 = vmatpush1.msra.mxu0 %v1737
    %2271 = vmatprep.subr.mxu0 0.0
    %2272 = vmatpush1.msra.mxu0 %v1738
    %2273 = vmatprep.subr.mxu0 0.0
    %2274 = vmatpush1.msra.mxu0 %v1739
    %2275 = vmatprep.subr.mxu0 0.0
    %2276 = vmatpush1.msra.mxu0 %v1740
    %2277 = vmatprep.subr.mxu0 0.0
    %2278 = vmatpush1.msra.mxu0 0.0
    %2279 = vmatprep.subr.mxu0 0.0
    %2280 = vmatpush1.msra.mxu0 0.0
    %2281 = vmatprep.subr.mxu0 0.0
    %2282 = vmatpush1.msra.mxu0 0.0
    %2283 = vmatprep.subr.mxu0 0.0
    %2284 = vmatpush1.msra.mxu0 0.0
    %2285 = vmatprep.subr.mxu0 0.0
    %2286 = vmatpush1.msra.mxu0 0.0
    %2287 = vmatprep.subr.mxu0 0.0
    %2288 = vmatpush1.msra.mxu0 0.0
    %2289 = vmatprep.subr.mxu0 0.0
    %2290 = vmatpush1.msra.mxu0 0.0
    %2291 = vmatprep.subr.mxu0 0.0
    %2292 = vmatpush1.msra.mxu0 0.0
    %2293 = vmatprep.subr.mxu0 0.0
    %2294 = vmatpush1.msra.mxu0 0.0
    %2295 = vmatprep.subr.mxu0 0.0
    %2296 = vmatpush1.msra.mxu0 0.0
    %2297 = vmatprep.subr.mxu0 0.0
    %2298 = vmatpush1.msra.mxu0 0.0
    %2299 = vmatprep.subr.mxu0 0.0
    %2300 = vmatpush1.msra.mxu0 0.0
    %2301 = vmatprep.subr.mxu0 0.0
    %2302 = vmatpush1.msra.mxu0 0.0
    %2303 = vmatprep.subr.mxu0 0.0
    %2304 = vmatpush1.msra.mxu0 0.0
    %2305 = vmatprep.subr.mxu0 0.0
    %2306 = vmatpush1.msra.mxu0 0.0
    %2307 = vmatprep.subr.mxu0 0.0
    %2308 = vmatpush1.msra.mxu0 0.0
    %2309 = vmatprep.subr.mxu0 0.0
    %2310 = vmatpush1.msra.mxu0 0.0
    %2311 = vmatprep.subr.mxu0 0.0
    %2312 = vmatpush1.msra.mxu0 0.0
    %2313 = vmatprep.subr.mxu0 0.0
    %2314 = vmatpush1.msra.mxu0 0.0
    %2315 = vmatprep.subr.mxu0 0.0
    %2316 = vmatpush1.msra.mxu0 0.0
    %2317 = vmatprep.subr.mxu0 0.0
    %2318 = vmatpush1.msra.mxu0 0.0
    %2319 = vmatprep.subr.mxu0 0.0
    %2320 = vmatpush1.msra.mxu0 0.0
    %2321 = vmatprep.subr.mxu0 0.0
    %2322 = vmatpush1.msra.mxu0 0.0
    %2323 = vmatprep.subr.mxu0 0.0
    %2324 = vmatpush1.msra.mxu0 0.0
    %2325 = vmatprep.subr.mxu0 0.0
    %2326 = vmatpush1.msra.mxu0 0.0
    %2327 = vmatprep.subr.mxu0 0.0
    %2328 = vmatpush1.msra.mxu0 0.0
    %2329 = vmatprep.subr.mxu0 0.0
    %2330 = vmatpush1.msra.mxu0 0.0
    %2331 = vmatprep.subr.mxu0 0.0
    %2332 = vmatpush1.msra.mxu0 0.0
    %2333 = vmatprep.mubr.f32.mxu0 0.0
    %2334 = vmatmul.mubr.f32.gmra.mrb[0].mxu0 %v2267
    %v2335 = vpop.f32.mrb[0].mxu0
    %v2336 = vadd.f32 0.0, %v2335
    %v2337 = vpop.f32.mrb[0].mxu0
    %2338 = vdwg.mxu0
    %v2339 = vadd.f32 %v2266, %v2336
    %v2340 = vxor.u32 %v2339, 2147483648
    %v2341 = vmul.f32 %v2340, 1.442695
    %v2342 = vpow.pop %v2341
    %v2343 = vadd.f32 %v2342, 1.0
    %v2344 = vrcp.pop %v2343
    %v2345 = vmul.f32 1.0, %v2344
    %v2346 = vtanh.pop %v2339
    %v2347 = vmul.f32 %v2345, %v2252
    %2349 = vrot.lane.b32.xlu0 %v2346, 64
    %v2350 = vpop.permute.xlu0 %2349
    %v2352 = vmul.f32 %v2345, %v2350
    %2354 = vrot.lane.b32.xlu0 %v2352, 32
    %v2355 = vpop.permute.xlu0 %2354
    %v2357 = vadd.f32 %v2347, %v2355
    %v2358 = vtanh.pop %v2357
    %2360 = vrot.lane.b32.xlu0 %v2358, 64
    %v2361 = vpop.permute.xlu0 %2360
    %v2363 = vmul.f32 %v2345, %v2361
    %2365 = vrot.lane.b32.xlu0 %v2363, 32
    %v2366 = vpop.permute.xlu0 %2365
    %s2368 = scalar_lea.vmem [#allocation3], 40
    %2369 = vst.msk [vmem:[%s2368] sm:$0xff] %vm125, %v2366
    %s2370 = scalar_lea.vmem [#allocation2], 48
    %v2371 = vld [vmem:[%s2370] sm:$0xff]
    %v2372 = vsel %vm125, %v2366, 0
    %2374 = vmatprep.subr.mxu0 0.0
    %2375 = vmatpush1.msra.mxu0 %v1737
    %2376 = vmatprep.subr.mxu0 0.0
    %2377 = vmatpush1.msra.mxu0 %v1738
    %2378 = vmatprep.subr.mxu0 0.0
    %2379 = vmatpush1.msra.mxu0 %v1739
    %2380 = vmatprep.subr.mxu0 0.0
    %2381 = vmatpush1.msra.mxu0 %v1740
    %2382 = vmatprep.subr.mxu0 0.0
    %2383 = vmatpush1.msra.mxu0 0.0
    %2384 = vmatprep.subr.mxu0 0.0
    %2385 = vmatpush1.msra.mxu0 0.0
    %2386 = vmatprep.subr.mxu0 0.0
    %2387 = vmatpush1.msra.mxu0 0.0
    %2388 = vmatprep.subr.mxu0 0.0
    %2389 = vmatpush1.msra.mxu0 0.0
    %2390 = vmatprep.subr.mxu0 0.0
    %2391 = vmatpush1.msra.mxu0 0.0
    %2392 = vmatprep.subr.mxu0 0.0
    %2393 = vmatpush1.msra.mxu0 0.0
    %2394 = vmatprep.subr.mxu0 0.0
    %2395 = vmatpush1.msra.mxu0 0.0
    %2396 = vmatprep.subr.mxu0 0.0
    %2397 = vmatpush1.msra.mxu0 0.0
    %2398 = vmatprep.subr.mxu0 0.0
    %2399 = vmatpush1.msra.mxu0 0.0
    %2400 = vmatprep.subr.mxu0 0.0
    %2401 = vmatpush1.msra.mxu0 0.0
    %2402 = vmatprep.subr.mxu0 0.0
    %2403 = vmatpush1.msra.mxu0 0.0
    %2404 = vmatprep.subr.mxu0 0.0
    %2405 = vmatpush1.msra.mxu0 0.0
    %2406 = vmatprep.subr.mxu0 0.0
    %2407 = vmatpush1.msra.mxu0 0.0
    %2408 = vmatprep.subr.mxu0 0.0
    %2409 = vmatpush1.msra.mxu0 0.0
    %2410 = vmatprep.subr.mxu0 0.0
    %2411 = vmatpush1.msra.mxu0 0.0
    %2412 = vmatprep.subr.mxu0 0.0
    %2413 = vmatpush1.msra.mxu0 0.0
    %2414 = vmatprep.subr.mxu0 0.0
    %2415 = vmatpush1.msra.mxu0 0.0
    %2416 = vmatprep.subr.mxu0 0.0
    %2417 = vmatpush1.msra.mxu0 0.0
    %2418 = vmatprep.subr.mxu0 0.0
    %2419 = vmatpush1.msra.mxu0 0.0
    %2420 = vmatprep.subr.mxu0 0.0
    %2421 = vmatpush1.msra.mxu0 0.0
    %2422 = vmatprep.subr.mxu0 0.0
    %2423 = vmatpush1.msra.mxu0 0.0
    %2424 = vmatprep.subr.mxu0 0.0
    %2425 = vmatpush1.msra.mxu0 0.0
    %2426 = vmatprep.subr.mxu0 0.0
    %2427 = vmatpush1.msra.mxu0 0.0
    %2428 = vmatprep.subr.mxu0 0.0
    %2429 = vmatpush1.msra.mxu0 0.0
    %2430 = vmatprep.subr.mxu0 0.0
    %2431 = vmatpush1.msra.mxu0 0.0
    %2432 = vmatprep.subr.mxu0 0.0
    %2433 = vmatpush1.msra.mxu0 0.0
    %2434 = vmatprep.subr.mxu0 0.0
    %2435 = vmatpush1.msra.mxu0 0.0
    %2436 = vmatprep.subr.mxu0 0.0
    %2437 = vmatpush1.msra.mxu0 0.0
    %2438 = vmatprep.mubr.f32.mxu0 0.0
    %2439 = vmatmul.mubr.f32.gmra.mrb[0].mxu0 %v2372
    %v2440 = vpop.f32.mrb[0].mxu0
    %v2441 = vadd.f32 0.0, %v2440
    %v2442 = vpop.f32.mrb[0].mxu0
    %2443 = vdwg.mxu0
    %v2444 = vadd.f32 %v2371, %v2441
    %v2445 = vxor.u32 %v2444, 2147483648
    %v2446 = vmul.f32 %v2445, 1.442695
    %v2447 = vpow.pop %v2446
    %v2448 = vadd.f32 %v2447, 1.0
    %v2449 = vrcp.pop %v2448
    %v2450 = vmul.f32 1.0, %v2449
    %v2451 = vtanh.pop %v2444
    %v2452 = vmul.f32 %v2450, %v2357
    %2454 = vrot.lane.b32.xlu0 %v2451, 64
    %v2455 = vpop.permute.xlu0 %2454
    %v2457 = vmul.f32 %v2450, %v2455
    %2459 = vrot.lane.b32.xlu0 %v2457, 32
    %v2460 = vpop.permute.xlu0 %2459
    %v2462 = vadd.f32 %v2452, %v2460
    %v2463 = vtanh.pop %v2462
    %2465 = vrot.lane.b32.xlu0 %v2463, 64
    %v2466 = vpop.permute.xlu0 %2465
    %v2468 = vmul.f32 %v2450, %v2466
    %2470 = vrot.lane.b32.xlu0 %v2468, 32
    %v2471 = vpop.permute.xlu0 %2470
    %s2473 = scalar_lea.vmem [#allocation3], 48
    %2474 = vst.msk [vmem:[%s2473] sm:$0xff] %vm125, %v2471
    %s2475 = scalar_lea.vmem [#allocation2], 56
    %v2476 = vld [vmem:[%s2475] sm:$0xff]
    %v2477 = vsel %vm125, %v2471, 0
    %2479 = vmatprep.subr.mxu0 0.0
    %2480 = vmatpush1.msra.mxu0 %v1737
    %2481 = vmatprep.subr.mxu0 0.0
    %2482 = vmatpush1.msra.mxu0 %v1738
    %2483 = vmatprep.subr.mxu0 0.0
    %2484 = vmatpush1.msra.mxu0 %v1739
    %2485 = vmatprep.subr.mxu0 0.0
    %2486 = vmatpush1.msra.mxu0 %v1740
    %2487 = vmatprep.subr.mxu0 0.0
    %2488 = vmatpush1.msra.mxu0 0.0
    %2489 = vmatprep.subr.mxu0 0.0
    %2490 = vmatpush1.msra.mxu0 0.0
    %2491 = vmatprep.subr.mxu0 0.0
    %2492 = vmatpush1.msra.mxu0 0.0
    %2493 = vmatprep.subr.mxu0 0.0
    %2494 = vmatpush1.msra.mxu0 0.0
    %2495 = vmatprep.subr.mxu0 0.0
    %2496 = vmatpush1.msra.mxu0 0.0
    %2497 = vmatprep.subr.mxu0 0.0
    %2498 = vmatpush1.msra.mxu0 0.0
    %2499 = vmatprep.subr.mxu0 0.0
    %2500 = vmatpush1.msra.mxu0 0.0
    %2501 = vmatprep.subr.mxu0 0.0
    %2502 = vmatpush1.msra.mxu0 0.0
    %2503 = vmatprep.subr.mxu0 0.0
    %2504 = vmatpush1.msra.mxu0 0.0
    %2505 = vmatprep.subr.mxu0 0.0
    %2506 = vmatpush1.msra.mxu0 0.0
    %2507 = vmatprep.subr.mxu0 0.0
    %2508 = vmatpush1.msra.mxu0 0.0
    %2509 = vmatprep.subr.mxu0 0.0
    %2510 = vmatpush1.msra.mxu0 0.0
    %2511 = vmatprep.subr.mxu0 0.0
    %2512 = vmatpush1.msra.mxu0 0.0
    %2513 = vmatprep.subr.mxu0 0.0
    %2514 = vmatpush1.msra.mxu0 0.0
    %2515 = vmatprep.subr.mxu0 0.0
    %2516 = vmatpush1.msra.mxu0 0.0
    %2517 = vmatprep.subr.mxu0 0.0
    %2518 = vmatpush1.msra.mxu0 0.0
    %2519 = vmatprep.subr.mxu0 0.0
    %2520 = vmatpush1.msra.mxu0 0.0
    %2521 = vmatprep.subr.mxu0 0.0
    %2522 = vmatpush1.msra.mxu0 0.0
    %2523 = vmatprep.subr.mxu0 0.0
    %2524 = vmatpush1.msra.mxu0 0.0
    %2525 = vmatprep.subr.mxu0 0.0
    %2526 = vmatpush1.msra.mxu0 0.0
    %2527 = vmatprep.subr.mxu0 0.0
    %2528 = vmatpush1.msra.mxu0 0.0
    %2529 = vmatprep.subr.mxu0 0.0
    %2530 = vmatpush1.msra.mxu0 0.0
    %2531 = vmatprep.subr.mxu0 0.0
    %2532 = vmatpush1.msra.mxu0 0.0
    %2533 = vmatprep.subr.mxu0 0.0
    %2534 = vmatpush1.msra.mxu0 0.0
    %2535 = vmatprep.subr.mxu0 0.0
    %2536 = vmatpush1.msra.mxu0 0.0
    %2537 = vmatprep.subr.mxu0 0.0
    %2538 = vmatpush1.msra.mxu0 0.0
    %2539 = vmatprep.subr.mxu0 0.0
    %2540 = vmatpush1.msra.mxu0 0.0
    %2541 = vmatprep.subr.mxu0 0.0
    %2542 = vmatpush1.msra.mxu0 0.0
    %2543 = vmatprep.mubr.f32.mxu0 0.0
    %2544 = vmatmul.mubr.f32.gmra.mrb[0].mxu0 %v2477
    %v2545 = vpop.f32.mrb[0].mxu0
    %v2546 = vadd.f32 0.0, %v2545
    %v2547 = vpop.f32.mrb[0].mxu0
    %2548 = vdwg.mxu0
    %v2549 = vadd.f32 %v2476, %v2546
    %v2550 = vxor.u32 %v2549, 2147483648
    %v2551 = vmul.f32 %v2550, 1.442695
    %v2552 = vpow.pop %v2551
    %v2553 = vadd.f32 %v2552, 1.0
    %v2554 = vrcp.pop %v2553
    %v2555 = vmul.f32 1.0, %v2554
    %v2556 = vtanh.pop %v2549
    %v2557 = vmul.f32 %v2555, %v2462
    %2559 = vrot.lane.b32.xlu0 %v2556, 64
    %v2560 = vpop.permute.xlu0 %2559
    %v2562 = vmul.f32 %v2555, %v2560
    %2564 = vrot.lane.b32.xlu0 %v2562, 32
    %v2565 = vpop.permute.xlu0 %2564
    %v2567 = vadd.f32 %v2557, %v2565
    %v2568 = vtanh.pop %v2567
    %2570 = vrot.lane.b32.xlu0 %v2568, 64
    %v2571 = vpop.permute.xlu0 %2570
    %v2573 = vmul.f32 %v2555, %v2571
    %2575 = vrot.lane.b32.xlu0 %v2573, 32
    %v2576 = vpop.permute.xlu0 %2575
    %s2578 = scalar_lea.vmem [#allocation3], 56
    %2579 = vst.msk [vmem:[%s2578] sm:$0xff] %vm125, %v2576
    %v2580 = vld [vmem:[#allocation3] sm:$0xff]
    %v2581 = vld [vmem:[#allocation3 + $0x8] sm:$0xff]
    %v2582 = vld [vmem:[#allocation3 + $0x10] sm:$0xff]
    %v2583 = vld [vmem:[#allocation3 + $0x18] sm:$0xff]
    %v2584 = vld [vmem:[#allocation3 + $0x20] sm:$0xff]
    %v2585 = vld [vmem:[#allocation3 + $0x28] sm:$0xff]
    %v2586 = vld [vmem:[#allocation3 + $0x30] sm:$0xff]
    %v2587 = vld [vmem:[#allocation3 + $0x38] sm:$0xff]
    %v2588 = vld [vmem:[%s2578] sm:$0xff]
    %v2589 = vld [vmem:[%s2473] sm:$0xff]
    %v2590 = vld [vmem:[%s2368] sm:$0xff]
    %v2591 = vld [vmem:[%s2263] sm:$0xff]
    %v2592 = vld [vmem:[%s2158] sm:$0xff]
    %v2593 = vld [vmem:[%s2053] sm:$0xff]
    %v2594 = vld [vmem:[%s1948] sm:$0xff]
    %v2595 = vlaneseq
    %v2596 = vand.u32 %v2595, 127
    %vm2597 = vcmp.lt.s32.totalorder %v2596, 16
    %v2598 = vsel %vm2597, 1, 0
    %vm2599 = vcmp.eq.s32.totalorder %v2598, 1
    %v2600 = vsel %vm2599, %v2580, %v2588
    %v2601 = vsel %vm2599, %v2581, %v2589
    %v2602 = vsel %vm2599, %v2582, %v2590
    %v2603 = vsel %vm2599, %v2583, %v2591
    %v2604 = vsel %vm2599, %v2584, %v2592
    %v2605 = vsel %vm2599, %v2585, %v2593
    %v2606 = vsel %vm2599, %v2586, %v2594
    %v2607 = vsel %vm2599, %v2587, %v2580
    %v2608 = vcombine.low %v2600, %v2602
    %v2609 = vcombine.high %v2600, %v2602
    %v2611 = vunpack.c.l.s4 1983009808
    %v2612 = vunpack.c.0.s8 %v2611
    %v2613 = vlaneseq
    %v2614 = vshrl.u32 %v2613, 7
    %v2615 = vsub.s32 %v2612, %v2614
    %v2616 = vrot.slane %v2608, %v2615
    %v2618 = vunpack.c.l.s4 1983009808
    %v2619 = vunpack.c.0.s8 %v2618
    %v2620 = vlaneseq
    %v2621 = vshrl.u32 %v2620, 7
    %v2622 = vsub.s32 %v2619, %v2621
    %v2623 = vrot.slane %v2609, %v2622
    %v2624 = vcombine.low %v2601, %v2603
    %v2625 = vcombine.high %v2601, %v2603
    %v2627 = vunpack.c.l.s4 1983009808
    %v2628 = vunpack.c.0.s8 %v2627
    %v2629 = vlaneseq
    %v2630 = vshrl.u32 %v2629, 7
    %v2631 = vsub.s32 %v2628, %v2630
    %v2632 = vrot.slane %v2624, %v2631
    %v2634 = vunpack.c.l.s4 1983009808
    %v2635 = vunpack.c.0.s8 %v2634
    %v2636 = vlaneseq
    %v2637 = vshrl.u32 %v2636, 7
    %v2638 = vsub.s32 %v2635, %v2637
    %v2639 = vrot.slane %v2625, %v2638
    %v2640 = vcombine.low %v2604, %v2606
    %v2641 = vcombine.high %v2604, %v2606
    %v2643 = vunpack.c.l.s4 1983009808
    %v2644 = vunpack.c.0.s8 %v2643
    %v2645 = vlaneseq
    %v2646 = vshrl.u32 %v2645, 7
    %v2647 = vsub.s32 %v2644, %v2646
    %v2648 = vrot.slane %v2640, %v2647
    %v2650 = vunpack.c.l.s4 1983009808
    %v2651 = vunpack.c.0.s8 %v2650
    %v2652 = vlaneseq
    %v2653 = vshrl.u32 %v2652, 7
    %v2654 = vsub.s32 %v2651, %v2653
    %v2655 = vrot.slane %v2641, %v2654
    %v2656 = vcombine.low %v2605, %v2607
    %v2657 = vcombine.high %v2605, %v2607
    %v2659 = vunpack.c.l.s4 1983009808
    %v2660 = vunpack.c.0.s8 %v2659
    %v2661 = vlaneseq
    %v2662 = vshrl.u32 %v2661, 7
    %v2663 = vsub.s32 %v2660, %v2662
    %v2664 = vrot.slane %v2656, %v2663
    %v2666 = vunpack.c.l.s4 1983009808
    %v2667 = vunpack.c.0.s8 %v2666
    %v2668 = vlaneseq
    %v2669 = vshrl.u32 %v2668, 7
    %v2670 = vsub.s32 %v2667, %v2669
    %v2671 = vrot.slane %v2657, %v2670
    %v2672 = vcombine.low %v2616, %v2632
    %v2673 = vcombine.high %v2616, %v2632
    %v2675 = vunpack.c.l.s4 1934713408
    %v2676 = vunpack.c.0.s8 %v2675
    %v2677 = vlaneseq
    %v2678 = vshrl.u32 %v2677, 7
    %v2679 = vsub.s32 %v2676, %v2678
    %v2680 = vrot.slane %v2672, %v2679
    %v2682 = vunpack.c.l.s4 1934713408
    %v2683 = vunpack.c.0.s8 %v2682
    %v2684 = vlaneseq
    %v2685 = vshrl.u32 %v2684, 7
    %v2686 = vsub.s32 %v2683, %v2685
    %v2687 = vrot.slane %v2673, %v2686
    %v2688 = vcombine.low %v2623, %v2639
    %v2689 = vcombine.high %v2623, %v2639
    %v2691 = vunpack.c.l.s4 1934713408
    %v2692 = vunpack.c.0.s8 %v2691
    %v2693 = vlaneseq
    %v2694 = vshrl.u32 %v2693, 7
    %v2695 = vsub.s32 %v2692, %v2694
    %v2696 = vrot.slane %v2688, %v2695
    %v2698 = vunpack.c.l.s4 1934713408
    %v2699 = vunpack.c.0.s8 %v2698
    %v2700 = vlaneseq
    %v2701 = vshrl.u32 %v2700, 7
    %v2702 = vsub.s32 %v2699, %v2701
    %v2703 = vrot.slane %v2689, %v2702
    %v2704 = vcombine.low %v2648, %v2664
    %v2705 = vcombine.high %v2648, %v2664
    %v2707 = vunpack.c.l.s4 1934713408
    %v2708 = vunpack.c.0.s8 %v2707
    %v2709 = vlaneseq
    %v2710 = vshrl.u32 %v2709, 7
    %v2711 = vsub.s32 %v2708, %v2710
    %v2712 = vrot.slane %v2704, %v2711
    %v2714 = vunpack.c.l.s4 1934713408
    %v2715 = vunpack.c.0.s8 %v2714
    %v2716 = vlaneseq
    %v2717 = vshrl.u32 %v2716, 7
    %v2718 = vsub.s32 %v2715, %v2717
    %v2719 = vrot.slane %v2705, %v2718
    %v2720 = vcombine.low %v2655, %v2671
    %v2721 = vcombine.high %v2655, %v2671
    %v2723 = vunpack.c.l.s4 1934713408
    %v2724 = vunpack.c.0.s8 %v2723
    %v2725 = vlaneseq
    %v2726 = vshrl.u32 %v2725, 7
    %v2727 = vsub.s32 %v2724, %v2726
    %v2728 = vrot.slane %v2720, %v2727
    %v2730 = vunpack.c.l.s4 1934713408
    %v2731 = vunpack.c.0.s8 %v2730
    %v2732 = vlaneseq
    %v2733 = vshrl.u32 %v2732, 7
    %v2734 = vsub.s32 %v2731, %v2733
    %v2735 = vrot.slane %v2721, %v2734
    %v2736 = vcombine.low %v2680, %v2712
    %v2737 = vcombine.high %v2680, %v2712
    %v2738 = vcombine.low %v2687, %v2719
    %v2739 = vcombine.high %v2687, %v2719
    %v2740 = vcombine.low %v2696, %v2728
    %v2741 = vcombine.high %v2696, %v2728
    %v2742 = vcombine.low %v2703, %v2735
    %v2743 = vcombine.high %v2703, %v2735
    %2752 = vrot.lane.b32.xlu0 %v2736, 32
    %v2753 = vpop.permute.xlu0 %2752
    %2754 = vrot.lane.b32.xlu0 %v2737, 32
    %v2755 = vpop.permute.xlu0 %2754
    %2756 = vrot.lane.b32.xlu0 %v2738, 32
    %v2757 = vpop.permute.xlu0 %2756
    %2758 = vrot.lane.b32.xlu0 %v2739, 32
    %v2759 = vpop.permute.xlu0 %2758
    %2760 = vrot.lane.b32.xlu0 %v2740, 32
    %v2761 = vpop.permute.xlu0 %2760
    %2762 = vrot.lane.b32.xlu0 %v2741, 32
    %v2763 = vpop.permute.xlu0 %2762
    %2764 = vrot.lane.b32.xlu0 %v2742, 32
    %v2765 = vpop.permute.xlu0 %2764
    %2766 = vrot.lane.b32.xlu0 %v2743, 32
    %v2767 = vpop.permute.xlu0 %2766
    %v2776 = vsel %vm125, %v1202, %v2753
    %v2777 = vsel %vm125, %v1278, %v2755
    %v2778 = vsel %vm125, %v1354, %v2757
    %v2779 = vsel %vm125, %v1430, %v2759
    %v2780 = vsel %vm125, %v1506, %v2761
    %v2781 = vsel %vm125, %v1582, %v2763
    %v2782 = vsel %vm125, %v1658, %v2765
    %v2783 = vsel %vm125, %v1734, %v2767
    %v2784 = vsel %vm278, %v2776, 0.0
    %v2785 = vsel %vm278, %v2777, 0.0
    %v2786 = vsel %vm278, %v2778, 0.0
    %v2787 = vsel %vm278, %v2779, 0.0
    %v2788 = vsel %vm278, %v2780, 0.0
    %v2789 = vsel %vm278, %v2781, 0.0
    %v2790 = vsel %vm278, %v2782, 0.0
    %v2791 = vsel %vm278, %v2783, 0.0
    %2792 = vst [vmem:[#allocation14] sm:$0xff] %v2784
    %2793 = vst [vmem:[#allocation14 + $0x8] sm:$0xff] %v2785
    %2794 = vst [vmem:[#allocation14 + $0x10] sm:$0xff] %v2786
    %2795 = vst [vmem:[#allocation14 + $0x18] sm:$0xff] %v2787
    %2796 = vst [vmem:[#allocation14 + $0x20] sm:$0xff] %v2788
    %2797 = vst [vmem:[#allocation14 + $0x28] sm:$0xff] %v2789
    %2798 = vst [vmem:[#allocation14 + $0x30] sm:$0xff] %v2790
    %2799 = vst [vmem:[#allocation14 + $0x38] sm:$0xff] %v2791
    %v2800 = vld [vmem:[%s7] sm:$0x1]
    %v2802 = vlaneseq
    %v2803 = vshrl.u32 %v2802, 7
    %v2804 = vsub.s32 0, %v2803
    %v2805 = vrot.slane %v2800, %v2804
    %v2807 = vmul.f32 %v2784, %v2805
    %v2808 = vmul.f32 %v2785, %v2805
    %v2809 = vmul.f32 %v2786, %v2805
    %v2810 = vmul.f32 %v2787, %v2805
    %v2811 = vmul.f32 %v2788, %v2805
    %v2812 = vmul.f32 %v2789, %v2805
    %v2813 = vmul.f32 %v2790, %v2805
    %v2814 = vmul.f32 %v2791, %v2805
    %2815 = vadd.xlane.f32.xlu0 %v2807
    %v2816 = vpop.xlane.xlu0 %2815
    %2817 = vadd.xlane.f32.xlu0 %v2808
    %v2818 = vpop.xlane.xlu0 %2817
    %2819 = vadd.xlane.f32.xlu0 %v2809
    %v2820 = vpop.xlane.xlu0 %2819
    %2821 = vadd.xlane.f32.xlu0 %v2810
    %v2822 = vpop.xlane.xlu0 %2821
    %2823 = vadd.xlane.f32.xlu0 %v2811
    %v2824 = vpop.xlane.xlu0 %2823
    %2825 = vadd.xlane.f32.xlu0 %v2812
    %v2826 = vpop.xlane.xlu0 %2825
    %2827 = vadd.xlane.f32.xlu0 %v2813
    %v2828 = vpop.xlane.xlu0 %2827
    %2829 = vadd.xlane.f32.xlu0 %v2814
    %v2830 = vpop.xlane.xlu0 %2829
    %v2831 = vld [vmem:[#allocation4] sm:$0x1]
    %v2833 = vlaneseq
    %v2834 = vshrl.u32 %v2833, 7
    %v2835 = vsub.s32 0, %v2834
    %v2836 = vrot.slane %v2831, %v2835
    %v2838 = vadd.f32 %v2816, %v2836
    %v2839 = vadd.f32 %v2818, %v2836
    %v2840 = vadd.f32 %v2820, %v2836
    %v2841 = vadd.f32 %v2822, %v2836
    %v2842 = vadd.f32 %v2824, %v2836
    %v2843 = vadd.f32 %v2826, %v2836
    %v2844 = vadd.f32 %v2828, %v2836
    %v2845 = vadd.f32 %v2830, %v2836
    %vm2846 = vcmask 7168
    %v2847 = vsel %vm2846, %v2838, -inf
    %v2848 = vrot.slane %v2847, 4
    %v2849 = vmax.f32 %v2847, %v2848
    %v2850 = vrot.slane %v2849, 2
    %v2851 = vmax.f32 %v2849, %v2850
    %v2852 = vrot.slane %v2851, 1
    %v2853 = vmax.f32 %v2851, %v2852
    %v2854 = vsel %vm2846, %v2839, -inf
    %v2855 = vrot.slane %v2854, 4
    %v2856 = vmax.f32 %v2854, %v2855
    %v2857 = vrot.slane %v2856, 2
    %v2858 = vmax.f32 %v2856, %v2857
    %v2859 = vrot.slane %v2858, 1
    %v2860 = vmax.f32 %v2858, %v2859
    %v2861 = vsel %vm2846, %v2840, -inf
    %v2862 = vrot.slane %v2861, 4
    %v2863 = vmax.f32 %v2861, %v2862
    %v2864 = vrot.slane %v2863, 2
    %v2865 = vmax.f32 %v2863, %v2864
    %v2866 = vrot.slane %v2865, 1
    %v2867 = vmax.f32 %v2865, %v2866
    %v2868 = vsel %vm2846, %v2841, -inf
    %v2869 = vrot.slane %v2868, 4
    %v2870 = vmax.f32 %v2868, %v2869
    %v2871 = vrot.slane %v2870, 2
    %v2872 = vmax.f32 %v2870, %v2871
    %v2873 = vrot.slane %v2872, 1
    %v2874 = vmax.f32 %v2872, %v2873
    %v2875 = vsel %vm2846, %v2842, -inf
    %v2876 = vrot.slane %v2875, 4
    %v2877 = vmax.f32 %v2875, %v2876
    %v2878 = vrot.slane %v2877, 2
    %v2879 = vmax.f32 %v2877, %v2878
    %v2880 = vrot.slane %v2879, 1
    %v2881 = vmax.f32 %v2879, %v2880
    %v2882 = vsel %vm2846, %v2843, -inf
    %v2883 = vrot.slane %v2882, 4
    %v2884 = vmax.f32 %v2882, %v2883
    %v2885 = vrot.slane %v2884, 2
    %v2886 = vmax.f32 %v2884, %v2885
    %v2887 = vrot.slane %v2886, 1
    %v2888 = vmax.f32 %v2886, %v2887
    %v2889 = vsel %vm2846, %v2844, -inf
    %v2890 = vrot.slane %v2889, 4
    %v2891 = vmax.f32 %v2889, %v2890
    %v2892 = vrot.slane %v2891, 2
    %v2893 = vmax.f32 %v2891, %v2892
    %v2894 = vrot.slane %v2893, 1
    %v2895 = vmax.f32 %v2893, %v2894
    %v2896 = vsel %vm2846, %v2845, -inf
    %v2897 = vrot.slane %v2896, 4
    %v2898 = vmax.f32 %v2896, %v2897
    %v2899 = vrot.slane %v2898, 2
    %v2900 = vmax.f32 %v2898, %v2899
    %v2901 = vrot.slane %v2900, 1
    %v2902 = vmax.f32 %v2900, %v2901
    %v2903 = vsub.f32 %v2838, %v2853
    %v2904 = vsub.f32 %v2839, %v2860
    %v2905 = vsub.f32 %v2840, %v2867
    %v2906 = vsub.f32 %v2841, %v2874
    %v2907 = vsub.f32 %v2842, %v2881
    %v2908 = vsub.f32 %v2843, %v2888
    %v2909 = vsub.f32 %v2844, %v2895
    %v2910 = vsub.f32 %v2845, %v2902
    %v2911 = vmul.f32 %v2903, 1.442695
    %v2912 = vpow.pop %v2911
    %v2913 = vmul.f32 %v2904, 1.442695
    %v2914 = vpow.pop %v2913
    %v2915 = vmul.f32 %v2905, 1.442695
    %v2916 = vpow.pop %v2915
    %v2917 = vmul.f32 %v2906, 1.442695
    %v2918 = vpow.pop %v2917
    %v2919 = vmul.f32 %v2907, 1.442695
    %v2920 = vpow.pop %v2919
    %v2921 = vmul.f32 %v2908, 1.442695
    %v2922 = vpow.pop %v2921
    %v2923 = vmul.f32 %v2909, 1.442695
    %v2924 = vpow.pop %v2923
    %v2925 = vmul.f32 %v2910, 1.442695
    %v2926 = vpow.pop %v2925
    %v2927 = vsel %vm2846, %v2912, 0.0
    %v2928 = vrot.slane %v2927, 4
    %v2929 = vadd.f32 %v2927, %v2928
    %v2930 = vrot.slane %v2929, 2
    %v2931 = vadd.f32 %v2929, %v2930
    %v2932 = vrot.slane %v2931, 1
    %v2933 = vadd.f32 %v2931, %v2932
    %v2934 = vsel %vm2846, %v2914, 0.0
    %v2935 = vrot.slane %v2934, 4
    %v2936 = vadd.f32 %v2934, %v2935
    %v2937 = vrot.slane %v2936, 2
    %v2938 = vadd.f32 %v2936, %v2937
    %v2939 = vrot.slane %v2938, 1
    %v2940 = vadd.f32 %v2938, %v2939
    %v2941 = vsel %vm2846, %v2916, 0.0
    %v2942 = vrot.slane %v2941, 4
    %v2943 = vadd.f32 %v2941, %v2942
    %v2944 = vrot.slane %v2943, 2
    %v2945 = vadd.f32 %v2943, %v2944
    %v2946 = vrot.slane %v2945, 1
    %v2947 = vadd.f32 %v2945, %v2946
    %v2948 = vsel %vm2846, %v2918, 0.0
    %v2949 = vrot.slane %v2948, 4
    %v2950 = vadd.f32 %v2948, %v2949
    %v2951 = vrot.slane %v2950, 2
    %v2952 = vadd.f32 %v2950, %v2951
    %v2953 = vrot.slane %v2952, 1
    %v2954 = vadd.f32 %v2952, %v2953
    %v2955 = vsel %vm2846, %v2920, 0.0
    %v2956 = vrot.slane %v2955, 4
    %v2957 = vadd.f32 %v2955, %v2956
    %v2958 = vrot.slane %v2957, 2
    %v2959 = vadd.f32 %v2957, %v2958
    %v2960 = vrot.slane %v2959, 1
    %v2961 = vadd.f32 %v2959, %v2960
    %v2962 = vsel %vm2846, %v2922, 0.0
    %v2963 = vrot.slane %v2962, 4
    %v2964 = vadd.f32 %v2962, %v2963
    %v2965 = vrot.slane %v2964, 2
    %v2966 = vadd.f32 %v2964, %v2965
    %v2967 = vrot.slane %v2966, 1
    %v2968 = vadd.f32 %v2966, %v2967
    %v2969 = vsel %vm2846, %v2924, 0.0
    %v2970 = vrot.slane %v2969, 4
    %v2971 = vadd.f32 %v2969, %v2970
    %v2972 = vrot.slane %v2971, 2
    %v2973 = vadd.f32 %v2971, %v2972
    %v2974 = vrot.slane %v2973, 1
    %v2975 = vadd.f32 %v2973, %v2974
    %v2976 = vsel %vm2846, %v2926, 0.0
    %v2977 = vrot.slane %v2976, 4
    %v2978 = vadd.f32 %v2976, %v2977
    %v2979 = vrot.slane %v2978, 2
    %v2980 = vadd.f32 %v2978, %v2979
    %v2981 = vrot.slane %v2980, 1
    %v2982 = vadd.f32 %v2980, %v2981
    %v2983 = vrcp.pop %v2933
    %v2984 = vmul.f32 %v2912, %v2983
    %v2985 = vrcp.pop %v2940
    %v2986 = vmul.f32 %v2914, %v2985
    %v2987 = vrcp.pop %v2947
    %v2988 = vmul.f32 %v2916, %v2987
    %v2989 = vrcp.pop %v2954
    %v2990 = vmul.f32 %v2918, %v2989
    %v2991 = vrcp.pop %v2961
    %v2992 = vmul.f32 %v2920, %v2991
    %v2993 = vrcp.pop %v2968
    %v2994 = vmul.f32 %v2922, %v2993
    %v2995 = vrcp.pop %v2975
    %v2996 = vmul.f32 %v2924, %v2995
    %v2997 = vrcp.pop %v2982
    %v2998 = vmul.f32 %v2926, %v2997
    %3000 = vset.pattern.permute.xlu0 0
    %3001 = vperm.xlu0 %3000, %v2984
    %v3002 = vpop.permute.xlu0 %3001
    %3005 = vset.pattern.permute.xlu0 0
    %3006 = vperm.xlu0 %3005, %v2986
    %v3007 = vpop.permute.xlu0 %3006
    %3010 = vset.pattern.permute.xlu0 0
    %3011 = vperm.xlu0 %3010, %v2988
    %v3012 = vpop.permute.xlu0 %3011
    %3015 = vset.pattern.permute.xlu0 0
    %3016 = vperm.xlu0 %3015, %v2990
    %v3017 = vpop.permute.xlu0 %3016
    %3020 = vset.pattern.permute.xlu0 0
    %3021 = vperm.xlu0 %3020, %v2992
    %v3022 = vpop.permute.xlu0 %3021
    %3025 = vset.pattern.permute.xlu0 0
    %3026 = vperm.xlu0 %3025, %v2994
    %v3027 = vpop.permute.xlu0 %3026
    %3030 = vset.pattern.permute.xlu0 0
    %3031 = vperm.xlu0 %3030, %v2996
    %v3032 = vpop.permute.xlu0 %3031
    %3035 = vset.pattern.permute.xlu0 0
    %3036 = vperm.xlu0 %3035, %v2998
    %v3037 = vpop.permute.xlu0 %3036
    %v3039 = vmul.f32 %v3002, %v2784
    %v3040 = vmul.f32 %v3007, %v2785
    %v3041 = vmul.f32 %v3012, %v2786
    %v3042 = vmul.f32 %v3017, %v2787
    %v3043 = vmul.f32 %v3022, %v2788
    %v3044 = vmul.f32 %v3027, %v2789
    %v3045 = vmul.f32 %v3032, %v2790
    %v3046 = vmul.f32 %v3037, %v2791
    %v3047 = vrot.slane %v3039, 4
    %v3048 = vadd.f32 %v3039, %v3047
    %v3049 = vrot.slane %v3048, 2
    %v3050 = vadd.f32 %v3048, %v3049
    %v3051 = vrot.slane %v3050, 1
    %v3052 = vadd.f32 %v3050, %v3051
    %v3053 = vrot.slane %v3040, 4
    %v3054 = vadd.f32 %v3040, %v3053
    %v3055 = vrot.slane %v3054, 2
    %v3056 = vadd.f32 %v3054, %v3055
    %v3057 = vrot.slane %v3056, 1
    %v3058 = vadd.f32 %v3056, %v3057
    %v3059 = vrot.slane %v3041, 4
    %v3060 = vadd.f32 %v3041, %v3059
    %v3061 = vrot.slane %v3060, 2
    %v3062 = vadd.f32 %v3060, %v3061
    %v3063 = vrot.slane %v3062, 1
    %v3064 = vadd.f32 %v3062, %v3063
    %v3065 = vrot.slane %v3042, 4
    %v3066 = vadd.f32 %v3042, %v3065
    %v3067 = vrot.slane %v3066, 2
    %v3068 = vadd.f32 %v3066, %v3067
    %v3069 = vrot.slane %v3068, 1
    %v3070 = vadd.f32 %v3068, %v3069
    %v3071 = vrot.slane %v3043, 4
    %v3072 = vadd.f32 %v3043, %v3071
    %v3073 = vrot.slane %v3072, 2
    %v3074 = vadd.f32 %v3072, %v3073
    %v3075 = vrot.slane %v3074, 1
    %v3076 = vadd.f32 %v3074, %v3075
    %v3077 = vrot.slane %v3044, 4
    %v3078 = vadd.f32 %v3044, %v3077
    %v3079 = vrot.slane %v3078, 2
    %v3080 = vadd.f32 %v3078, %v3079
    %v3081 = vrot.slane %v3080, 1
    %v3082 = vadd.f32 %v3080, %v3081
    %v3083 = vrot.slane %v3045, 4
    %v3084 = vadd.f32 %v3045, %v3083
    %v3085 = vrot.slane %v3084, 2
    %v3086 = vadd.f32 %v3084, %v3085
    %v3087 = vrot.slane %v3086, 1
    %v3088 = vadd.f32 %v3086, %v3087
    %v3089 = vrot.slane %v3046, 4
    %v3090 = vadd.f32 %v3046, %v3089
    %v3091 = vrot.slane %v3090, 2
    %v3092 = vadd.f32 %v3090, %v3091
    %v3093 = vrot.slane %v3092, 1
    %v3094 = vadd.f32 %v3092, %v3093
    %3095 = vst [vmem:[#allocation15] sm:$0x1] %v3052
    %3096 = vst [vmem:[#allocation15 + $0x1] sm:$0x1] %v3058
    %3097 = vst [vmem:[#allocation15 + $0x2] sm:$0x1] %v3064
    %3098 = vst [vmem:[#allocation15 + $0x3] sm:$0x1] %v3070
    %3099 = vst [vmem:[#allocation15 + $0x4] sm:$0x1] %v3076
    %3100 = vst [vmem:[#allocation15 + $0x5] sm:$0x1] %v3082
    %3101 = vst [vmem:[#allocation15 + $0x6] sm:$0x1] %v3088
    %3102 = vst [vmem:[#allocation15 + $0x7] sm:$0x1] %v3094
    // Predicated region
    $region58: #{tpu_custom_call.1} parent=1 // pred_check
      _
    $region59: #{tpu_custom_call.1} parent=1 // pred_check_branch
      %3104 = sbr.rel (0) target = $region61
    $region60: #{tpu_custom_call.1} parent=1 // pred_region
      %s3106 = ssub.s32 1024, 1024
      %3107 = vsyncadd [#allocation7], %s3106
      %s3108 = sshll.u32 [#allocation14], 4
      %s3109 = int_to_ptr.vmem [resolvable:$true] %s3108
      %3114 = dma.vmem_to_hbm [thread:$0]  %s3109, 1024, %s9, [#allocation7], 128, 128, 8
    $region61: #{tpu_custom_call.1} parent=1 // pred_fallthru
      _
    // Predicated region
    $region62: #{tpu_custom_call.1} parent=1 // pred_check
      _
    $region63: #{tpu_custom_call.1} parent=1 // pred_check_branch
      %3116 = sbr.rel (0) target = $region65
    $region64: #{tpu_custom_call.1} parent=1 // pred_region
      %s3118 = ssub.s32 128, 128
      %3119 = vsyncadd [#allocation16], %s3118
      %s3120 = sshll.u32 [#allocation15], 4
      %s3121 = int_to_ptr.vmem [resolvable:$true] %s3120
      %3126 = dma.vmem_to_hbm [thread:$0]  %s3121, 128, %s10, [#allocation16], 16, 16, 1
    $region65: #{tpu_custom_call.1} parent=1 // pred_fallthru
      _
    // Predicated region
    $region66: #{tpu_custom_call.1} parent=1 // pred_check
      _
    $region67: #{tpu_custom_call.1} parent=1 // pred_check_branch
      %3128 = sbr.rel (0) target = $region69
    $region68: #{tpu_custom_call.1} parent=1 // pred_region
      %3129 = dma.done [#allocation7], 1024
    $region69: #{tpu_custom_call.1} parent=1 // pred_fallthru
      _
    // Predicated region
    $region70: #{tpu_custom_call.1} parent=1 // pred_check
      _
    $region71: #{tpu_custom_call.1} parent=1 // pred_check_branch
      %3131 = sbr.rel (0) target = $region73
    $region72: #{tpu_custom_call.1} parent=1 // pred_region
      %3132 = dma.done [#allocation16], 128
    $region73: #{tpu_custom_call.1} parent=1 // pred_fallthru
      _
    %3133 = vsyncpa [#allocation6], 1
    %3134 = vsyncpa [#allocation9], 1
    %3135 = vsyncpa [#allocation12], 1
    %3136 = vsyncpa [#allocation7], 1
    %3137 = vsyncpa [#allocation16], 1

</llo_original>
